<compile_context>
chip_gen: v7x
topology: tpu7x:2x2x1
jax: 0.10.0
libtpu: 0.0.40
codegen_flags: <defaults>
</compile_context>

<pallas_src>
import functools
import math

import jax
import jax.numpy as jnp
from jax.experimental import pallas as pl
from jax.experimental.pallas import tpu as pltpu


def _layernorm(x, g, b, eps=1e-5):
    mu = jnp.mean(x, axis=-1, keepdims=True)
    xc = x - mu
    var = jnp.mean(xc * xc, axis=-1, keepdims=True)
    return xc * jax.lax.rsqrt(var + eps) * g + b


def _attn_core(q, k, v, bt, lq, lk, wo_ref, bo_ref, ctx_ref, num_heads, approx):
    """Scaled-dot-product attention core + output projection.

    q: (bt*lq, D) compute-dtype queries (already scaled by 1/sqrt(dh)).
    k, v: (bt*lk, D) compute-dtype keys / values.
    ctx_ref: (bt*lq, D) VMEM scratch in compute dtype — each head's context is
      stored into its D-slice so only one head's score tile is live at a time,
      and the output projection runs once with a full K = D contraction.
    """
    D = wo_ref.shape[0]
    dh = D // num_heads
    cdt = wo_ref.dtype

    q = q.reshape(bt, lq, D)
    k = k.reshape(bt, lk, D)
    v = v.reshape(bt, lk, D)

    # Static unroll: per-head intermediates die at the ctx_ref store (liveness
    # is bounded by the scratch write), and static lane offsets keep the
    # slices / partial stores cheap.
    for h in range(num_heads):
        lo = h * dh
        qh = q[:, :, lo:lo + dh]
        kh = k[:, :, lo:lo + dh]
        vh = v[:, :, lo:lo + dh]

        sc = jnp.einsum("bqd,bkd->bqk", qh, kh,
                        preferred_element_type=jnp.float32)   # (bt, lq, lk)
        m = jnp.max(sc, axis=-1, keepdims=True)                # XLU
        p = jnp.exp(sc - m)                                    # EUP
        l = jnp.sum(p, axis=-1, keepdims=True)                 # XLU

        ctx = jnp.einsum("bqk,bkd->bqd", p.astype(cdt), vh,
                         preferred_element_type=jnp.float32)   # (bt, lq, dh)
        # Deferred softmax normalization: scale the (bt, lq, dh) context,
        # not the (bt, lq, lk) probability tile.
        if approx:
            ctx = ctx * pl.reciprocal(l, approx=True)          # EUP slot
        else:
            ctx = ctx / l                                       # exact, f32 path
        ctx_ref[:, lo:lo + dh] = ctx.reshape(bt * lq, dh).astype(cdt)

    # Single O-projection with K = D (full MXU depth), no per-head accumulation.
    out = jnp.dot(ctx_ref[...], wo_ref[...],
                  preferred_element_type=jnp.float32)
    return out + bo_ref[...]


def decoder_layer_kernel(h_ref, c_ref,
                         wqkv_s_ref, bqkv_s_ref, wo_s_ref, bo_s_ref,
                         wq_c_ref, bq_c_ref, wkv_c_ref, bkv_c_ref,
                         wo_c_ref, bo_c_ref,
                         w1_ref, b1_ref, w2_ref, b2_ref,
                         ln_ref, o_ref, ctx_ref, *, num_heads, approx_recip):
    bt, L, D = h_ref.shape
    S = c_ref.shape[1]
    cdt = w1_ref.dtype
    scale = 1.0 / math.sqrt(D // num_heads)

    # Flatten (bt, L, D) -> (bt*L, D): every big matmul sees M = bt*L rows.
    x = h_ref[...].reshape(bt * L, D)                     # f32 residual stream
    cross = c_ref[...].reshape(bt * S, D).astype(cdt)

    # --- self attention + residual (dropout == identity at eval) ---
    qkv = jnp.dot(x.astype(cdt), wqkv_s_ref[...],
                  preferred_element_type=jnp.float32) + bqkv_s_ref[...]
    q = (qkv[:, :D] * scale).astype(cdt)                  # scale folded into q
    k = qkv[:, D:2 * D].astype(cdt)                       # one up-front cast
    v = qkv[:, 2 * D:].astype(cdt)
    x = x + _attn_core(q, k, v, bt, L, L, wo_s_ref, bo_s_ref, ctx_ref,
                       num_heads, approx_recip)
    x = _layernorm(x, ln_ref[0], ln_ref[1])

    # --- cross attention + residual ---
    q = jnp.dot(x.astype(cdt), wq_c_ref[...],
                preferred_element_type=jnp.float32) + bq_c_ref[...]
    q = (q * scale).astype(cdt)
    kv = jnp.dot(cross, wkv_c_ref[...],
                 preferred_element_type=jnp.float32) + bkv_c_ref[...]
    k = kv[:, :D].astype(cdt)
    v = kv[:, D:].astype(cdt)
    x = x + _attn_core(q, k, v, bt, L, S, wo_c_ref, bo_c_ref, ctx_ref,
                       num_heads, approx_recip)
    x = _layernorm(x, ln_ref[2], ln_ref[3])

    # --- position-wise feed-forward (relu) ---
    y = jnp.dot(x.astype(cdt), w1_ref[...],
                preferred_element_type=jnp.float32) + b1_ref[...]
    y = jnp.maximum(y, 0.0)
    y = jnp.dot(y.astype(cdt), w2_ref[...],
                preferred_element_type=jnp.float32) + b2_ref[...]

    o_ref[...] = _layernorm(x + y, ln_ref[4], ln_ref[5]).reshape(bt, L, D)


# ------------------------- sizing / capability probes ------------------------
def _tpu_info():
    # Optional capability probe; any failure just means defaults are applied.
    try:
        return pltpu.get_tpu_info()
    except Exception:
        return None


def _vmem_cap_bytes():
    info = _tpu_info()
    capacity = getattr(info, "vmem_capacity_bytes", None) if info else None
    if not capacity:
        capacity = 64 << 20            # conservative: v7x per-TensorCore VMEM
    return max(32 << 20, int(capacity) - (8 << 20))   # compiler headroom


def _tensorcores_per_chip():
    candidates = [_tpu_info()]
    devs = jax.devices()
    if devs:
        candidates.append(devs[0])
    for obj in candidates:
        if obj is None:
            continue
        for name in ("num_cores", "tensorcores_per_chip", "num_tensorcores",
                     "cores_per_chip"):
            n = getattr(obj, name, None)
            if isinstance(n, int) and n > 0:
                return n
    return 1


def _vmem_estimate(bt, L, S, D, F, w_itemsize, n_wbuf):
    weights = n_wbuf * w_itemsize * (8 * D * D + 2 * D * F)   # attn + FFN weights
    small = 4 * (22 * D + F)                                  # biases + LN (f32)
    acts = 2 * 4 * bt * (2 * L * D + S * D)                   # dbl-buffered blocks
    ctx = w_itemsize * bt * L * D                             # ctx scratch
    interm = 4 * bt * (10 * L * D + 3 * S * D + L * F + L * max(L, S))
    return weights + small + acts + ctx + 2 * interm


def _choose_block_b(B, L, S, D, F, w_itemsize, cap, min_steps):
    """Largest batch block whose footprint fits the VMEM budget.  On 1-TC
    chips (v5e/v6e) take the fattest block (fewer grid steps, fatter MXU M);
    on multi-TC chips (v7x) keep >= min_steps grid steps so the 'parallel'
    axis can shard across TensorCores."""
    budget = int(0.9 * cap)
    fitting = [bt for bt in range(1, B + 1)
               if B % bt == 0
               and _vmem_estimate(bt, L, S, D, F, w_itemsize, 2) <= budget]
    if not fitting:
        return 1
    good = [bt for bt in fitting if B // bt >= min_steps]
    return max(good) if good else max(fitting)


# --------------------------------- wrapper -----------------------------------
def stack_decoder_layer(hidden, cross, params, *, num_heads,
                        block_b=None, compute_dtype=jnp.bfloat16):
    B, L, D = hidden.shape
    S = cross.shape[1]
    F = params["w1"].shape[1]
    assert D % num_heads == 0, "d_model must be divisible by num_heads"

    cdt = jnp.dtype(compute_dtype)
    cap = _vmem_cap_bytes()
    min_steps = 2 if _tensorcores_per_chip() >= 2 else 1

    if block_b is None:
        block_b = _choose_block_b(B, L, S, D, F, cdt.itemsize, cap, min_steps)
    assert B % block_b == 0
    bt = block_b
    grid = (B // bt,)

    # Weight prep: packed QKV (self) / packed KV (cross); biases/LN stay f32.
    ws, bs = params["w_self"], params["b_self"]        # (4, D, D) / (4, 1, D)
    wc, bc = params["w_cross"], params["b_cross"]
    wqkv_s = jnp.concatenate([ws[0], ws[1], ws[2]], axis=1).astype(cdt)     # (D, 3D)
    bqkv_s = jnp.concatenate([bs[0], bs[1], bs[2]], axis=1).astype(jnp.float32)
    wo_s, bo_s = ws[3].astype(cdt), bs[3].astype(jnp.float32)
    wq_c, bq_c = wc[0].astype(cdt), bc[0].astype(jnp.float32)
    wkv_c = jnp.concatenate([wc[1], wc[2]], axis=1).astype(cdt)             # (D, 2D)
    bkv_c = jnp.concatenate([bc[1], bc[2]], axis=1).astype(jnp.float32)
    wo_c, bo_c = wc[3].astype(cdt), bc[3].astype(jnp.float32)
    w1, b1 = params["w1"].astype(cdt), params["b1"].astype(jnp.float32)
    w2, b2 = params["w2"].astype(cdt), params["b2"].astype(jnp.float32)
    ln = params["ln"].astype(jnp.float32)

    kernel = functools.partial(decoder_layer_kernel, num_heads=num_heads,
                               approx_recip=(cdt != jnp.dtype(jnp.float32)))
    act_map = lambda i: (i, 0, 0)
    z2 = lambda i: (0, 0)
    z3 = lambda i: (0, 0, 0)

    def build(weight_mode):
        def const(shape):
            idx = z3 if len(shape) == 3 else z2
            if weight_mode is None:
                return pl.BlockSpec(shape, idx)
            return pl.BlockSpec(shape, idx, pipeline_mode=weight_mode)

        in_specs = [
            pl.BlockSpec((bt, L, D), act_map),        # hidden block
            pl.BlockSpec((bt, S, D), act_map),        # cross block
            const((D, 3 * D)), const((1, 3 * D)),     # self-attn QKV W/b
            const((D, D)), const((1, D)),             # self-attn O W/b
            const((D, D)), const((1, D)),             # cross-attn Q W/b
            const((D, 2 * D)), const((1, 2 * D)),     # cross-attn KV W/b
            const((D, D)), const((1, D)),             # cross-attn O W/b
            const((D, F)), const((1, F)),             # linear1 W/b
            const((F, D)), const((1, D)),             # linear2 W/b
            const((6, 1, D)),                         # LN gamma/beta x3
        ]
        n_wbuf = 1 if weight_mode is not None else 2
        est = _vmem_estimate(bt, L, S, D, F, cdt.itemsize, n_wbuf)
        vmem_limit = int(min(cap, max(32 << 20, est + (8 << 20))))
        return pl.pallas_call(
            kernel,
            out_shape=jax.ShapeDtypeStruct((B, L, D), jnp.float32),
            grid_spec=pltpu.PrefetchScalarGridSpec(
                num_scalar_prefetch=0,
                grid=grid,
                in_specs=in_specs,
                out_specs=pl.BlockSpec((bt, L, D), act_map),
                scratch_shapes=[pltpu.VMEM((bt * L, D), cdt)]),
            compiler_params=pltpu.CompilerParams(
                dimension_semantics=("parallel",),
                vmem_limit_bytes=vmem_limit),
        )

    args = (hidden, cross,
            wqkv_s, bqkv_s, wo_s, bo_s,
            wq_c, bq_c, wkv_c, bkv_c, wo_c, bo_c,
            w1, b1, w2, b2, ln)

    # Single-buffer the grid-invariant weights only when they actually dominate
    # VMEM (production-sized D/F); at toy sizes the default pipeline is used.
    weight_bytes = cdt.itemsize * (8 * D * D + 2 * D * F)
    if 2 * weight_bytes > cap // 4:
        try:
            return build(pl.Buffered(1))(*args)
        except (pltpu.LoweringException, NotImplementedError, TypeError, ValueError):
            # TODO(synk): this JAX build rejects buffer_count=1; for production
            # v7x shapes the better fallback is weights in pl.ANY + a one-time
            # DMA into VMEM scratch (pl.when(program_id == 0)), not
            # double-buffering — left as future work.
            pass
    return build(None)(*args)


# ---------------------------- pure-JAX reference -----------------------------
def reference(hidden, cross, params, *, num_heads):
    def layernorm(x, g, b, eps=1e-5):
        mu = x.mean(-1, keepdims=True)
        var = ((x - mu) ** 2).mean(-1, keepdims=True)
        return (x - mu) / jnp.sqrt(var + eps) * g + b

    def mha(q_in, kv_in, w, b):
        D = q_in.shape[-1]
        dh = D // num_heads
        q = q_in @ w[0] + b[0]
        k = kv_in @ w[1] + b[1]
        v = kv_in @ w[2] + b[2]
        Bb, Lq, _ = q.shape
        Lk = k.shape[1]
        qh = q.reshape(Bb, Lq, num_heads, dh)
        kh = k.reshape(Bb, Lk, num_heads, dh)
        vh = v.reshape(Bb, Lk, num_heads, dh)
        sc = jnp.einsum("bqhd,bkhd->bhqk", qh, kh) / math.sqrt(dh)
        p = jax.nn.softmax(sc, axis=-1)
        o = jnp.einsum("bhqk,bkhd->bqhd", p, vh).reshape(Bb, Lq, D)
        return o @ w[3] + b[3]

    ln = params["ln"]
    x = hidden + mha(hidden, hidden, params["w_self"], params["b_self"])
    x = layernorm(x, ln[0], ln[1])
    x = x + mha(x, cross, params["w_cross"], params["b_cross"])
    x = layernorm(x, ln[2], ln[3])
    y = jnp.maximum(x @ params["w1"] + params["b1"], 0.0)
    y = y @ params["w2"] + params["b2"]
    return layernorm(x + y, ln[4], ln[5])


def init_params(key, d_model, dim_feedforward):
    ks = jax.random.split(key, 8)
    s = 0.05
    p = {
        "w_self":  s * jax.random.normal(ks[0], (4, d_model, d_model), jnp.float32),
        "b_self":  s * jax.random.normal(ks[1], (4, 1, d_model), jnp.float32),
        "w_cross": s * jax.random.normal(ks[2], (4, d_model, d_model), jnp.float32),
        "b_cross": s * jax.random.normal(ks[3], (4, 1, d_model), jnp.float32),
        "w1": s * jax.random.normal(ks[4], (d_model, dim_feedforward), jnp.float32),
        "b1": s * jax.random.normal(ks[5], (1, dim_feedforward), jnp.float32),
        "w2": s * jax.random.normal(ks[6], (dim_feedforward, d_model), jnp.float32),
        "b2": s * jax.random.normal(ks[7], (1, d_model), jnp.float32),
    }
    # LayerNorm: gamma=1 (rows 0,2,4), beta=0 (rows 1,3,5), torch default init.
    ln = jnp.zeros((6, 1, d_model), jnp.float32)
    ln = ln.at[0::2].set(1.0)
    p["ln"] = ln
    return p


if __name__ == "__main__":
    B, L, S = 2, 8, 8          # batch, target seq, source (cross) seq
    D, H, FF = 32, 4, 64       # d_model, num_heads, dim_feedforward

    key = jax.random.PRNGKey(0)
    k_h, k_c, k_p = jax.random.split(key, 3)
    hidden = jax.random.normal(k_h, (B, L, D), jnp.float32)
    cross = jax.random.normal(k_c, (B, S, D), jnp.float32)
    params = init_params(k_p, D, FF)

    ref = jax.block_until_ready(reference(hidden, cross, params, num_heads=H))

    # f32 path: strict check (exact softmax reciprocal) against the reference.
    out_f32 = jax.block_until_ready(
        stack_decoder_layer(hidden, cross, params, num_heads=H,
                            compute_dtype=jnp.float32))
    assert out_f32.shape == (B, L, D) and out_f32.dtype == jnp.float32
    err_f32 = float(jnp.max(jnp.abs(out_f32 - ref)))
    assert jnp.allclose(out_f32, ref, rtol=5e-3, atol=5e-3), err_f32

    # bf16 path (default for perf): looser tolerance for bf16 rounding.
    out_bf16 = jax.block_until_ready(
        stack_decoder_layer(hidden, cross, params, num_heads=H,
                            compute_dtype=jnp.bfloat16))
    assert out_bf16.shape == (B, L, D) and out_bf16.dtype == jnp.float32
    err_bf16 = float(jnp.max(jnp.abs(out_bf16 - ref)))
    assert jnp.allclose(out_bf16, ref, rtol=3e-2, atol=3e-2), err_bf16

    print("KERNEL_OK")
</pallas_src>

<mosaic_0001>
module attributes {stable_mosaic.version = 11 : i64} {
  func.func @decoder_layer_kernel(%arg0: i32, %arg1: memref<2x8x32xf32, #tpu.memory_space<vmem>>, %arg2: memref<2x8x32xf32, #tpu.memory_space<vmem>>, %arg3: memref<32x96xf32, #tpu.memory_space<vmem>>, %arg4: memref<1x96xf32, #tpu.memory_space<vmem>>, %arg5: memref<32x32xf32, #tpu.memory_space<vmem>>, %arg6: memref<1x32xf32, #tpu.memory_space<vmem>>, %arg7: memref<32x32xf32, #tpu.memory_space<vmem>>, %arg8: memref<1x32xf32, #tpu.memory_space<vmem>>, %arg9: memref<32x64xf32, #tpu.memory_space<vmem>>, %arg10: memref<1x64xf32, #tpu.memory_space<vmem>>, %arg11: memref<32x32xf32, #tpu.memory_space<vmem>>, %arg12: memref<1x32xf32, #tpu.memory_space<vmem>>, %arg13: memref<32x64xf32, #tpu.memory_space<vmem>>, %arg14: memref<1x64xf32, #tpu.memory_space<vmem>>, %arg15: memref<64x32xf32, #tpu.memory_space<vmem>>, %arg16: memref<1x32xf32, #tpu.memory_space<vmem>>, %arg17: memref<6x1x32xf32, #tpu.memory_space<vmem>>, %arg18: memref<2x8x32xf32, #tpu.memory_space<vmem>>, %arg19: memref<16x32xf32, #tpu.memory_space<vmem>>) attributes {dimension_semantics = [#tpu.dimension_semantics<parallel>], iteration_bounds = array<i64: 1>, scalar_prefetch = 0 : i64, scratch_operands = 1 : i64, tpu.core_type = #tpu.core_type<tc>, window_params = [{transform_indices = @transform_0, window_bounds = array<i64: 2, 8, 32>}, {transform_indices = @transform_1, window_bounds = array<i64: 2, 8, 32>}, {pipeline_mode = #tpu.pipeline_mode<synchronous>, transform_indices = @transform_2, window_bounds = array<i64: 32, 96>}, {pipeline_mode = #tpu.pipeline_mode<synchronous>, transform_indices = @transform_3, window_bounds = array<i64: 1, 96>}, {pipeline_mode = #tpu.pipeline_mode<synchronous>, transform_indices = @transform_4, window_bounds = array<i64: 32, 32>}, {pipeline_mode = #tpu.pipeline_mode<synchronous>, transform_indices = @transform_5, window_bounds = array<i64: 1, 32>}, {pipeline_mode = #tpu.pipeline_mode<synchronous>, transform_indices = @transform_6, window_bounds = array<i64: 32, 32>}, {pipeline_mode = #tpu.pipeline_mode<synchronous>, transform_indices = @transform_7, window_bounds = array<i64: 1, 32>}, {pipeline_mode = #tpu.pipeline_mode<synchronous>, transform_indices = @transform_8, window_bounds = array<i64: 32, 64>}, {pipeline_mode = #tpu.pipeline_mode<synchronous>, transform_indices = @transform_9, window_bounds = array<i64: 1, 64>}, {pipeline_mode = #tpu.pipeline_mode<synchronous>, transform_indices = @transform_10, window_bounds = array<i64: 32, 32>}, {pipeline_mode = #tpu.pipeline_mode<synchronous>, transform_indices = @transform_11, window_bounds = array<i64: 1, 32>}, {pipeline_mode = #tpu.pipeline_mode<synchronous>, transform_indices = @transform_12, window_bounds = array<i64: 32, 64>}, {pipeline_mode = #tpu.pipeline_mode<synchronous>, transform_indices = @transform_13, window_bounds = array<i64: 1, 64>}, {pipeline_mode = #tpu.pipeline_mode<synchronous>, transform_indices = @transform_14, window_bounds = array<i64: 64, 32>}, {pipeline_mode = #tpu.pipeline_mode<synchronous>, transform_indices = @transform_15, window_bounds = array<i64: 1, 32>}, {pipeline_mode = #tpu.pipeline_mode<synchronous>, transform_indices = @transform_16, window_bounds = array<i64: 6, 1, 32>}, {transform_indices = @transform_17, window_bounds = array<i64: 2, 8, 32>}]} {
    %c0 = arith.constant 0 : index
    %c0_0 = arith.constant 0 : index
    %c0_1 = arith.constant 0 : index
    %0 = vector.load %arg1[%c0, %c0_0, %c0_1] : memref<2x8x32xf32, #tpu.memory_space<vmem>>, vector<2x8x32xf32>
    %1 = vector.shape_cast %0 : vector<2x8x32xf32> to vector<16x32xf32>
    %c0_2 = arith.constant 0 : index
    %c0_3 = arith.constant 0 : index
    %c0_4 = arith.constant 0 : index
    %2 = vector.load %arg2[%c0_2, %c0_3, %c0_4] : memref<2x8x32xf32, #tpu.memory_space<vmem>>, vector<2x8x32xf32>
    %3 = vector.shape_cast %2 : vector<2x8x32xf32> to vector<16x32xf32>
    %c0_5 = arith.constant 0 : index
    %c0_6 = arith.constant 0 : index
    %4 = vector.load %arg3[%c0_5, %c0_6] : memref<32x96xf32, #tpu.memory_space<vmem>>, vector<32x96xf32>
    %cst = arith.constant dense<0.000000e+00> : vector<16x96xf32>
    %5 = tpu.matmul %1, %4, %cst {dimension_numbers = #tpu.dot_dimension_numbers<[1], [0], [0], [1], [0, 0, 1, 1], [], []>} : vector<16x32xf32>, vector<32x96xf32>, vector<16x96xf32> -> vector<16x96xf32>
    %c0_7 = arith.constant 0 : index
    %c0_8 = arith.constant 0 : index
    %6 = vector.load %arg4[%c0_7, %c0_8] : memref<1x96xf32, #tpu.memory_space<vmem>>, vector<1x96xf32>
    %7 = vector.broadcast %6 : vector<1x96xf32> to vector<16x96xf32>
    %8 = arith.addf %5, %7 : vector<16x96xf32>
    %9 = vector.extract_strided_slice %8 {offsets = [0, 0], sizes = [16, 32], strides = [1, 1]} : vector<16x96xf32> to vector<16x32xf32>
    %cst_9 = arith.constant 0.353553385 : f32
    %10 = vector.broadcast %cst_9 : f32 to vector<16x32xf32>
    %11 = arith.mulf %9, %10 : vector<16x32xf32>
    %12 = vector.extract_strided_slice %8 {offsets = [0, 32], sizes = [16, 32], strides = [1, 1]} : vector<16x96xf32> to vector<16x32xf32>
    %13 = vector.extract_strided_slice %8 {offsets = [0, 64], sizes = [16, 32], strides = [1, 1]} : vector<16x96xf32> to vector<16x32xf32>
    %14 = vector.shape_cast %11 : vector<16x32xf32> to vector<2x8x32xf32>
    %15 = vector.shape_cast %12 : vector<16x32xf32> to vector<2x8x32xf32>
    %16 = vector.shape_cast %13 : vector<16x32xf32> to vector<2x8x32xf32>
    %17 = vector.extract_strided_slice %14 {offsets = [0, 0, 0], sizes = [2, 8, 8], strides = [1, 1, 1]} : vector<2x8x32xf32> to vector<2x8x8xf32>
    %18 = vector.extract_strided_slice %15 {offsets = [0, 0, 0], sizes = [2, 8, 8], strides = [1, 1, 1]} : vector<2x8x32xf32> to vector<2x8x8xf32>
    %19 = vector.extract_strided_slice %16 {offsets = [0, 0, 0], sizes = [2, 8, 8], strides = [1, 1, 1]} : vector<2x8x32xf32> to vector<2x8x8xf32>
    "tpu.trace_start"() <{level = 10 : i32, message = "bqd,bkd->bqk"}> : () -> ()
    %cst_10 = arith.constant dense<0.000000e+00> : vector<2x8x8xf32>
    %20 = tpu.matmul %17, %18, %cst_10 {dimension_numbers = #tpu.dot_dimension_numbers<[2], [2], [1], [1], [0, 0, 0, 1, 1, 1], [0], [0]>} : vector<2x8x8xf32>, vector<2x8x8xf32>, vector<2x8x8xf32> -> vector<2x8x8xf32>
    "tpu.trace_stop"() : () -> ()
    %cst_11 = arith.constant dense<0xFF800000> : vector<2x8xf32>
    %21 = vector.multi_reduction <maximumf>, %20, %cst_11 [2] : vector<2x8x8xf32> to vector<2x8xf32>
    %22 = vector.shape_cast %21 : vector<2x8xf32> to vector<2x8x1xf32>
    %23 = vector.broadcast %22 : vector<2x8x1xf32> to vector<2x8x8xf32>
    %24 = arith.subf %20, %23 : vector<2x8x8xf32>
    %25 = math.exp %24 : vector<2x8x8xf32>
    %cst_12 = arith.constant dense<0.000000e+00> : vector<2x8xf32>
    %26 = vector.multi_reduction <add>, %25, %cst_12 [2] : vector<2x8x8xf32> to vector<2x8xf32>
    %27 = vector.shape_cast %26 : vector<2x8xf32> to vector<2x8x1xf32>
    "tpu.trace_start"() <{level = 10 : i32, message = "bqk,bkd->bqd"}> : () -> ()
    %cst_13 = arith.constant dense<0.000000e+00> : vector<2x8x8xf32>
    %28 = tpu.matmul %25, %19, %cst_13 {dimension_numbers = #tpu.dot_dimension_numbers<[2], [1], [1], [2], [0, 0, 0, 1, 1, 2], [0], [0]>} : vector<2x8x8xf32>, vector<2x8x8xf32>, vector<2x8x8xf32> -> vector<2x8x8xf32>
    "tpu.trace_stop"() : () -> ()
    %29 = vector.broadcast %27 : vector<2x8x1xf32> to vector<2x8x8xf32>
    %30 = arith.divf %28, %29 : vector<2x8x8xf32>
    %31 = vector.shape_cast %30 : vector<2x8x8xf32> to vector<16x8xf32>
    %c0_14 = arith.constant 0 : index
    %c0_15 = arith.constant 0 : index
    %32 = vector.load %arg19[%c0_14, %c0_15] : memref<16x32xf32, #tpu.memory_space<vmem>>, vector<16x8xf32>
    tpu.vector_store %arg19[%c0_14, %c0_15], %31 {strides = array<i32>} : memref<16x32xf32, #tpu.memory_space<vmem>>, vector<16x8xf32>,
    %33 = vector.extract_strided_slice %14 {offsets = [0, 0, 8], sizes = [2, 8, 8], strides = [1, 1, 1]} : vector<2x8x32xf32> to vector<2x8x8xf32>
    %34 = vector.extract_strided_slice %15 {offsets = [0, 0, 8], sizes = [2, 8, 8], strides = [1, 1, 1]} : vector<2x8x32xf32> to vector<2x8x8xf32>
    %35 = vector.extract_strided_slice %16 {offsets = [0, 0, 8], sizes = [2, 8, 8], strides = [1, 1, 1]} : vector<2x8x32xf32> to vector<2x8x8xf32>
    "tpu.trace_start"() <{level = 10 : i32, message = "bqd,bkd->bqk"}> : () -> ()
    %cst_16 = arith.constant dense<0.000000e+00> : vector<2x8x8xf32>
    %36 = tpu.matmul %33, %34, %cst_16 {dimension_numbers = #tpu.dot_dimension_numbers<[2], [2], [1], [1], [0, 0, 0, 1, 1, 1], [0], [0]>} : vector<2x8x8xf32>, vector<2x8x8xf32>, vector<2x8x8xf32> -> vector<2x8x8xf32>
    "tpu.trace_stop"() : () -> ()
    %cst_17 = arith.constant dense<0xFF800000> : vector<2x8xf32>
    %37 = vector.multi_reduction <maximumf>, %36, %cst_17 [2] : vector<2x8x8xf32> to vector<2x8xf32>
    %38 = vector.shape_cast %37 : vector<2x8xf32> to vector<2x8x1xf32>
    %39 = vector.broadcast %38 : vector<2x8x1xf32> to vector<2x8x8xf32>
    %40 = arith.subf %36, %39 : vector<2x8x8xf32>
    %41 = math.exp %40 : vector<2x8x8xf32>
    %cst_18 = arith.constant dense<0.000000e+00> : vector<2x8xf32>
    %42 = vector.multi_reduction <add>, %41, %cst_18 [2] : vector<2x8x8xf32> to vector<2x8xf32>
    %43 = vector.shape_cast %42 : vector<2x8xf32> to vector<2x8x1xf32>
    "tpu.trace_start"() <{level = 10 : i32, message = "bqk,bkd->bqd"}> : () -> ()
    %cst_19 = arith.constant dense<0.000000e+00> : vector<2x8x8xf32>
    %44 = tpu.matmul %41, %35, %cst_19 {dimension_numbers = #tpu.dot_dimension_numbers<[2], [1], [1], [2], [0, 0, 0, 1, 1, 2], [0], [0]>} : vector<2x8x8xf32>, vector<2x8x8xf32>, vector<2x8x8xf32> -> vector<2x8x8xf32>
    "tpu.trace_stop"() : () -> ()
    %45 = vector.broadcast %43 : vector<2x8x1xf32> to vector<2x8x8xf32>
    %46 = arith.divf %44, %45 : vector<2x8x8xf32>
    %47 = vector.shape_cast %46 : vector<2x8x8xf32> to vector<16x8xf32>
    %c0_20 = arith.constant 0 : index
    %c8 = arith.constant 8 : index
    %48 = vector.load %arg19[%c0_20, %c8] : memref<16x32xf32, #tpu.memory_space<vmem>>, vector<16x8xf32>
    tpu.vector_store %arg19[%c0_20, %c8], %47 {strides = array<i32>} : memref<16x32xf32, #tpu.memory_space<vmem>>, vector<16x8xf32>,
    %49 = vector.extract_strided_slice %14 {offsets = [0, 0, 16], sizes = [2, 8, 8], strides = [1, 1, 1]} : vector<2x8x32xf32> to vector<2x8x8xf32>
    %50 = vector.extract_strided_slice %15 {offsets = [0, 0, 16], sizes = [2, 8, 8], strides = [1, 1, 1]} : vector<2x8x32xf32> to vector<2x8x8xf32>
    %51 = vector.extract_strided_slice %16 {offsets = [0, 0, 16], sizes = [2, 8, 8], strides = [1, 1, 1]} : vector<2x8x32xf32> to vector<2x8x8xf32>
    "tpu.trace_start"() <{level = 10 : i32, message = "bqd,bkd->bqk"}> : () -> ()
    %cst_21 = arith.constant dense<0.000000e+00> : vector<2x8x8xf32>
    %52 = tpu.matmul %49, %50, %cst_21 {dimension_numbers = #tpu.dot_dimension_numbers<[2], [2], [1], [1], [0, 0, 0, 1, 1, 1], [0], [0]>} : vector<2x8x8xf32>, vector<2x8x8xf32>, vector<2x8x8xf32> -> vector<2x8x8xf32>
    "tpu.trace_stop"() : () -> ()
    %cst_22 = arith.constant dense<0xFF800000> : vector<2x8xf32>
    %53 = vector.multi_reduction <maximumf>, %52, %cst_22 [2] : vector<2x8x8xf32> to vector<2x8xf32>
    %54 = vector.shape_cast %53 : vector<2x8xf32> to vector<2x8x1xf32>
    %55 = vector.broadcast %54 : vector<2x8x1xf32> to vector<2x8x8xf32>
    %56 = arith.subf %52, %55 : vector<2x8x8xf32>
    %57 = math.exp %56 : vector<2x8x8xf32>
    %cst_23 = arith.constant dense<0.000000e+00> : vector<2x8xf32>
    %58 = vector.multi_reduction <add>, %57, %cst_23 [2] : vector<2x8x8xf32> to vector<2x8xf32>
    %59 = vector.shape_cast %58 : vector<2x8xf32> to vector<2x8x1xf32>
    "tpu.trace_start"() <{level = 10 : i32, message = "bqk,bkd->bqd"}> : () -> ()
    %cst_24 = arith.constant dense<0.000000e+00> : vector<2x8x8xf32>
    %60 = tpu.matmul %57, %51, %cst_24 {dimension_numbers = #tpu.dot_dimension_numbers<[2], [1], [1], [2], [0, 0, 0, 1, 1, 2], [0], [0]>} : vector<2x8x8xf32>, vector<2x8x8xf32>, vector<2x8x8xf32> -> vector<2x8x8xf32>
    "tpu.trace_stop"() : () -> ()
    %61 = vector.broadcast %59 : vector<2x8x1xf32> to vector<2x8x8xf32>
    %62 = arith.divf %60, %61 : vector<2x8x8xf32>
    %63 = vector.shape_cast %62 : vector<2x8x8xf32> to vector<16x8xf32>
    %c0_25 = arith.constant 0 : index
    %c16 = arith.constant 16 : index
    %64 = vector.load %arg19[%c0_25, %c16] : memref<16x32xf32, #tpu.memory_space<vmem>>, vector<16x8xf32>
    tpu.vector_store %arg19[%c0_25, %c16], %63 {strides = array<i32>} : memref<16x32xf32, #tpu.memory_space<vmem>>, vector<16x8xf32>,
    %65 = vector.extract_strided_slice %14 {offsets = [0, 0, 24], sizes = [2, 8, 8], strides = [1, 1, 1]} : vector<2x8x32xf32> to vector<2x8x8xf32>
    %66 = vector.extract_strided_slice %15 {offsets = [0, 0, 24], sizes = [2, 8, 8], strides = [1, 1, 1]} : vector<2x8x32xf32> to vector<2x8x8xf32>
    %67 = vector.extract_strided_slice %16 {offsets = [0, 0, 24], sizes = [2, 8, 8], strides = [1, 1, 1]} : vector<2x8x32xf32> to vector<2x8x8xf32>
    "tpu.trace_start"() <{level = 10 : i32, message = "bqd,bkd->bqk"}> : () -> ()
    %cst_26 = arith.constant dense<0.000000e+00> : vector<2x8x8xf32>
    %68 = tpu.matmul %65, %66, %cst_26 {dimension_numbers = #tpu.dot_dimension_numbers<[2], [2], [1], [1], [0, 0, 0, 1, 1, 1], [0], [0]>} : vector<2x8x8xf32>, vector<2x8x8xf32>, vector<2x8x8xf32> -> vector<2x8x8xf32>
    "tpu.trace_stop"() : () -> ()
    %cst_27 = arith.constant dense<0xFF800000> : vector<2x8xf32>
    %69 = vector.multi_reduction <maximumf>, %68, %cst_27 [2] : vector<2x8x8xf32> to vector<2x8xf32>
    %70 = vector.shape_cast %69 : vector<2x8xf32> to vector<2x8x1xf32>
    %71 = vector.broadcast %70 : vector<2x8x1xf32> to vector<2x8x8xf32>
    %72 = arith.subf %68, %71 : vector<2x8x8xf32>
    %73 = math.exp %72 : vector<2x8x8xf32>
    %cst_28 = arith.constant dense<0.000000e+00> : vector<2x8xf32>
    %74 = vector.multi_reduction <add>, %73, %cst_28 [2] : vector<2x8x8xf32> to vector<2x8xf32>
    %75 = vector.shape_cast %74 : vector<2x8xf32> to vector<2x8x1xf32>
    "tpu.trace_start"() <{level = 10 : i32, message = "bqk,bkd->bqd"}> : () -> ()
    %cst_29 = arith.constant dense<0.000000e+00> : vector<2x8x8xf32>
    %76 = tpu.matmul %73, %67, %cst_29 {dimension_numbers = #tpu.dot_dimension_numbers<[2], [1], [1], [2], [0, 0, 0, 1, 1, 2], [0], [0]>} : vector<2x8x8xf32>, vector<2x8x8xf32>, vector<2x8x8xf32> -> vector<2x8x8xf32>
    "tpu.trace_stop"() : () -> ()
    %77 = vector.broadcast %75 : vector<2x8x1xf32> to vector<2x8x8xf32>
    %78 = arith.divf %76, %77 : vector<2x8x8xf32>
    %79 = vector.shape_cast %78 : vector<2x8x8xf32> to vector<16x8xf32>
    %c0_30 = arith.constant 0 : index
    %c24 = arith.constant 24 : index
    %80 = vector.load %arg19[%c0_30, %c24] : memref<16x32xf32, #tpu.memory_space<vmem>>, vector<16x8xf32>
    tpu.vector_store %arg19[%c0_30, %c24], %79 {strides = array<i32>} : memref<16x32xf32, #tpu.memory_space<vmem>>, vector<16x8xf32>,
    %c0_31 = arith.constant 0 : index
    %c0_32 = arith.constant 0 : index
    %81 = vector.load %arg19[%c0_31, %c0_32] : memref<16x32xf32, #tpu.memory_space<vmem>>, vector<16x32xf32>
    %c0_33 = arith.constant 0 : index
    %c0_34 = arith.constant 0 : index
    %82 = vector.load %arg5[%c0_33, %c0_34] : memref<32x32xf32, #tpu.memory_space<vmem>>, vector<32x32xf32>
    %cst_35 = arith.constant dense<0.000000e+00> : vector<16x32xf32>
    %83 = tpu.matmul %81, %82, %cst_35 {dimension_numbers = #tpu.dot_dimension_numbers<[1], [0], [0], [1], [0, 0, 1, 1], [], []>} : vector<16x32xf32>, vector<32x32xf32>, vector<16x32xf32> -> vector<16x32xf32>
    %c0_36 = arith.constant 0 : index
    %c0_37 = arith.constant 0 : index
    %84 = vector.load %arg6[%c0_36, %c0_37] : memref<1x32xf32, #tpu.memory_space<vmem>>, vector<1x32xf32>
    %85 = vector.broadcast %84 : vector<1x32xf32> to vector<16x32xf32>
    %86 = arith.addf %83, %85 : vector<16x32xf32>
    %87 = arith.addf %1, %86 : vector<16x32xf32>
    %c0_38 = arith.constant 0 : index
    %c0_39 = arith.constant 0 : index
    %c0_40 = arith.constant 0 : index
    %88 = vector.load %arg17[%c0_38, %c0_39, %c0_40] : memref<6x1x32xf32, #tpu.memory_space<vmem>>, vector<1x1x32xf32>
    %89 = vector.shape_cast %88 : vector<1x1x32xf32> to vector<1x32xf32>
    %c1 = arith.constant 1 : index
    %c0_41 = arith.constant 0 : index
    %c0_42 = arith.constant 0 : index
    %90 = vector.load %arg17[%c1, %c0_41, %c0_42] : memref<6x1x32xf32, #tpu.memory_space<vmem>>, vector<1x1x32xf32>
    %91 = vector.shape_cast %90 : vector<1x1x32xf32> to vector<1x32xf32>
    %cst_43 = arith.constant dense<0.000000e+00> : vector<16xf32>
    %92 = vector.multi_reduction <add>, %87, %cst_43 [1] : vector<16x32xf32> to vector<16xf32>
    %93 = vector.shape_cast %92 : vector<16xf32> to vector<16x1xf32>
    %cst_44 = arith.constant 3.200000e+01 : f32
    %94 = vector.broadcast %cst_44 : f32 to vector<16x1xf32>
    %95 = arith.divf %93, %94 : vector<16x1xf32>
    %96 = vector.broadcast %95 : vector<16x1xf32> to vector<16x32xf32>
    %97 = arith.subf %87, %96 : vector<16x32xf32>
    %98 = arith.mulf %97, %97 : vector<16x32xf32>
    %cst_45 = arith.constant dense<0.000000e+00> : vector<16xf32>
    %99 = vector.multi_reduction <add>, %98, %cst_45 [1] : vector<16x32xf32> to vector<16xf32>
    %100 = vector.shape_cast %99 : vector<16xf32> to vector<16x1xf32>
    %cst_46 = arith.constant 3.200000e+01 : f32
    %101 = vector.broadcast %cst_46 : f32 to vector<16x1xf32>
    %102 = arith.divf %100, %101 : vector<16x1xf32>
    %cst_47 = arith.constant 9.99999974E-6 : f32
    %103 = vector.broadcast %cst_47 : f32 to vector<16x1xf32>
    %104 = arith.addf %102, %103 : vector<16x1xf32>
    %105 = math.rsqrt %104 : vector<16x1xf32>
    %106 = vector.broadcast %105 : vector<16x1xf32> to vector<16x32xf32>
    %107 = arith.mulf %97, %106 : vector<16x32xf32>
    %108 = vector.broadcast %89 : vector<1x32xf32> to vector<16x32xf32>
    %109 = arith.mulf %107, %108 : vector<16x32xf32>
    %110 = vector.broadcast %91 : vector<1x32xf32> to vector<16x32xf32>
    %111 = arith.addf %109, %110 : vector<16x32xf32>
    %c0_48 = arith.constant 0 : index
    %c0_49 = arith.constant 0 : index
    %112 = vector.load %arg7[%c0_48, %c0_49] : memref<32x32xf32, #tpu.memory_space<vmem>>, vector<32x32xf32>
    %cst_50 = arith.constant dense<0.000000e+00> : vector<16x32xf32>
    %113 = tpu.matmul %111, %112, %cst_50 {dimension_numbers = #tpu.dot_dimension_numbers<[1], [0], [0], [1], [0, 0, 1, 1], [], []>} : vector<16x32xf32>, vector<32x32xf32>, vector<16x32xf32> -> vector<16x32xf32>
    %c0_51 = arith.constant 0 : index
    %c0_52 = arith.constant 0 : index
    %114 = vector.load %arg8[%c0_51, %c0_52] : memref<1x32xf32, #tpu.memory_space<vmem>>, vector<1x32xf32>
    %115 = vector.broadcast %114 : vector<1x32xf32> to vector<16x32xf32>
    %116 = arith.addf %113, %115 : vector<16x32xf32>
    %cst_53 = arith.constant 0.353553385 : f32
    %117 = vector.broadcast %cst_53 : f32 to vector<16x32xf32>
    %118 = arith.mulf %116, %117 : vector<16x32xf32>
    %c0_54 = arith.constant 0 : index
    %c0_55 = arith.constant 0 : index
    %119 = vector.load %arg9[%c0_54, %c0_55] : memref<32x64xf32, #tpu.memory_space<vmem>>, vector<32x64xf32>
    %cst_56 = arith.constant dense<0.000000e+00> : vector<16x64xf32>
    %120 = tpu.matmul %3, %119, %cst_56 {dimension_numbers = #tpu.dot_dimension_numbers<[1], [0], [0], [1], [0, 0, 1, 1], [], []>} : vector<16x32xf32>, vector<32x64xf32>, vector<16x64xf32> -> vector<16x64xf32>
    %c0_57 = arith.constant 0 : index
    %c0_58 = arith.constant 0 : index
    %121 = vector.load %arg10[%c0_57, %c0_58] : memref<1x64xf32, #tpu.memory_space<vmem>>, vector<1x64xf32>
    %122 = vector.broadcast %121 : vector<1x64xf32> to vector<16x64xf32>
    %123 = arith.addf %120, %122 : vector<16x64xf32>
    %124 = vector.extract_strided_slice %123 {offsets = [0, 0], sizes = [16, 32], strides = [1, 1]} : vector<16x64xf32> to vector<16x32xf32>
    %125 = vector.extract_strided_slice %123 {offsets = [0, 32], sizes = [16, 32], strides = [1, 1]} : vector<16x64xf32> to vector<16x32xf32>
    %126 = vector.shape_cast %118 : vector<16x32xf32> to vector<2x8x32xf32>
    %127 = vector.shape_cast %124 : vector<16x32xf32> to vector<2x8x32xf32>
    %128 = vector.shape_cast %125 : vector<16x32xf32> to vector<2x8x32xf32>
    %129 = vector.extract_strided_slice %126 {offsets = [0, 0, 0], sizes = [2, 8, 8], strides = [1, 1, 1]} : vector<2x8x32xf32> to vector<2x8x8xf32>
    %130 = vector.extract_strided_slice %127 {offsets = [0, 0, 0], sizes = [2, 8, 8], strides = [1, 1, 1]} : vector<2x8x32xf32> to vector<2x8x8xf32>
    %131 = vector.extract_strided_slice %128 {offsets = [0, 0, 0], sizes = [2, 8, 8], strides = [1, 1, 1]} : vector<2x8x32xf32> to vector<2x8x8xf32>
    "tpu.trace_start"() <{level = 10 : i32, message = "bqd,bkd->bqk"}> : () -> ()
    %cst_59 = arith.constant dense<0.000000e+00> : vector<2x8x8xf32>
    %132 = tpu.matmul %129, %130, %cst_59 {dimension_numbers = #tpu.dot_dimension_numbers<[2], [2], [1], [1], [0, 0, 0, 1, 1, 1], [0], [0]>} : vector<2x8x8xf32>, vector<2x8x8xf32>, vector<2x8x8xf32> -> vector<2x8x8xf32>
    "tpu.trace_stop"() : () -> ()
    %cst_60 = arith.constant dense<0xFF800000> : vector<2x8xf32>
    %133 = vector.multi_reduction <maximumf>, %132, %cst_60 [2] : vector<2x8x8xf32> to vector<2x8xf32>
    %134 = vector.shape_cast %133 : vector<2x8xf32> to vector<2x8x1xf32>
    %135 = vector.broadcast %134 : vector<2x8x1xf32> to vector<2x8x8xf32>
    %136 = arith.subf %132, %135 : vector<2x8x8xf32>
    %137 = math.exp %136 : vector<2x8x8xf32>
    %cst_61 = arith.constant dense<0.000000e+00> : vector<2x8xf32>
    %138 = vector.multi_reduction <add>, %137, %cst_61 [2] : vector<2x8x8xf32> to vector<2x8xf32>
    %139 = vector.shape_cast %138 : vector<2x8xf32> to vector<2x8x1xf32>
    "tpu.trace_start"() <{level = 10 : i32, message = "bqk,bkd->bqd"}> : () -> ()
    %cst_62 = arith.constant dense<0.000000e+00> : vector<2x8x8xf32>
    %140 = tpu.matmul %137, %131, %cst_62 {dimension_numbers = #tpu.dot_dimension_numbers<[2], [1], [1], [2], [0, 0, 0, 1, 1, 2], [0], [0]>} : vector<2x8x8xf32>, vector<2x8x8xf32>, vector<2x8x8xf32> -> vector<2x8x8xf32>
    "tpu.trace_stop"() : () -> ()
    %141 = vector.broadcast %139 : vector<2x8x1xf32> to vector<2x8x8xf32>
    %142 = arith.divf %140, %141 : vector<2x8x8xf32>
    %143 = vector.shape_cast %142 : vector<2x8x8xf32> to vector<16x8xf32>
    %c0_63 = arith.constant 0 : index
    %c0_64 = arith.constant 0 : index
    %144 = vector.load %arg19[%c0_63, %c0_64] : memref<16x32xf32, #tpu.memory_space<vmem>>, vector<16x8xf32>
    tpu.vector_store %arg19[%c0_63, %c0_64], %143 {strides = array<i32>} : memref<16x32xf32, #tpu.memory_space<vmem>>, vector<16x8xf32>,
    %145 = vector.extract_strided_slice %126 {offsets = [0, 0, 8], sizes = [2, 8, 8], strides = [1, 1, 1]} : vector<2x8x32xf32> to vector<2x8x8xf32>
    %146 = vector.extract_strided_slice %127 {offsets = [0, 0, 8], sizes = [2, 8, 8], strides = [1, 1, 1]} : vector<2x8x32xf32> to vector<2x8x8xf32>
    %147 = vector.extract_strided_slice %128 {offsets = [0, 0, 8], sizes = [2, 8, 8], strides = [1, 1, 1]} : vector<2x8x32xf32> to vector<2x8x8xf32>
    "tpu.trace_start"() <{level = 10 : i32, message = "bqd,bkd->bqk"}> : () -> ()
    %cst_65 = arith.constant dense<0.000000e+00> : vector<2x8x8xf32>
    %148 = tpu.matmul %145, %146, %cst_65 {dimension_numbers = #tpu.dot_dimension_numbers<[2], [2], [1], [1], [0, 0, 0, 1, 1, 1], [0], [0]>} : vector<2x8x8xf32>, vector<2x8x8xf32>, vector<2x8x8xf32> -> vector<2x8x8xf32>
    "tpu.trace_stop"() : () -> ()
    %cst_66 = arith.constant dense<0xFF800000> : vector<2x8xf32>
    %149 = vector.multi_reduction <maximumf>, %148, %cst_66 [2] : vector<2x8x8xf32> to vector<2x8xf32>
    %150 = vector.shape_cast %149 : vector<2x8xf32> to vector<2x8x1xf32>
    %151 = vector.broadcast %150 : vector<2x8x1xf32> to vector<2x8x8xf32>
    %152 = arith.subf %148, %151 : vector<2x8x8xf32>
    %153 = math.exp %152 : vector<2x8x8xf32>
    %cst_67 = arith.constant dense<0.000000e+00> : vector<2x8xf32>
    %154 = vector.multi_reduction <add>, %153, %cst_67 [2] : vector<2x8x8xf32> to vector<2x8xf32>
    %155 = vector.shape_cast %154 : vector<2x8xf32> to vector<2x8x1xf32>
    "tpu.trace_start"() <{level = 10 : i32, message = "bqk,bkd->bqd"}> : () -> ()
    %cst_68 = arith.constant dense<0.000000e+00> : vector<2x8x8xf32>
    %156 = tpu.matmul %153, %147, %cst_68 {dimension_numbers = #tpu.dot_dimension_numbers<[2], [1], [1], [2], [0, 0, 0, 1, 1, 2], [0], [0]>} : vector<2x8x8xf32>, vector<2x8x8xf32>, vector<2x8x8xf32> -> vector<2x8x8xf32>
    "tpu.trace_stop"() : () -> ()
    %157 = vector.broadcast %155 : vector<2x8x1xf32> to vector<2x8x8xf32>
    %158 = arith.divf %156, %157 : vector<2x8x8xf32>
    %159 = vector.shape_cast %158 : vector<2x8x8xf32> to vector<16x8xf32>
    %c0_69 = arith.constant 0 : index
    %c8_70 = arith.constant 8 : index
    %160 = vector.load %arg19[%c0_69, %c8_70] : memref<16x32xf32, #tpu.memory_space<vmem>>, vector<16x8xf32>
    tpu.vector_store %arg19[%c0_69, %c8_70], %159 {strides = array<i32>} : memref<16x32xf32, #tpu.memory_space<vmem>>, vector<16x8xf32>,
    %161 = vector.extract_strided_slice %126 {offsets = [0, 0, 16], sizes = [2, 8, 8], strides = [1, 1, 1]} : vector<2x8x32xf32> to vector<2x8x8xf32>
    %162 = vector.extract_strided_slice %127 {offsets = [0, 0, 16], sizes = [2, 8, 8], strides = [1, 1, 1]} : vector<2x8x32xf32> to vector<2x8x8xf32>
    %163 = vector.extract_strided_slice %128 {offsets = [0, 0, 16], sizes = [2, 8, 8], strides = [1, 1, 1]} : vector<2x8x32xf32> to vector<2x8x8xf32>
    "tpu.trace_start"() <{level = 10 : i32, message = "bqd,bkd->bqk"}> : () -> ()
    %cst_71 = arith.constant dense<0.000000e+00> : vector<2x8x8xf32>
    %164 = tpu.matmul %161, %162, %cst_71 {dimension_numbers = #tpu.dot_dimension_numbers<[2], [2], [1], [1], [0, 0, 0, 1, 1, 1], [0], [0]>} : vector<2x8x8xf32>, vector<2x8x8xf32>, vector<2x8x8xf32> -> vector<2x8x8xf32>
    "tpu.trace_stop"() : () -> ()
    %cst_72 = arith.constant dense<0xFF800000> : vector<2x8xf32>
    %165 = vector.multi_reduction <maximumf>, %164, %cst_72 [2] : vector<2x8x8xf32> to vector<2x8xf32>
    %166 = vector.shape_cast %165 : vector<2x8xf32> to vector<2x8x1xf32>
    %167 = vector.broadcast %166 : vector<2x8x1xf32> to vector<2x8x8xf32>
    %168 = arith.subf %164, %167 : vector<2x8x8xf32>
    %169 = math.exp %168 : vector<2x8x8xf32>
    %cst_73 = arith.constant dense<0.000000e+00> : vector<2x8xf32>
    %170 = vector.multi_reduction <add>, %169, %cst_73 [2] : vector<2x8x8xf32> to vector<2x8xf32>
    %171 = vector.shape_cast %170 : vector<2x8xf32> to vector<2x8x1xf32>
    "tpu.trace_start"() <{level = 10 : i32, message = "bqk,bkd->bqd"}> : () -> ()
    %cst_74 = arith.constant dense<0.000000e+00> : vector<2x8x8xf32>
    %172 = tpu.matmul %169, %163, %cst_74 {dimension_numbers = #tpu.dot_dimension_numbers<[2], [1], [1], [2], [0, 0, 0, 1, 1, 2], [0], [0]>} : vector<2x8x8xf32>, vector<2x8x8xf32>, vector<2x8x8xf32> -> vector<2x8x8xf32>
    "tpu.trace_stop"() : () -> ()
    %173 = vector.broadcast %171 : vector<2x8x1xf32> to vector<2x8x8xf32>
    %174 = arith.divf %172, %173 : vector<2x8x8xf32>
    %175 = vector.shape_cast %174 : vector<2x8x8xf32> to vector<16x8xf32>
    %c0_75 = arith.constant 0 : index
    %c16_76 = arith.constant 16 : index
    %176 = vector.load %arg19[%c0_75, %c16_76] : memref<16x32xf32, #tpu.memory_space<vmem>>, vector<16x8xf32>
    tpu.vector_store %arg19[%c0_75, %c16_76], %175 {strides = array<i32>} : memref<16x32xf32, #tpu.memory_space<vmem>>, vector<16x8xf32>,
    %177 = vector.extract_strided_slice %126 {offsets = [0, 0, 24], sizes = [2, 8, 8], strides = [1, 1, 1]} : vector<2x8x32xf32> to vector<2x8x8xf32>
    %178 = vector.extract_strided_slice %127 {offsets = [0, 0, 24], sizes = [2, 8, 8], strides = [1, 1, 1]} : vector<2x8x32xf32> to vector<2x8x8xf32>
    %179 = vector.extract_strided_slice %128 {offsets = [0, 0, 24], sizes = [2, 8, 8], strides = [1, 1, 1]} : vector<2x8x32xf32> to vector<2x8x8xf32>
    "tpu.trace_start"() <{level = 10 : i32, message = "bqd,bkd->bqk"}> : () -> ()
    %cst_77 = arith.constant dense<0.000000e+00> : vector<2x8x8xf32>
    %180 = tpu.matmul %177, %178, %cst_77 {dimension_numbers = #tpu.dot_dimension_numbers<[2], [2], [1], [1], [0, 0, 0, 1, 1, 1], [0], [0]>} : vector<2x8x8xf32>, vector<2x8x8xf32>, vector<2x8x8xf32> -> vector<2x8x8xf32>
    "tpu.trace_stop"() : () -> ()
    %cst_78 = arith.constant dense<0xFF800000> : vector<2x8xf32>
    %181 = vector.multi_reduction <maximumf>, %180, %cst_78 [2] : vector<2x8x8xf32> to vector<2x8xf32>
    %182 = vector.shape_cast %181 : vector<2x8xf32> to vector<2x8x1xf32>
    %183 = vector.broadcast %182 : vector<2x8x1xf32> to vector<2x8x8xf32>
    %184 = arith.subf %180, %183 : vector<2x8x8xf32>
    %185 = math.exp %184 : vector<2x8x8xf32>
    %cst_79 = arith.constant dense<0.000000e+00> : vector<2x8xf32>
    %186 = vector.multi_reduction <add>, %185, %cst_79 [2] : vector<2x8x8xf32> to vector<2x8xf32>
    %187 = vector.shape_cast %186 : vector<2x8xf32> to vector<2x8x1xf32>
    "tpu.trace_start"() <{level = 10 : i32, message = "bqk,bkd->bqd"}> : () -> ()
    %cst_80 = arith.constant dense<0.000000e+00> : vector<2x8x8xf32>
    %188 = tpu.matmul %185, %179, %cst_80 {dimension_numbers = #tpu.dot_dimension_numbers<[2], [1], [1], [2], [0, 0, 0, 1, 1, 2], [0], [0]>} : vector<2x8x8xf32>, vector<2x8x8xf32>, vector<2x8x8xf32> -> vector<2x8x8xf32>
    "tpu.trace_stop"() : () -> ()
    %189 = vector.broadcast %187 : vector<2x8x1xf32> to vector<2x8x8xf32>
    %190 = arith.divf %188, %189 : vector<2x8x8xf32>
    %191 = vector.shape_cast %190 : vector<2x8x8xf32> to vector<16x8xf32>
    %c0_81 = arith.constant 0 : index
    %c24_82 = arith.constant 24 : index
    %192 = vector.load %arg19[%c0_81, %c24_82] : memref<16x32xf32, #tpu.memory_space<vmem>>, vector<16x8xf32>
    tpu.vector_store %arg19[%c0_81, %c24_82], %191 {strides = array<i32>} : memref<16x32xf32, #tpu.memory_space<vmem>>, vector<16x8xf32>,
    %c0_83 = arith.constant 0 : index
    %c0_84 = arith.constant 0 : index
    %193 = vector.load %arg19[%c0_83, %c0_84] : memref<16x32xf32, #tpu.memory_space<vmem>>, vector<16x32xf32>
    %c0_85 = arith.constant 0 : index
    %c0_86 = arith.constant 0 : index
    %194 = vector.load %arg11[%c0_85, %c0_86] : memref<32x32xf32, #tpu.memory_space<vmem>>, vector<32x32xf32>
    %cst_87 = arith.constant dense<0.000000e+00> : vector<16x32xf32>
    %195 = tpu.matmul %193, %194, %cst_87 {dimension_numbers = #tpu.dot_dimension_numbers<[1], [0], [0], [1], [0, 0, 1, 1], [], []>} : vector<16x32xf32>, vector<32x32xf32>, vector<16x32xf32> -> vector<16x32xf32>
    %c0_88 = arith.constant 0 : index
    %c0_89 = arith.constant 0 : index
    %196 = vector.load %arg12[%c0_88, %c0_89] : memref<1x32xf32, #tpu.memory_space<vmem>>, vector<1x32xf32>
    %197 = vector.broadcast %196 : vector<1x32xf32> to vector<16x32xf32>
    %198 = arith.addf %195, %197 : vector<16x32xf32>
    %199 = arith.addf %111, %198 : vector<16x32xf32>
    %c2 = arith.constant 2 : index
    %c0_90 = arith.constant 0 : index
    %c0_91 = arith.constant 0 : index
    %200 = vector.load %arg17[%c2, %c0_90, %c0_91] : memref<6x1x32xf32, #tpu.memory_space<vmem>>, vector<1x1x32xf32>
    %201 = vector.shape_cast %200 : vector<1x1x32xf32> to vector<1x32xf32>
    %c3 = arith.constant 3 : index
    %c0_92 = arith.constant 0 : index
    %c0_93 = arith.constant 0 : index
    %202 = vector.load %arg17[%c3, %c0_92, %c0_93] : memref<6x1x32xf32, #tpu.memory_space<vmem>>, vector<1x1x32xf32>
    %203 = vector.shape_cast %202 : vector<1x1x32xf32> to vector<1x32xf32>
    %cst_94 = arith.constant dense<0.000000e+00> : vector<16xf32>
    %204 = vector.multi_reduction <add>, %199, %cst_94 [1] : vector<16x32xf32> to vector<16xf32>
    %205 = vector.shape_cast %204 : vector<16xf32> to vector<16x1xf32>
    %cst_95 = arith.constant 3.200000e+01 : f32
    %206 = vector.broadcast %cst_95 : f32 to vector<16x1xf32>
    %207 = arith.divf %205, %206 : vector<16x1xf32>
    %208 = vector.broadcast %207 : vector<16x1xf32> to vector<16x32xf32>
    %209 = arith.subf %199, %208 : vector<16x32xf32>
    %210 = arith.mulf %209, %209 : vector<16x32xf32>
    %cst_96 = arith.constant dense<0.000000e+00> : vector<16xf32>
    %211 = vector.multi_reduction <add>, %210, %cst_96 [1] : vector<16x32xf32> to vector<16xf32>
    %212 = vector.shape_cast %211 : vector<16xf32> to vector<16x1xf32>
    %cst_97 = arith.constant 3.200000e+01 : f32
    %213 = vector.broadcast %cst_97 : f32 to vector<16x1xf32>
    %214 = arith.divf %212, %213 : vector<16x1xf32>
    %cst_98 = arith.constant 9.99999974E-6 : f32
    %215 = vector.broadcast %cst_98 : f32 to vector<16x1xf32>
    %216 = arith.addf %214, %215 : vector<16x1xf32>
    %217 = math.rsqrt %216 : vector<16x1xf32>
    %218 = vector.broadcast %217 : vector<16x1xf32> to vector<16x32xf32>
    %219 = arith.mulf %209, %218 : vector<16x32xf32>
    %220 = vector.broadcast %201 : vector<1x32xf32> to vector<16x32xf32>
    %221 = arith.mulf %219, %220 : vector<16x32xf32>
    %222 = vector.broadcast %203 : vector<1x32xf32> to vector<16x32xf32>
    %223 = arith.addf %221, %222 : vector<16x32xf32>
    %c0_99 = arith.constant 0 : index
    %c0_100 = arith.constant 0 : index
    %224 = vector.load %arg13[%c0_99, %c0_100] : memref<32x64xf32, #tpu.memory_space<vmem>>, vector<32x64xf32>
    %cst_101 = arith.constant dense<0.000000e+00> : vector<16x64xf32>
    %225 = tpu.matmul %223, %224, %cst_101 {dimension_numbers = #tpu.dot_dimension_numbers<[1], [0], [0], [1], [0, 0, 1, 1], [], []>} : vector<16x32xf32>, vector<32x64xf32>, vector<16x64xf32> -> vector<16x64xf32>
    %c0_102 = arith.constant 0 : index
    %c0_103 = arith.constant 0 : index
    %226 = vector.load %arg14[%c0_102, %c0_103] : memref<1x64xf32, #tpu.memory_space<vmem>>, vector<1x64xf32>
    %227 = vector.broadcast %226 : vector<1x64xf32> to vector<16x64xf32>
    %228 = arith.addf %225, %227 : vector<16x64xf32>
    %cst_104 = arith.constant 0.000000e+00 : f32
    %229 = vector.broadcast %cst_104 : f32 to vector<16x64xf32>
    %230 = arith.maximumf %228, %229 : vector<16x64xf32>
    %c0_105 = arith.constant 0 : index
    %c0_106 = arith.constant 0 : index
    %231 = vector.load %arg15[%c0_105, %c0_106] : memref<64x32xf32, #tpu.memory_space<vmem>>, vector<64x32xf32>
    %cst_107 = arith.constant dense<0.000000e+00> : vector<16x32xf32>
    %232 = tpu.matmul %230, %231, %cst_107 {dimension_numbers = #tpu.dot_dimension_numbers<[1], [0], [0], [1], [0, 0, 1, 1], [], []>} : vector<16x64xf32>, vector<64x32xf32>, vector<16x32xf32> -> vector<16x32xf32>
    %c0_108 = arith.constant 0 : index
    %c0_109 = arith.constant 0 : index
    %233 = vector.load %arg16[%c0_108, %c0_109] : memref<1x32xf32, #tpu.memory_space<vmem>>, vector<1x32xf32>
    %234 = vector.broadcast %233 : vector<1x32xf32> to vector<16x32xf32>
    %235 = arith.addf %232, %234 : vector<16x32xf32>
    %236 = arith.addf %223, %235 : vector<16x32xf32>
    %c4 = arith.constant 4 : index
    %c0_110 = arith.constant 0 : index
    %c0_111 = arith.constant 0 : index
    %237 = vector.load %arg17[%c4, %c0_110, %c0_111] : memref<6x1x32xf32, #tpu.memory_space<vmem>>, vector<1x1x32xf32>
    %238 = vector.shape_cast %237 : vector<1x1x32xf32> to vector<1x32xf32>
    %c5 = arith.constant 5 : index
    %c0_112 = arith.constant 0 : index
    %c0_113 = arith.constant 0 : index
    %239 = vector.load %arg17[%c5, %c0_112, %c0_113] : memref<6x1x32xf32, #tpu.memory_space<vmem>>, vector<1x1x32xf32>
    %240 = vector.shape_cast %239 : vector<1x1x32xf32> to vector<1x32xf32>
    %cst_114 = arith.constant dense<0.000000e+00> : vector<16xf32>
    %241 = vector.multi_reduction <add>, %236, %cst_114 [1] : vector<16x32xf32> to vector<16xf32>
    %242 = vector.shape_cast %241 : vector<16xf32> to vector<16x1xf32>
    %cst_115 = arith.constant 3.200000e+01 : f32
    %243 = vector.broadcast %cst_115 : f32 to vector<16x1xf32>
    %244 = arith.divf %242, %243 : vector<16x1xf32>
    %245 = vector.broadcast %244 : vector<16x1xf32> to vector<16x32xf32>
    %246 = arith.subf %236, %245 : vector<16x32xf32>
    %247 = arith.mulf %246, %246 : vector<16x32xf32>
    %cst_116 = arith.constant dense<0.000000e+00> : vector<16xf32>
    %248 = vector.multi_reduction <add>, %247, %cst_116 [1] : vector<16x32xf32> to vector<16xf32>
    %249 = vector.shape_cast %248 : vector<16xf32> to vector<16x1xf32>
    %cst_117 = arith.constant 3.200000e+01 : f32
    %250 = vector.broadcast %cst_117 : f32 to vector<16x1xf32>
    %251 = arith.divf %249, %250 : vector<16x1xf32>
    %cst_118 = arith.constant 9.99999974E-6 : f32
    %252 = vector.broadcast %cst_118 : f32 to vector<16x1xf32>
    %253 = arith.addf %251, %252 : vector<16x1xf32>
    %254 = math.rsqrt %253 : vector<16x1xf32>
    %255 = vector.broadcast %254 : vector<16x1xf32> to vector<16x32xf32>
    %256 = arith.mulf %246, %255 : vector<16x32xf32>
    %257 = vector.broadcast %238 : vector<1x32xf32> to vector<16x32xf32>
    %258 = arith.mulf %256, %257 : vector<16x32xf32>
    %259 = vector.broadcast %240 : vector<1x32xf32> to vector<16x32xf32>
    %260 = arith.addf %258, %259 : vector<16x32xf32>
    %261 = vector.shape_cast %260 : vector<16x32xf32> to vector<2x8x32xf32>
    %c0_119 = arith.constant 0 : index
    %c0_120 = arith.constant 0 : index
    %c0_121 = arith.constant 0 : index
    %262 = vector.load %arg18[%c0_119, %c0_120, %c0_121] : memref<2x8x32xf32, #tpu.memory_space<vmem>>, vector<2x8x32xf32>
    tpu.vector_store %arg18[%c0_119, %c0_120, %c0_121], %261 {strides = array<i32>} : memref<2x8x32xf32, #tpu.memory_space<vmem>>, vector<2x8x32xf32>,
    return
  }
  func.func @transform_0(%arg0: i32) -> (i32, i32, i32) {
    %c0_i32 = arith.constant 0 : i32
    %c0_i32_0 = arith.constant 0 : i32
    %c0_i32_1 = arith.constant 0 : i32
    return %arg0, %c0_i32, %c0_i32_0 : i32, i32, i32
  }
  func.func @transform_1(%arg0: i32) -> (i32, i32, i32) {
    %c0_i32 = arith.constant 0 : i32
    %c0_i32_0 = arith.constant 0 : i32
    %c0_i32_1 = arith.constant 0 : i32
    return %arg0, %c0_i32, %c0_i32_0 : i32, i32, i32
  }
  func.func @transform_2(%arg0: i32) -> (i32, i32) {
    %c0_i32 = arith.constant 0 : i32
    %c0_i32_0 = arith.constant 0 : i32
    %c0_i32_1 = arith.constant 0 : i32
    return %c0_i32, %c0_i32_0 : i32, i32
  }
  func.func @transform_3(%arg0: i32) -> (i32, i32) {
    %c0_i32 = arith.constant 0 : i32
    %c0_i32_0 = arith.constant 0 : i32
    %c0_i32_1 = arith.constant 0 : i32
    return %c0_i32, %c0_i32_0 : i32, i32
  }
  func.func @transform_4(%arg0: i32) -> (i32, i32) {
    %c0_i32 = arith.constant 0 : i32
    %c0_i32_0 = arith.constant 0 : i32
    %c0_i32_1 = arith.constant 0 : i32
    return %c0_i32, %c0_i32_0 : i32, i32
  }
  func.func @transform_5(%arg0: i32) -> (i32, i32) {
    %c0_i32 = arith.constant 0 : i32
    %c0_i32_0 = arith.constant 0 : i32
    %c0_i32_1 = arith.constant 0 : i32
    return %c0_i32, %c0_i32_0 : i32, i32
  }
  func.func @transform_6(%arg0: i32) -> (i32, i32) {
    %c0_i32 = arith.constant 0 : i32
    %c0_i32_0 = arith.constant 0 : i32
    %c0_i32_1 = arith.constant 0 : i32
    return %c0_i32, %c0_i32_0 : i32, i32
  }
  func.func @transform_7(%arg0: i32) -> (i32, i32) {
    %c0_i32 = arith.constant 0 : i32
    %c0_i32_0 = arith.constant 0 : i32
    %c0_i32_1 = arith.constant 0 : i32
    return %c0_i32, %c0_i32_0 : i32, i32
  }
  func.func @transform_8(%arg0: i32) -> (i32, i32) {
    %c0_i32 = arith.constant 0 : i32
    %c0_i32_0 = arith.constant 0 : i32
    %c0_i32_1 = arith.constant 0 : i32
    return %c0_i32, %c0_i32_0 : i32, i32
  }
  func.func @transform_9(%arg0: i32) -> (i32, i32) {
    %c0_i32 = arith.constant 0 : i32
    %c0_i32_0 = arith.constant 0 : i32
    %c0_i32_1 = arith.constant 0 : i32
    return %c0_i32, %c0_i32_0 : i32, i32
  }
  func.func @transform_10(%arg0: i32) -> (i32, i32) {
    %c0_i32 = arith.constant 0 : i32
    %c0_i32_0 = arith.constant 0 : i32
    %c0_i32_1 = arith.constant 0 : i32
    return %c0_i32, %c0_i32_0 : i32, i32
  }
  func.func @transform_11(%arg0: i32) -> (i32, i32) {
    %c0_i32 = arith.constant 0 : i32
    %c0_i32_0 = arith.constant 0 : i32
    %c0_i32_1 = arith.constant 0 : i32
    return %c0_i32, %c0_i32_0 : i32, i32
  }
  func.func @transform_12(%arg0: i32) -> (i32, i32) {
    %c0_i32 = arith.constant 0 : i32
    %c0_i32_0 = arith.constant 0 : i32
    %c0_i32_1 = arith.constant 0 : i32
    return %c0_i32, %c0_i32_0 : i32, i32
  }
  func.func @transform_13(%arg0: i32) -> (i32, i32) {
    %c0_i32 = arith.constant 0 : i32
    %c0_i32_0 = arith.constant 0 : i32
    %c0_i32_1 = arith.constant 0 : i32
    return %c0_i32, %c0_i32_0 : i32, i32
  }
  func.func @transform_14(%arg0: i32) -> (i32, i32) {
    %c0_i32 = arith.constant 0 : i32
    %c0_i32_0 = arith.constant 0 : i32
    %c0_i32_1 = arith.constant 0 : i32
    return %c0_i32, %c0_i32_0 : i32, i32
  }
  func.func @transform_15(%arg0: i32) -> (i32, i32) {
    %c0_i32 = arith.constant 0 : i32
    %c0_i32_0 = arith.constant 0 : i32
    %c0_i32_1 = arith.constant 0 : i32
    return %c0_i32, %c0_i32_0 : i32, i32
  }
  func.func @transform_16(%arg0: i32) -> (i32, i32, i32) {
    %c0_i32 = arith.constant 0 : i32
    %c0_i32_0 = arith.constant 0 : i32
    %c0_i32_1 = arith.constant 0 : i32
    %c0_i32_2 = arith.constant 0 : i32
    return %c0_i32, %c0_i32_0, %c0_i32_1 : i32, i32, i32
  }
  func.func @transform_17(%arg0: i32) -> (i32, i32, i32) {
    %c0_i32 = arith.constant 0 : i32
    %c0_i32_0 = arith.constant 0 : i32
    %c0_i32_1 = arith.constant 0 : i32
    return %arg0, %c0_i32, %c0_i32_0 : i32, i32, i32
  }
}

</mosaic_0001>

<llo_original>
// kernel: tpu_custom_call.1
$region0: #{tpu_custom_call.1}
  #allocation0 [shape = 'u32[]', space=smem, size = 0x4, offset = 0x4, fixed_abs, tag = 'smem constant byte address 0x4 - core index']
  #allocation1 [shape = 'u32[144,128]{1,0:T(1,128)}', space=vmem, size = 0x12000, scoped, tag = 'internal scratch']
  #allocation2 [shape = 'f32[16,32]{1,0:T(8,128)}', space=vmem, size = 0x2000, scoped, tag = 'scratch operand']
  %s0 = inlined_call_operand.hbm [shape: f32[2,8,32], index: 0, kind: input, shape index: {}]
  %s1 = inlined_call_operand.hbm [shape: f32[2,8,32], index: 1, kind: input, shape index: {}]
  %s2 = inlined_call_operand.vmem [shape: f32[32,96], index: 2, kind: input, shape index: {}]
  %s3 = inlined_call_operand.vmem [shape: f32[1,96], index: 3, kind: input, shape index: {}]
  %s4 = inlined_call_operand.vmem [shape: f32[32,32], index: 4, kind: input, shape index: {}]
  %s5 = inlined_call_operand.vmem [shape: f32[1,32], index: 5, kind: input, shape index: {}]
  %s6 = inlined_call_operand.vmem [shape: f32[32,32], index: 6, kind: input, shape index: {}]
  %s7 = inlined_call_operand.vmem [shape: f32[1,32], index: 7, kind: input, shape index: {}]
  %s8 = inlined_call_operand.hbm [shape: f32[32,64], index: 8, kind: input, shape index: {}]
  %s9 = inlined_call_operand.vmem [shape: f32[1,64], index: 9, kind: input, shape index: {}]
  %s10 = inlined_call_operand.hbm [shape: f32[32,32], index: 10, kind: input, shape index: {}]
  %s11 = inlined_call_operand.vmem [shape: f32[1,32], index: 11, kind: input, shape index: {}]
  %s12 = inlined_call_operand.hbm [shape: f32[32,64], index: 12, kind: input, shape index: {}]
  %s13 = inlined_call_operand.vmem [shape: f32[1,64], index: 13, kind: input, shape index: {}]
  %s14 = inlined_call_operand.vmem [shape: f32[64,32], index: 14, kind: input, shape index: {}]
  %s15 = inlined_call_operand.vmem [shape: f32[1,32], index: 15, kind: input, shape index: {}]
  %s16 = inlined_call_operand.vmem [shape: f32[6,1,32], index: 16, kind: input, shape index: {}]
  %s17 = inlined_call_operand.hbm [shape: f32[2,8,32], index: 17, kind: output, shape index: {}]
  %s18 = sld [smem:[#allocation0]]
  $region98: #{tpu_custom_call.1} parent=0
    _
  %s20 = ssub.s32 1, %s18
  %s21 = scalar_select 0, %s20, %s18
  $region1: #{tpu_custom_call.1} parent=0
    #allocation3 [shape = 'u8[8192]{0}', space=vmem, size = 0x2000, scoped, tag = 'input window, operand 0, single buffered']
    #allocation4 [shape = 's32[1]{0}', space=sflag, size = 0x4, scoped, tag = 'scoped memory for tpu_custom_call.1']
    #allocation5 [shape = 's32[1]{0}', space=sflag, size = 0x4, scoped, tag = 'scoped memory for tpu_custom_call.1']
    #allocation6 [shape = 'u8[8192]{0}', space=vmem, size = 0x2000, scoped, tag = 'input window, operand 1, single buffered']
    #allocation7 [shape = 's32[1]{0}', space=sflag, size = 0x4, scoped, tag = 'scoped memory for tpu_custom_call.1']
    #allocation8 [shape = 'u8[16384]{0}', space=vmem, size = 0x4000, scoped, tag = 'input window, operand 8, single buffered']
    #allocation9 [shape = 'u8[16384]{0}', space=vmem, size = 0x4000, scoped, tag = 'input window, operand 10, single buffered']
    #allocation10 [shape = 's32[1]{0}', space=sflag, size = 0x4, scoped, tag = 'scoped memory for tpu_custom_call.1']
    #allocation11 [shape = 'u8[16384]{0}', space=vmem, size = 0x4000, scoped, tag = 'input window, operand 12, single buffered']
    #allocation12 [shape = 'u8[8192]{0}', space=vmem, size = 0x2000, scoped, tag = 'output window, operand 0, single buffered']
    %22 = vsyncpa [#allocation4], 0
    %23 = vsyncpa [#allocation7], 0
    %24 = vsyncpa [#allocation10], 0
    %25 = vsyncpa [#allocation5], 0
    // Predicated region
    $region2: #{tpu_custom_call.1} parent=1 // pred_check
      _
    $region3: #{tpu_custom_call.1} parent=1 // pred_check_branch
      %27 = sbr.rel (0) target = $region5
    $region4: #{tpu_custom_call.1} parent=1 // pred_region
      %s29 = ssub.s32 256, 256
      %30 = vsyncadd [#allocation4], %s29
      %s31 = sshll.u32 [#allocation3], 4
      %s32 = int_to_ptr.vmem [resolvable:$true] %s31
      %37 = dma.hbm_to_vmem [thread:$0]  %s0, 256, %s32, [#allocation4], 128, 128, 8
    $region5: #{tpu_custom_call.1} parent=1 // pred_fallthru
      _
    // Predicated region
    $region6: #{tpu_custom_call.1} parent=1 // pred_check
      _
    $region7: #{tpu_custom_call.1} parent=1 // pred_check_branch
      %39 = sbr.rel (0) target = $region9
    $region8: #{tpu_custom_call.1} parent=1 // pred_region
      %s41 = ssub.s32 256, 256
      %42 = vsyncadd [#allocation7], %s41
      %s43 = sshll.u32 [#allocation6], 4
      %s44 = int_to_ptr.vmem [resolvable:$true] %s43
      %49 = dma.hbm_to_vmem [thread:$0]  %s1, 256, %s44, [#allocation7], 128, 128, 8
    $region9: #{tpu_custom_call.1} parent=1 // pred_fallthru
      _
    // Predicated region
    $region10: #{tpu_custom_call.1} parent=1 // pred_check
      _
    $region11: #{tpu_custom_call.1} parent=1 // pred_check_branch
      %51 = sbr.rel (0) target = $region13
    $region12: #{tpu_custom_call.1} parent=1 // pred_region
      _
    $region13: #{tpu_custom_call.1} parent=1 // pred_fallthru
      _
    // Predicated region
    $region14: #{tpu_custom_call.1} parent=1 // pred_check
      _
    $region15: #{tpu_custom_call.1} parent=1 // pred_check_branch
      %53 = sbr.rel (0) target = $region17
    $region16: #{tpu_custom_call.1} parent=1 // pred_region
      _
    $region17: #{tpu_custom_call.1} parent=1 // pred_fallthru
      _
    // Predicated region
    $region18: #{tpu_custom_call.1} parent=1 // pred_check
      _
    $region19: #{tpu_custom_call.1} parent=1 // pred_check_branch
      %55 = sbr.rel (0) target = $region21
    $region20: #{tpu_custom_call.1} parent=1 // pred_region
      _
    $region21: #{tpu_custom_call.1} parent=1 // pred_fallthru
      _
    // Predicated region
    $region22: #{tpu_custom_call.1} parent=1 // pred_check
      _
    $region23: #{tpu_custom_call.1} parent=1 // pred_check_branch
      %57 = sbr.rel (0) target = $region25
    $region24: #{tpu_custom_call.1} parent=1 // pred_region
      _
    $region25: #{tpu_custom_call.1} parent=1 // pred_fallthru
      _
    // Predicated region
    $region26: #{tpu_custom_call.1} parent=1 // pred_check
      _
    $region27: #{tpu_custom_call.1} parent=1 // pred_check_branch
      %59 = sbr.rel (0) target = $region29
    $region28: #{tpu_custom_call.1} parent=1 // pred_region
      _
    $region29: #{tpu_custom_call.1} parent=1 // pred_fallthru
      _
    // Predicated region
    $region30: #{tpu_custom_call.1} parent=1 // pred_check
      _
    $region31: #{tpu_custom_call.1} parent=1 // pred_check_branch
      %61 = sbr.rel (0) target = $region33
    $region32: #{tpu_custom_call.1} parent=1 // pred_region
      _
    $region33: #{tpu_custom_call.1} parent=1 // pred_fallthru
      _
    // Predicated region
    $region34: #{tpu_custom_call.1} parent=1 // pred_check
      _
    $region35: #{tpu_custom_call.1} parent=1 // pred_check_branch
      %63 = sbr.rel (0) target = $region37
    $region36: #{tpu_custom_call.1} parent=1 // pred_region
      %s65 = ssub.s32 512, 512
      %66 = vsyncadd [#allocation7], %s65
      %s67 = sshll.u32 [#allocation8], 4
      %s68 = int_to_ptr.vmem [resolvable:$true] %s67
      %73 = dma.hbm_to_vmem [thread:$0]  %s8, 512, %s68, [#allocation7], 128, 128, 8
    $region37: #{tpu_custom_call.1} parent=1 // pred_fallthru
      _
    // Predicated region
    $region38: #{tpu_custom_call.1} parent=1 // pred_check
      _
    $region39: #{tpu_custom_call.1} parent=1 // pred_check_branch
      %75 = sbr.rel (0) target = $region41
    $region40: #{tpu_custom_call.1} parent=1 // pred_region
      _
    $region41: #{tpu_custom_call.1} parent=1 // pred_fallthru
      _
    // Predicated region
    $region42: #{tpu_custom_call.1} parent=1 // pred_check
      _
    $region43: #{tpu_custom_call.1} parent=1 // pred_check_branch
      %77 = sbr.rel (0) target = $region45
    $region44: #{tpu_custom_call.1} parent=1 // pred_region
      %s79 = ssub.s32 512, 512
      %80 = vsyncadd [#allocation10], %s79
      %s81 = sshll.u32 [#allocation9], 4
      %s82 = int_to_ptr.vmem [resolvable:$true] %s81
      %87 = dma.hbm_to_vmem [thread:$0]  %s10, 512, %s82, [#allocation10], 128, 128, 8
    $region45: #{tpu_custom_call.1} parent=1 // pred_fallthru
      _
    // Predicated region
    $region46: #{tpu_custom_call.1} parent=1 // pred_check
      _
    $region47: #{tpu_custom_call.1} parent=1 // pred_check_branch
      %89 = sbr.rel (0) target = $region49
    $region48: #{tpu_custom_call.1} parent=1 // pred_region
      _
    $region49: #{tpu_custom_call.1} parent=1 // pred_fallthru
      _
    // Predicated region
    $region50: #{tpu_custom_call.1} parent=1 // pred_check
      _
    $region51: #{tpu_custom_call.1} parent=1 // pred_check_branch
      %91 = sbr.rel (0) target = $region53
    $region52: #{tpu_custom_call.1} parent=1 // pred_region
      %s93 = ssub.s32 512, 512
      %94 = vsyncadd [#allocation10], %s93
      %s95 = sshll.u32 [#allocation11], 4
      %s96 = int_to_ptr.vmem [resolvable:$true] %s95
      %101 = dma.hbm_to_vmem [thread:$0]  %s12, 512, %s96, [#allocation10], 128, 128, 8
    $region53: #{tpu_custom_call.1} parent=1 // pred_fallthru
      _
    // Predicated region
    $region54: #{tpu_custom_call.1} parent=1 // pred_check
      _
    $region55: #{tpu_custom_call.1} parent=1 // pred_check_branch
      %103 = sbr.rel (0) target = $region57
    $region56: #{tpu_custom_call.1} parent=1 // pred_region
      _
    $region57: #{tpu_custom_call.1} parent=1 // pred_fallthru
      _
    // Predicated region
    $region58: #{tpu_custom_call.1} parent=1 // pred_check
      _
    $region59: #{tpu_custom_call.1} parent=1 // pred_check_branch
      %105 = sbr.rel (0) target = $region61
    $region60: #{tpu_custom_call.1} parent=1 // pred_region
      _
    $region61: #{tpu_custom_call.1} parent=1 // pred_fallthru
      _
    // Predicated region
    $region62: #{tpu_custom_call.1} parent=1 // pred_check
      _
    $region63: #{tpu_custom_call.1} parent=1 // pred_check_branch
      %107 = sbr.rel (0) target = $region65
    $region64: #{tpu_custom_call.1} parent=1 // pred_region
      _
    $region65: #{tpu_custom_call.1} parent=1 // pred_fallthru
      _
    // Predicated region
    $region66: #{tpu_custom_call.1} parent=1 // pred_check
      _
    $region67: #{tpu_custom_call.1} parent=1 // pred_check_branch
      %109 = sbr.rel (0) target = $region69
    $region68: #{tpu_custom_call.1} parent=1 // pred_region
      _
    $region69: #{tpu_custom_call.1} parent=1 // pred_fallthru
      _
    // Predicated region
    $region70: #{tpu_custom_call.1} parent=1 // pred_check
      _
    $region71: #{tpu_custom_call.1} parent=1 // pred_check_branch
      %111 = sbr.rel (0) target = $region73
    $region72: #{tpu_custom_call.1} parent=1 // pred_region
      %112 = dma.done [#allocation4], 256
    $region73: #{tpu_custom_call.1} parent=1 // pred_fallthru
      _
    // Predicated region
    $region74: #{tpu_custom_call.1} parent=1 // pred_check
      _
    $region75: #{tpu_custom_call.1} parent=1 // pred_check_branch
      %114 = sbr.rel (0) target = $region77
    $region76: #{tpu_custom_call.1} parent=1 // pred_region
      %115 = dma.done [#allocation7], 256
    $region77: #{tpu_custom_call.1} parent=1 // pred_fallthru
      _
    // Predicated region
    $region78: #{tpu_custom_call.1} parent=1 // pred_check
      _
    $region79: #{tpu_custom_call.1} parent=1 // pred_check_branch
      %117 = sbr.rel (0) target = $region81
    $region80: #{tpu_custom_call.1} parent=1 // pred_region
      %118 = dma.done [#allocation7], 512
    $region81: #{tpu_custom_call.1} parent=1 // pred_fallthru
      _
    // Predicated region
    $region82: #{tpu_custom_call.1} parent=1 // pred_check
      _
    $region83: #{tpu_custom_call.1} parent=1 // pred_check_branch
      %120 = sbr.rel (0) target = $region85
    $region84: #{tpu_custom_call.1} parent=1 // pred_region
      %121 = dma.done [#allocation10], 512
    $region85: #{tpu_custom_call.1} parent=1 // pred_fallthru
      _
    // Predicated region
    $region86: #{tpu_custom_call.1} parent=1 // pred_check
      _
    $region87: #{tpu_custom_call.1} parent=1 // pred_check_branch
      %123 = sbr.rel (0) target = $region89
    $region88: #{tpu_custom_call.1} parent=1 // pred_region
      %124 = dma.done [#allocation10], 512
    $region89: #{tpu_custom_call.1} parent=1 // pred_fallthru
      _
    %v125 = vld [vmem:[#allocation3] sm:$0xff]
    %v126 = vld [vmem:[#allocation3 + $0x8] sm:$0xff]
    %v127 = vld [vmem:[#allocation6] sm:$0xff]
    %v128 = vld [vmem:[#allocation6 + $0x8] sm:$0xff]
    %v129 = vld [vmem:[%s2] sm:$0xff]
    %v130 = vld [vmem:[%s2 + $0x8] sm:$0xff]
    %v131 = vld [vmem:[%s2 + $0x10] sm:$0xff]
    %v132 = vld [vmem:[%s2 + $0x18] sm:$0xff]
    %v133 = vld [vmem:[%s3] sm:$0x1]
    %v135 = vlaneseq
    %v136 = vshrl.u32 %v135, 7
    %v137 = vsub.s32 0, %v136
    %v138 = vrot.slane %v133, %v137
    %vm140 = vcmask 261120
    %v142 = vsel %vm140, %v125, 0
    %v145 = vsel %vm140, %v126, 0
    %147 = vmatprep.subr.mxu0 0.0
    %148 = vmatpush1.msra.mxu0 %v129
    %149 = vmatprep.subr.mxu0 0.0
    %150 = vmatpush1.msra.mxu0 %v130
    %151 = vmatprep.subr.mxu0 0.0
    %152 = vmatpush1.msra.mxu0 %v131
    %153 = vmatprep.subr.mxu0 0.0
    %154 = vmatpush1.msra.mxu0 %v132
    %155 = vmatprep.subr.mxu0 0.0
    %156 = vmatpush1.msra.mxu0 0.0
    %157 = vmatprep.subr.mxu0 0.0
    %158 = vmatpush1.msra.mxu0 0.0
    %159 = vmatprep.subr.mxu0 0.0
    %160 = vmatpush1.msra.mxu0 0.0
    %161 = vmatprep.subr.mxu0 0.0
    %162 = vmatpush1.msra.mxu0 0.0
    %163 = vmatprep.subr.mxu0 0.0
    %164 = vmatpush1.msra.mxu0 0.0
    %165 = vmatprep.subr.mxu0 0.0
    %166 = vmatpush1.msra.mxu0 0.0
    %167 = vmatprep.subr.mxu0 0.0
    %168 = vmatpush1.msra.mxu0 0.0
    %169 = vmatprep.subr.mxu0 0.0
    %170 = vmatpush1.msra.mxu0 0.0
    %171 = vmatprep.subr.mxu0 0.0
    %172 = vmatpush1.msra.mxu0 0.0
    %173 = vmatprep.subr.mxu0 0.0
    %174 = vmatpush1.msra.mxu0 0.0
    %175 = vmatprep.subr.mxu0 0.0
    %176 = vmatpush1.msra.mxu0 0.0
    %177 = vmatprep.subr.mxu0 0.0
    %178 = vmatpush1.msra.mxu0 0.0
    %179 = vmatprep.subr.mxu0 0.0
    %180 = vmatpush1.msra.mxu0 0.0
    %181 = vmatprep.subr.mxu0 0.0
    %182 = vmatpush1.msra.mxu0 0.0
    %183 = vmatprep.subr.mxu0 0.0
    %184 = vmatpush1.msra.mxu0 0.0
    %185 = vmatprep.subr.mxu0 0.0
    %186 = vmatpush1.msra.mxu0 0.0
    %187 = vmatprep.subr.mxu0 0.0
    %188 = vmatpush1.msra.mxu0 0.0
    %189 = vmatprep.subr.mxu0 0.0
    %190 = vmatpush1.msra.mxu0 0.0
    %191 = vmatprep.subr.mxu0 0.0
    %192 = vmatpush1.msra.mxu0 0.0
    %193 = vmatprep.subr.mxu0 0.0
    %194 = vmatpush1.msra.mxu0 0.0
    %195 = vmatprep.subr.mxu0 0.0
    %196 = vmatpush1.msra.mxu0 0.0
    %197 = vmatprep.subr.mxu0 0.0
    %198 = vmatpush1.msra.mxu0 0.0
    %199 = vmatprep.subr.mxu0 0.0
    %200 = vmatpush1.msra.mxu0 0.0
    %201 = vmatprep.subr.mxu0 0.0
    %202 = vmatpush1.msra.mxu0 0.0
    %203 = vmatprep.subr.mxu0 0.0
    %204 = vmatpush1.msra.mxu0 0.0
    %205 = vmatprep.subr.mxu0 0.0
    %206 = vmatpush1.msra.mxu0 0.0
    %207 = vmatprep.subr.mxu0 0.0
    %208 = vmatpush1.msra.mxu0 0.0
    %209 = vmatprep.subr.mxu0 0.0
    %210 = vmatpush1.msra.mxu0 0.0
    %211 = vmatprep.mubr.f32.mxu0 0.0
    %212 = vmatmul.mubr.f32.gmra.mrb[0].mxu0 %v142
    %v213 = vpop.f32.mrb[0].mxu0
    %v214 = vadd.f32 %v138, %v213
    %v215 = vpop.f32.mrb[0].mxu0
    %216 = vmatprep.mubr.f32.mxu0 0.0
    %217 = vmatmul.mubr.f32.gmra.mrb[0].mxu0 %v145
    %v218 = vpop.f32.mrb[0].mxu0
    %v219 = vadd.f32 %v138, %v218
    %v220 = vpop.f32.mrb[0].mxu0
    %221 = vdwg.mxu0
    %v222 = vmul.f32 %v214, 0.35355338
    %v223 = vmul.f32 %v219, 0.35355338
    %225 = vrot.lane.b32.xlu0 %v214, 96
    %v226 = vpop.permute.xlu0 %225
    %vm227 = vcmask 64512
    %v229 = vsel %vm227, %v222, 0
    %v231 = vsel %vm227, %v226, 0
    %233 = vmatprep.subr.mxu0 0.0
    %234 = vmatpush1.xpose.msra.mxu0 %v231
    %235 = vmatprep.subr.mxu0 0.0
    %236 = vmatpush1.xpose.msra.mxu0 0.0
    %237 = vmatprep.subr.mxu0 0.0
    %238 = vmatpush1.xpose.msra.mxu0 0.0
    %239 = vmatprep.subr.mxu0 0.0
    %240 = vmatpush1.xpose.msra.mxu0 0.0
    %241 = vmatprep.subr.mxu0 0.0
    %242 = vmatpush1.xpose.msra.mxu0 0.0
    %243 = vmatprep.subr.mxu0 0.0
    %244 = vmatpush1.xpose.msra.mxu0 0.0
    %245 = vmatprep.subr.mxu0 0.0
    %246 = vmatpush1.xpose.msra.mxu0 0.0
    %247 = vmatprep.subr.mxu0 0.0
    %248 = vmatpush1.xpose.msra.mxu0 0.0
    %249 = vmatprep.subr.mxu0 0.0
    %250 = vmatpush1.xpose.msra.mxu0 0.0
    %251 = vmatprep.subr.mxu0 0.0
    %252 = vmatpush1.xpose.msra.mxu0 0.0
    %253 = vmatprep.subr.mxu0 0.0
    %254 = vmatpush1.xpose.msra.mxu0 0.0
    %255 = vmatprep.subr.mxu0 0.0
    %256 = vmatpush1.xpose.msra.mxu0 0.0
    %257 = vmatprep.subr.mxu0 0.0
    %258 = vmatpush1.xpose.msra.mxu0 0.0
    %259 = vmatprep.subr.mxu0 0.0
    %260 = vmatpush1.xpose.msra.mxu0 0.0
    %261 = vmatprep.subr.mxu0 0.0
    %262 = vmatpush1.xpose.msra.mxu0 0.0
    %263 = vmatprep.subr.mxu0 0.0
    %264 = vmatpush1.xpose.msra.mxu0 0.0
    %265 = vmatprep.subr.mxu0 0.0
    %266 = vmatpush1.xpose.msra.mxu0 0.0
    %267 = vmatprep.subr.mxu0 0.0
    %268 = vmatpush1.xpose.msra.mxu0 0.0
    %269 = vmatprep.subr.mxu0 0.0
    %270 = vmatpush1.xpose.msra.mxu0 0.0
    %271 = vmatprep.subr.mxu0 0.0
    %272 = vmatpush1.xpose.msra.mxu0 0.0
    %273 = vmatprep.subr.mxu0 0.0
    %274 = vmatpush1.xpose.msra.mxu0 0.0
    %275 = vmatprep.subr.mxu0 0.0
    %276 = vmatpush1.xpose.msra.mxu0 0.0
    %277 = vmatprep.subr.mxu0 0.0
    %278 = vmatpush1.xpose.msra.mxu0 0.0
    %279 = vmatprep.subr.mxu0 0.0
    %280 = vmatpush1.xpose.msra.mxu0 0.0
    %281 = vmatprep.subr.mxu0 0.0
    %282 = vmatpush1.xpose.msra.mxu0 0.0
    %283 = vmatprep.subr.mxu0 0.0
    %284 = vmatpush1.xpose.msra.mxu0 0.0
    %285 = vmatprep.subr.mxu0 0.0
    %286 = vmatpush1.xpose.msra.mxu0 0.0
    %287 = vmatprep.subr.mxu0 0.0
    %288 = vmatpush1.xpose.msra.mxu0 0.0
    %289 = vmatprep.subr.mxu0 0.0
    %290 = vmatpush1.xpose.msra.mxu0 0.0
    %291 = vmatprep.subr.mxu0 0.0
    %292 = vmatpush1.xpose.msra.mxu0 0.0
    %293 = vmatprep.subr.mxu0 0.0
    %294 = vmatpush1.xpose.msra.mxu0 0.0
    %295 = vmatprep.subr.mxu0 0.0
    %296 = vmatpush1.xpose.msra.mxu0 0.0
    %297 = vmatprep.mubr.f32.mxu0 0.0
    %298 = vmatmul.mubr.f32.gmra.mrb[0].mxu0 %v229
    %v299 = vpop.f32.mrb[0].mxu0
    %v300 = vadd.f32 0.0, %v299
    %v301 = vpop.f32.mrb[0].mxu0
    %302 = vdwg.mxu0
    %304 = vrot.lane.b32.xlu0 %v219, 96
    %v305 = vpop.permute.xlu0 %304
    %v307 = vsel %vm227, %v223, 0
    %v309 = vsel %vm227, %v305, 0
    %311 = vmatprep.subr.mxu0 0.0
    %312 = vmatpush1.xpose.msra.mxu0 %v309
    %313 = vmatprep.subr.mxu0 0.0
    %314 = vmatpush1.xpose.msra.mxu0 0.0
    %315 = vmatprep.subr.mxu0 0.0
    %316 = vmatpush1.xpose.msra.mxu0 0.0
    %317 = vmatprep.subr.mxu0 0.0
    %318 = vmatpush1.xpose.msra.mxu0 0.0
    %319 = vmatprep.subr.mxu0 0.0
    %320 = vmatpush1.xpose.msra.mxu0 0.0
    %321 = vmatprep.subr.mxu0 0.0
    %322 = vmatpush1.xpose.msra.mxu0 0.0
    %323 = vmatprep.subr.mxu0 0.0
    %324 = vmatpush1.xpose.msra.mxu0 0.0
    %325 = vmatprep.subr.mxu0 0.0
    %326 = vmatpush1.xpose.msra.mxu0 0.0
    %327 = vmatprep.subr.mxu0 0.0
    %328 = vmatpush1.xpose.msra.mxu0 0.0
    %329 = vmatprep.subr.mxu0 0.0
    %330 = vmatpush1.xpose.msra.mxu0 0.0
    %331 = vmatprep.subr.mxu0 0.0
    %332 = vmatpush1.xpose.msra.mxu0 0.0
    %333 = vmatprep.subr.mxu0 0.0
    %334 = vmatpush1.xpose.msra.mxu0 0.0
    %335 = vmatprep.subr.mxu0 0.0
    %336 = vmatpush1.xpose.msra.mxu0 0.0
    %337 = vmatprep.subr.mxu0 0.0
    %338 = vmatpush1.xpose.msra.mxu0 0.0
    %339 = vmatprep.subr.mxu0 0.0
    %340 = vmatpush1.xpose.msra.mxu0 0.0
    %341 = vmatprep.subr.mxu0 0.0
    %342 = vmatpush1.xpose.msra.mxu0 0.0
    %343 = vmatprep.subr.mxu0 0.0
    %344 = vmatpush1.xpose.msra.mxu0 0.0
    %345 = vmatprep.subr.mxu0 0.0
    %346 = vmatpush1.xpose.msra.mxu0 0.0
    %347 = vmatprep.subr.mxu0 0.0
    %348 = vmatpush1.xpose.msra.mxu0 0.0
    %349 = vmatprep.subr.mxu0 0.0
    %350 = vmatpush1.xpose.msra.mxu0 0.0
    %351 = vmatprep.subr.mxu0 0.0
    %352 = vmatpush1.xpose.msra.mxu0 0.0
    %353 = vmatprep.subr.mxu0 0.0
    %354 = vmatpush1.xpose.msra.mxu0 0.0
    %355 = vmatprep.subr.mxu0 0.0
    %356 = vmatpush1.xpose.msra.mxu0 0.0
    %357 = vmatprep.subr.mxu0 0.0
    %358 = vmatpush1.xpose.msra.mxu0 0.0
    %359 = vmatprep.subr.mxu0 0.0
    %360 = vmatpush1.xpose.msra.mxu0 0.0
    %361 = vmatprep.subr.mxu0 0.0
    %362 = vmatpush1.xpose.msra.mxu0 0.0
    %363 = vmatprep.subr.mxu0 0.0
    %364 = vmatpush1.xpose.msra.mxu0 0.0
    %365 = vmatprep.subr.mxu0 0.0
    %366 = vmatpush1.xpose.msra.mxu0 0.0
    %367 = vmatprep.subr.mxu0 0.0
    %368 = vmatpush1.xpose.msra.mxu0 0.0
    %369 = vmatprep.subr.mxu0 0.0
    %370 = vmatpush1.xpose.msra.mxu0 0.0
    %371 = vmatprep.subr.mxu0 0.0
    %372 = vmatpush1.xpose.msra.mxu0 0.0
    %373 = vmatprep.subr.mxu0 0.0
    %374 = vmatpush1.xpose.msra.mxu0 0.0
    %375 = vmatprep.mubr.f32.mxu0 0.0
    %376 = vmatmul.mubr.f32.gmra.mrb[0].mxu0 %v307
    %v377 = vpop.f32.mrb[0].mxu0
    %v378 = vadd.f32 0.0, %v377
    %v379 = vpop.f32.mrb[0].mxu0
    %380 = vdwg.mxu0
    %v381 = vsel %vm227, %v300, -inf
    %382 = vmax.xlane.f32.xlu0 %v381
    %v383 = vpop.xlane.xlu0 %382
    %v384 = vsel %vm227, %v378, -inf
    %385 = vmax.xlane.f32.xlu0 %v384
    %v386 = vpop.xlane.xlu0 %385
    %v387 = vsub.f32 %v300, %v383
    %v388 = vsub.f32 %v378, %v386
    %v389 = vmul.f32 %v387, 1.442695
    %v390 = vpow.pop %v389
    %v391 = vmul.f32 %v388, 1.442695
    %v392 = vpow.pop %v391
    %v393 = vsel %vm227, %v390, 0.0
    %394 = vadd.xlane.f32.xlu0 %v393
    %v395 = vpop.xlane.xlu0 %394
    %v396 = vsel %vm227, %v392, 0.0
    %397 = vadd.xlane.f32.xlu0 %v396
    %v398 = vpop.xlane.xlu0 %397
    %399 = vrot.lane.b32.xlu0 %v214, 64
    %v400 = vpop.permute.xlu0 %399
    %v403 = vsel %vm227, %v390, 0
    %405 = vmatprep.subr.mxu0 0.0
    %406 = vmatpush1.msra.mxu0 %v400
    %407 = vmatprep.subr.mxu0 0.0
    %408 = vmatpush1.msra.mxu0 0.0
    %409 = vmatprep.subr.mxu0 0.0
    %410 = vmatpush1.msra.mxu0 0.0
    %411 = vmatprep.subr.mxu0 0.0
    %412 = vmatpush1.msra.mxu0 0.0
    %413 = vmatprep.subr.mxu0 0.0
    %414 = vmatpush1.msra.mxu0 0.0
    %415 = vmatprep.subr.mxu0 0.0
    %416 = vmatpush1.msra.mxu0 0.0
    %417 = vmatprep.subr.mxu0 0.0
    %418 = vmatpush1.msra.mxu0 0.0
    %419 = vmatprep.subr.mxu0 0.0
    %420 = vmatpush1.msra.mxu0 0.0
    %421 = vmatprep.subr.mxu0 0.0
    %422 = vmatpush1.msra.mxu0 0.0
    %423 = vmatprep.subr.mxu0 0.0
    %424 = vmatpush1.msra.mxu0 0.0
    %425 = vmatprep.subr.mxu0 0.0
    %426 = vmatpush1.msra.mxu0 0.0
    %427 = vmatprep.subr.mxu0 0.0
    %428 = vmatpush1.msra.mxu0 0.0
    %429 = vmatprep.subr.mxu0 0.0
    %430 = vmatpush1.msra.mxu0 0.0
    %431 = vmatprep.subr.mxu0 0.0
    %432 = vmatpush1.msra.mxu0 0.0
    %433 = vmatprep.subr.mxu0 0.0
    %434 = vmatpush1.msra.mxu0 0.0
    %435 = vmatprep.subr.mxu0 0.0
    %436 = vmatpush1.msra.mxu0 0.0
    %437 = vmatprep.subr.mxu0 0.0
    %438 = vmatpush1.msra.mxu0 0.0
    %439 = vmatprep.subr.mxu0 0.0
    %440 = vmatpush1.msra.mxu0 0.0
    %441 = vmatprep.subr.mxu0 0.0
    %442 = vmatpush1.msra.mxu0 0.0
    %443 = vmatprep.subr.mxu0 0.0
    %444 = vmatpush1.msra.mxu0 0.0
    %445 = vmatprep.subr.mxu0 0.0
    %446 = vmatpush1.msra.mxu0 0.0
    %447 = vmatprep.subr.mxu0 0.0
    %448 = vmatpush1.msra.mxu0 0.0
    %449 = vmatprep.subr.mxu0 0.0
    %450 = vmatpush1.msra.mxu0 0.0
    %451 = vmatprep.subr.mxu0 0.0
    %452 = vmatpush1.msra.mxu0 0.0
    %453 = vmatprep.subr.mxu0 0.0
    %454 = vmatpush1.msra.mxu0 0.0
    %455 = vmatprep.subr.mxu0 0.0
    %456 = vmatpush1.msra.mxu0 0.0
    %457 = vmatprep.subr.mxu0 0.0
    %458 = vmatpush1.msra.mxu0 0.0
    %459 = vmatprep.subr.mxu0 0.0
    %460 = vmatpush1.msra.mxu0 0.0
    %461 = vmatprep.subr.mxu0 0.0
    %462 = vmatpush1.msra.mxu0 0.0
    %463 = vmatprep.subr.mxu0 0.0
    %464 = vmatpush1.msra.mxu0 0.0
    %465 = vmatprep.subr.mxu0 0.0
    %466 = vmatpush1.msra.mxu0 0.0
    %467 = vmatprep.subr.mxu0 0.0
    %468 = vmatpush1.msra.mxu0 0.0
    %469 = vmatprep.mubr.f32.mxu0 0.0
    %470 = vmatmul.mubr.f32.gmra.mrb[0].mxu0 %v403
    %v471 = vpop.f32.mrb[0].mxu0
    %v472 = vadd.f32 0.0, %v471
    %v473 = vpop.f32.mrb[0].mxu0
    %474 = vdwg.mxu0
    %475 = vrot.lane.b32.xlu0 %v219, 64
    %v476 = vpop.permute.xlu0 %475
    %v479 = vsel %vm227, %v392, 0
    %481 = vmatprep.subr.mxu0 0.0
    %482 = vmatpush1.msra.mxu0 %v476
    %483 = vmatprep.subr.mxu0 0.0
    %484 = vmatpush1.msra.mxu0 0.0
    %485 = vmatprep.subr.mxu0 0.0
    %486 = vmatpush1.msra.mxu0 0.0
    %487 = vmatprep.subr.mxu0 0.0
    %488 = vmatpush1.msra.mxu0 0.0
    %489 = vmatprep.subr.mxu0 0.0
    %490 = vmatpush1.msra.mxu0 0.0
    %491 = vmatprep.subr.mxu0 0.0
    %492 = vmatpush1.msra.mxu0 0.0
    %493 = vmatprep.subr.mxu0 0.0
    %494 = vmatpush1.msra.mxu0 0.0
    %495 = vmatprep.subr.mxu0 0.0
    %496 = vmatpush1.msra.mxu0 0.0
    %497 = vmatprep.subr.mxu0 0.0
    %498 = vmatpush1.msra.mxu0 0.0
    %499 = vmatprep.subr.mxu0 0.0
    %500 = vmatpush1.msra.mxu0 0.0
    %501 = vmatprep.subr.mxu0 0.0
    %502 = vmatpush1.msra.mxu0 0.0
    %503 = vmatprep.subr.mxu0 0.0
    %504 = vmatpush1.msra.mxu0 0.0
    %505 = vmatprep.subr.mxu0 0.0
    %506 = vmatpush1.msra.mxu0 0.0
    %507 = vmatprep.subr.mxu0 0.0
    %508 = vmatpush1.msra.mxu0 0.0
    %509 = vmatprep.subr.mxu0 0.0
    %510 = vmatpush1.msra.mxu0 0.0
    %511 = vmatprep.subr.mxu0 0.0
    %512 = vmatpush1.msra.mxu0 0.0
    %513 = vmatprep.subr.mxu0 0.0
    %514 = vmatpush1.msra.mxu0 0.0
    %515 = vmatprep.subr.mxu0 0.0
    %516 = vmatpush1.msra.mxu0 0.0
    %517 = vmatprep.subr.mxu0 0.0
    %518 = vmatpush1.msra.mxu0 0.0
    %519 = vmatprep.subr.mxu0 0.0
    %520 = vmatpush1.msra.mxu0 0.0
    %521 = vmatprep.subr.mxu0 0.0
    %522 = vmatpush1.msra.mxu0 0.0
    %523 = vmatprep.subr.mxu0 0.0
    %524 = vmatpush1.msra.mxu0 0.0
    %525 = vmatprep.subr.mxu0 0.0
    %526 = vmatpush1.msra.mxu0 0.0
    %527 = vmatprep.subr.mxu0 0.0
    %528 = vmatpush1.msra.mxu0 0.0
    %529 = vmatprep.subr.mxu0 0.0
    %530 = vmatpush1.msra.mxu0 0.0
    %531 = vmatprep.subr.mxu0 0.0
    %532 = vmatpush1.msra.mxu0 0.0
    %533 = vmatprep.subr.mxu0 0.0
    %534 = vmatpush1.msra.mxu0 0.0
    %535 = vmatprep.subr.mxu0 0.0
    %536 = vmatpush1.msra.mxu0 0.0
    %537 = vmatprep.subr.mxu0 0.0
    %538 = vmatpush1.msra.mxu0 0.0
    %539 = vmatprep.subr.mxu0 0.0
    %540 = vmatpush1.msra.mxu0 0.0
    %541 = vmatprep.subr.mxu0 0.0
    %542 = vmatpush1.msra.mxu0 0.0
    %543 = vmatprep.subr.mxu0 0.0
    %544 = vmatpush1.msra.mxu0 0.0
    %545 = vmatprep.mubr.f32.mxu0 0.0
    %546 = vmatmul.mubr.f32.gmra.mrb[0].mxu0 %v479
    %v547 = vpop.f32.mrb[0].mxu0
    %v548 = vadd.f32 0.0, %v547
    %v549 = vpop.f32.mrb[0].mxu0
    %550 = vdwg.mxu0
    %v551 = vrcp.pop %v395
    %v552 = vmul.f32 %v472, %v551
    %v553 = vrcp.pop %v398
    %v554 = vmul.f32 %v548, %v553
    %555 = vst.msk [vmem:[#allocation2] sm:$0xff] %vm227, %v552
    %556 = vst.msk [vmem:[#allocation2 + $0x8] sm:$0xff] %vm227, %v554
    %557 = vrot.lane.b32.xlu0 %v222, 120
    %v558 = vpop.permute.xlu0 %557
    %559 = vrot.lane.b32.xlu0 %v214, 88
    %v560 = vpop.permute.xlu0 %559
    %v561 = vsel %vm227, %v558, 0
    %v563 = vsel %vm227, %v560, 0
    %565 = vmatprep.subr.mxu0 0.0
    %566 = vmatpush1.xpose.msra.mxu0 %v563
    %567 = vmatprep.subr.mxu0 0.0
    %568 = vmatpush1.xpose.msra.mxu0 0.0
    %569 = vmatprep.subr.mxu0 0.0
    %570 = vmatpush1.xpose.msra.mxu0 0.0
    %571 = vmatprep.subr.mxu0 0.0
    %572 = vmatpush1.xpose.msra.mxu0 0.0
    %573 = vmatprep.subr.mxu0 0.0
    %574 = vmatpush1.xpose.msra.mxu0 0.0
    %575 = vmatprep.subr.mxu0 0.0
    %576 = vmatpush1.xpose.msra.mxu0 0.0
    %577 = vmatprep.subr.mxu0 0.0
    %578 = vmatpush1.xpose.msra.mxu0 0.0
    %579 = vmatprep.subr.mxu0 0.0
    %580 = vmatpush1.xpose.msra.mxu0 0.0
    %581 = vmatprep.subr.mxu0 0.0
    %582 = vmatpush1.xpose.msra.mxu0 0.0
    %583 = vmatprep.subr.mxu0 0.0
    %584 = vmatpush1.xpose.msra.mxu0 0.0
    %585 = vmatprep.subr.mxu0 0.0
    %586 = vmatpush1.xpose.msra.mxu0 0.0
    %587 = vmatprep.subr.mxu0 0.0
    %588 = vmatpush1.xpose.msra.mxu0 0.0
    %589 = vmatprep.subr.mxu0 0.0
    %590 = vmatpush1.xpose.msra.mxu0 0.0
    %591 = vmatprep.subr.mxu0 0.0
    %592 = vmatpush1.xpose.msra.mxu0 0.0
    %593 = vmatprep.subr.mxu0 0.0
    %594 = vmatpush1.xpose.msra.mxu0 0.0
    %595 = vmatprep.subr.mxu0 0.0
    %596 = vmatpush1.xpose.msra.mxu0 0.0
    %597 = vmatprep.subr.mxu0 0.0
    %598 = vmatpush1.xpose.msra.mxu0 0.0
    %599 = vmatprep.subr.mxu0 0.0
    %600 = vmatpush1.xpose.msra.mxu0 0.0
    %601 = vmatprep.subr.mxu0 0.0
    %602 = vmatpush1.xpose.msra.mxu0 0.0
    %603 = vmatprep.subr.mxu0 0.0
    %604 = vmatpush1.xpose.msra.mxu0 0.0
    %605 = vmatprep.subr.mxu0 0.0
    %606 = vmatpush1.xpose.msra.mxu0 0.0
    %607 = vmatprep.subr.mxu0 0.0
    %608 = vmatpush1.xpose.msra.mxu0 0.0
    %609 = vmatprep.subr.mxu0 0.0
    %610 = vmatpush1.xpose.msra.mxu0 0.0
    %611 = vmatprep.subr.mxu0 0.0
    %612 = vmatpush1.xpose.msra.mxu0 0.0
    %613 = vmatprep.subr.mxu0 0.0
    %614 = vmatpush1.xpose.msra.mxu0 0.0
    %615 = vmatprep.subr.mxu0 0.0
    %616 = vmatpush1.xpose.msra.mxu0 0.0
    %617 = vmatprep.subr.mxu0 0.0
    %618 = vmatpush1.xpose.msra.mxu0 0.0
    %619 = vmatprep.subr.mxu0 0.0
    %620 = vmatpush1.xpose.msra.mxu0 0.0
    %621 = vmatprep.subr.mxu0 0.0
    %622 = vmatpush1.xpose.msra.mxu0 0.0
    %623 = vmatprep.subr.mxu0 0.0
    %624 = vmatpush1.xpose.msra.mxu0 0.0
    %625 = vmatprep.subr.mxu0 0.0
    %626 = vmatpush1.xpose.msra.mxu0 0.0
    %627 = vmatprep.subr.mxu0 0.0
    %628 = vmatpush1.xpose.msra.mxu0 0.0
    %629 = vmatprep.mubr.f32.mxu0 0.0
    %630 = vmatmul.mubr.f32.gmra.mrb[0].mxu0 %v561
    %v631 = vpop.f32.mrb[0].mxu0
    %v632 = vadd.f32 0.0, %v631
    %v633 = vpop.f32.mrb[0].mxu0
    %634 = vdwg.mxu0
    %635 = vrot.lane.b32.xlu0 %v223, 120
    %v636 = vpop.permute.xlu0 %635
    %637 = vrot.lane.b32.xlu0 %v219, 88
    %v638 = vpop.permute.xlu0 %637
    %v639 = vsel %vm227, %v636, 0
    %v641 = vsel %vm227, %v638, 0
    %643 = vmatprep.subr.mxu0 0.0
    %644 = vmatpush1.xpose.msra.mxu0 %v641
    %645 = vmatprep.subr.mxu0 0.0
    %646 = vmatpush1.xpose.msra.mxu0 0.0
    %647 = vmatprep.subr.mxu0 0.0
    %648 = vmatpush1.xpose.msra.mxu0 0.0
    %649 = vmatprep.subr.mxu0 0.0
    %650 = vmatpush1.xpose.msra.mxu0 0.0
    %651 = vmatprep.subr.mxu0 0.0
    %652 = vmatpush1.xpose.msra.mxu0 0.0
    %653 = vmatprep.subr.mxu0 0.0
    %654 = vmatpush1.xpose.msra.mxu0 0.0
    %655 = vmatprep.subr.mxu0 0.0
    %656 = vmatpush1.xpose.msra.mxu0 0.0
    %657 = vmatprep.subr.mxu0 0.0
    %658 = vmatpush1.xpose.msra.mxu0 0.0
    %659 = vmatprep.subr.mxu0 0.0
    %660 = vmatpush1.xpose.msra.mxu0 0.0
    %661 = vmatprep.subr.mxu0 0.0
    %662 = vmatpush1.xpose.msra.mxu0 0.0
    %663 = vmatprep.subr.mxu0 0.0
    %664 = vmatpush1.xpose.msra.mxu0 0.0
    %665 = vmatprep.subr.mxu0 0.0
    %666 = vmatpush1.xpose.msra.mxu0 0.0
    %667 = vmatprep.subr.mxu0 0.0
    %668 = vmatpush1.xpose.msra.mxu0 0.0
    %669 = vmatprep.subr.mxu0 0.0
    %670 = vmatpush1.xpose.msra.mxu0 0.0
    %671 = vmatprep.subr.mxu0 0.0
    %672 = vmatpush1.xpose.msra.mxu0 0.0
    %673 = vmatprep.subr.mxu0 0.0
    %674 = vmatpush1.xpose.msra.mxu0 0.0
    %675 = vmatprep.subr.mxu0 0.0
    %676 = vmatpush1.xpose.msra.mxu0 0.0
    %677 = vmatprep.subr.mxu0 0.0
    %678 = vmatpush1.xpose.msra.mxu0 0.0
    %679 = vmatprep.subr.mxu0 0.0
    %680 = vmatpush1.xpose.msra.mxu0 0.0
    %681 = vmatprep.subr.mxu0 0.0
    %682 = vmatpush1.xpose.msra.mxu0 0.0
    %683 = vmatprep.subr.mxu0 0.0
    %684 = vmatpush1.xpose.msra.mxu0 0.0
    %685 = vmatprep.subr.mxu0 0.0
    %686 = vmatpush1.xpose.msra.mxu0 0.0
    %687 = vmatprep.subr.mxu0 0.0
    %688 = vmatpush1.xpose.msra.mxu0 0.0
    %689 = vmatprep.subr.mxu0 0.0
    %690 = vmatpush1.xpose.msra.mxu0 0.0
    %691 = vmatprep.subr.mxu0 0.0
    %692 = vmatpush1.xpose.msra.mxu0 0.0
    %693 = vmatprep.subr.mxu0 0.0
    %694 = vmatpush1.xpose.msra.mxu0 0.0
    %695 = vmatprep.subr.mxu0 0.0
    %696 = vmatpush1.xpose.msra.mxu0 0.0
    %697 = vmatprep.subr.mxu0 0.0
    %698 = vmatpush1.xpose.msra.mxu0 0.0
    %699 = vmatprep.subr.mxu0 0.0
    %700 = vmatpush1.xpose.msra.mxu0 0.0
    %701 = vmatprep.subr.mxu0 0.0
    %702 = vmatpush1.xpose.msra.mxu0 0.0
    %703 = vmatprep.subr.mxu0 0.0
    %704 = vmatpush1.xpose.msra.mxu0 0.0
    %705 = vmatprep.subr.mxu0 0.0
    %706 = vmatpush1.xpose.msra.mxu0 0.0
    %707 = vmatprep.mubr.f32.mxu0 0.0
    %708 = vmatmul.mubr.f32.gmra.mrb[0].mxu0 %v639
    %v709 = vpop.f32.mrb[0].mxu0
    %v710 = vadd.f32 0.0, %v709
    %v711 = vpop.f32.mrb[0].mxu0
    %712 = vdwg.mxu0
    %v713 = vsel %vm227, %v632, -inf
    %714 = vmax.xlane.f32.xlu0 %v713
    %v715 = vpop.xlane.xlu0 %714
    %v716 = vsel %vm227, %v710, -inf
    %717 = vmax.xlane.f32.xlu0 %v716
    %v718 = vpop.xlane.xlu0 %717
    %v719 = vsub.f32 %v632, %v715
    %v720 = vsub.f32 %v710, %v718
    %v721 = vmul.f32 %v719, 1.442695
    %v722 = vpow.pop %v721
    %v723 = vmul.f32 %v720, 1.442695
    %v724 = vpow.pop %v723
    %v725 = vsel %vm227, %v722, 0.0
    %726 = vadd.xlane.f32.xlu0 %v725
    %v727 = vpop.xlane.xlu0 %726
    %v728 = vsel %vm227, %v724, 0.0
    %729 = vadd.xlane.f32.xlu0 %v728
    %v730 = vpop.xlane.xlu0 %729
    %731 = vrot.lane.b32.xlu0 %v214, 56
    %v732 = vpop.permute.xlu0 %731
    %v735 = vsel %vm227, %v722, 0
    %737 = vmatprep.subr.mxu0 0.0
    %738 = vmatpush1.msra.mxu0 %v732
    %739 = vmatprep.subr.mxu0 0.0
    %740 = vmatpush1.msra.mxu0 0.0
    %741 = vmatprep.subr.mxu0 0.0
    %742 = vmatpush1.msra.mxu0 0.0
    %743 = vmatprep.subr.mxu0 0.0
    %744 = vmatpush1.msra.mxu0 0.0
    %745 = vmatprep.subr.mxu0 0.0
    %746 = vmatpush1.msra.mxu0 0.0
    %747 = vmatprep.subr.mxu0 0.0
    %748 = vmatpush1.msra.mxu0 0.0
    %749 = vmatprep.subr.mxu0 0.0
    %750 = vmatpush1.msra.mxu0 0.0
    %751 = vmatprep.subr.mxu0 0.0
    %752 = vmatpush1.msra.mxu0 0.0
    %753 = vmatprep.subr.mxu0 0.0
    %754 = vmatpush1.msra.mxu0 0.0
    %755 = vmatprep.subr.mxu0 0.0
    %756 = vmatpush1.msra.mxu0 0.0
    %757 = vmatprep.subr.mxu0 0.0
    %758 = vmatpush1.msra.mxu0 0.0
    %759 = vmatprep.subr.mxu0 0.0
    %760 = vmatpush1.msra.mxu0 0.0
    %761 = vmatprep.subr.mxu0 0.0
    %762 = vmatpush1.msra.mxu0 0.0
    %763 = vmatprep.subr.mxu0 0.0
    %764 = vmatpush1.msra.mxu0 0.0
    %765 = vmatprep.subr.mxu0 0.0
    %766 = vmatpush1.msra.mxu0 0.0
    %767 = vmatprep.subr.mxu0 0.0
    %768 = vmatpush1.msra.mxu0 0.0
    %769 = vmatprep.subr.mxu0 0.0
    %770 = vmatpush1.msra.mxu0 0.0
    %771 = vmatprep.subr.mxu0 0.0
    %772 = vmatpush1.msra.mxu0 0.0
    %773 = vmatprep.subr.mxu0 0.0
    %774 = vmatpush1.msra.mxu0 0.0
    %775 = vmatprep.subr.mxu0 0.0
    %776 = vmatpush1.msra.mxu0 0.0
    %777 = vmatprep.subr.mxu0 0.0
    %778 = vmatpush1.msra.mxu0 0.0
    %779 = vmatprep.subr.mxu0 0.0
    %780 = vmatpush1.msra.mxu0 0.0
    %781 = vmatprep.subr.mxu0 0.0
    %782 = vmatpush1.msra.mxu0 0.0
    %783 = vmatprep.subr.mxu0 0.0
    %784 = vmatpush1.msra.mxu0 0.0
    %785 = vmatprep.subr.mxu0 0.0
    %786 = vmatpush1.msra.mxu0 0.0
    %787 = vmatprep.subr.mxu0 0.0
    %788 = vmatpush1.msra.mxu0 0.0
    %789 = vmatprep.subr.mxu0 0.0
    %790 = vmatpush1.msra.mxu0 0.0
    %791 = vmatprep.subr.mxu0 0.0
    %792 = vmatpush1.msra.mxu0 0.0
    %793 = vmatprep.subr.mxu0 0.0
    %794 = vmatpush1.msra.mxu0 0.0
    %795 = vmatprep.subr.mxu0 0.0
    %796 = vmatpush1.msra.mxu0 0.0
    %797 = vmatprep.subr.mxu0 0.0
    %798 = vmatpush1.msra.mxu0 0.0
    %799 = vmatprep.subr.mxu0 0.0
    %800 = vmatpush1.msra.mxu0 0.0
    %801 = vmatprep.mubr.f32.mxu0 0.0
    %802 = vmatmul.mubr.f32.gmra.mrb[0].mxu0 %v735
    %v803 = vpop.f32.mrb[0].mxu0
    %v804 = vadd.f32 0.0, %v803
    %v805 = vpop.f32.mrb[0].mxu0
    %806 = vdwg.mxu0
    %807 = vrot.lane.b32.xlu0 %v219, 56
    %v808 = vpop.permute.xlu0 %807
    %v811 = vsel %vm227, %v724, 0
    %813 = vmatprep.subr.mxu0 0.0
    %814 = vmatpush1.msra.mxu0 %v808
    %815 = vmatprep.subr.mxu0 0.0
    %816 = vmatpush1.msra.mxu0 0.0
    %817 = vmatprep.subr.mxu0 0.0
    %818 = vmatpush1.msra.mxu0 0.0
    %819 = vmatprep.subr.mxu0 0.0
    %820 = vmatpush1.msra.mxu0 0.0
    %821 = vmatprep.subr.mxu0 0.0
    %822 = vmatpush1.msra.mxu0 0.0
    %823 = vmatprep.subr.mxu0 0.0
    %824 = vmatpush1.msra.mxu0 0.0
    %825 = vmatprep.subr.mxu0 0.0
    %826 = vmatpush1.msra.mxu0 0.0
    %827 = vmatprep.subr.mxu0 0.0
    %828 = vmatpush1.msra.mxu0 0.0
    %829 = vmatprep.subr.mxu0 0.0
    %830 = vmatpush1.msra.mxu0 0.0
    %831 = vmatprep.subr.mxu0 0.0
    %832 = vmatpush1.msra.mxu0 0.0
    %833 = vmatprep.subr.mxu0 0.0
    %834 = vmatpush1.msra.mxu0 0.0
    %835 = vmatprep.subr.mxu0 0.0
    %836 = vmatpush1.msra.mxu0 0.0
    %837 = vmatprep.subr.mxu0 0.0
    %838 = vmatpush1.msra.mxu0 0.0
    %839 = vmatprep.subr.mxu0 0.0
    %840 = vmatpush1.msra.mxu0 0.0
    %841 = vmatprep.subr.mxu0 0.0
    %842 = vmatpush1.msra.mxu0 0.0
    %843 = vmatprep.subr.mxu0 0.0
    %844 = vmatpush1.msra.mxu0 0.0
    %845 = vmatprep.subr.mxu0 0.0
    %846 = vmatpush1.msra.mxu0 0.0
    %847 = vmatprep.subr.mxu0 0.0
    %848 = vmatpush1.msra.mxu0 0.0
    %849 = vmatprep.subr.mxu0 0.0
    %850 = vmatpush1.msra.mxu0 0.0
    %851 = vmatprep.subr.mxu0 0.0
    %852 = vmatpush1.msra.mxu0 0.0
    %853 = vmatprep.subr.mxu0 0.0
    %854 = vmatpush1.msra.mxu0 0.0
    %855 = vmatprep.subr.mxu0 0.0
    %856 = vmatpush1.msra.mxu0 0.0
    %857 = vmatprep.subr.mxu0 0.0
    %858 = vmatpush1.msra.mxu0 0.0
    %859 = vmatprep.subr.mxu0 0.0
    %860 = vmatpush1.msra.mxu0 0.0
    %861 = vmatprep.subr.mxu0 0.0
    %862 = vmatpush1.msra.mxu0 0.0
    %863 = vmatprep.subr.mxu0 0.0
    %864 = vmatpush1.msra.mxu0 0.0
    %865 = vmatprep.subr.mxu0 0.0
    %866 = vmatpush1.msra.mxu0 0.0
    %867 = vmatprep.subr.mxu0 0.0
    %868 = vmatpush1.msra.mxu0 0.0
    %869 = vmatprep.subr.mxu0 0.0
    %870 = vmatpush1.msra.mxu0 0.0
    %871 = vmatprep.subr.mxu0 0.0
    %872 = vmatpush1.msra.mxu0 0.0
    %873 = vmatprep.subr.mxu0 0.0
    %874 = vmatpush1.msra.mxu0 0.0
    %875 = vmatprep.subr.mxu0 0.0
    %876 = vmatpush1.msra.mxu0 0.0
    %877 = vmatprep.mubr.f32.mxu0 0.0
    %878 = vmatmul.mubr.f32.gmra.mrb[0].mxu0 %v811
    %v879 = vpop.f32.mrb[0].mxu0
    %v880 = vadd.f32 0.0, %v879
    %v881 = vpop.f32.mrb[0].mxu0
    %882 = vdwg.mxu0
    %v883 = vrcp.pop %v727
    %v884 = vmul.f32 %v804, %v883
    %v885 = vrcp.pop %v730
    %v886 = vmul.f32 %v880, %v885
    %889 = vrot.lane.b32.xlu0 %v884, 8
    %v890 = vpop.permute.xlu0 %889
    %891 = vrot.lane.b32.xlu0 %v886, 8
    %v892 = vpop.permute.xlu0 %891
    %vm895 = vcmask 130112
    %896 = vst.msk [vmem:[#allocation2] sm:$0xff] %vm895, %v890
    %897 = vst.msk [vmem:[#allocation2 + $0x8] sm:$0xff] %vm895, %v892
    %898 = vrot.lane.b32.xlu0 %v222, 112
    %v899 = vpop.permute.xlu0 %898
    %900 = vrot.lane.b32.xlu0 %v214, 80
    %v901 = vpop.permute.xlu0 %900
    %v902 = vsel %vm227, %v899, 0
    %v904 = vsel %vm227, %v901, 0
    %906 = vmatprep.subr.mxu0 0.0
    %907 = vmatpush1.xpose.msra.mxu0 %v904
    %908 = vmatprep.subr.mxu0 0.0
    %909 = vmatpush1.xpose.msra.mxu0 0.0
    %910 = vmatprep.subr.mxu0 0.0
    %911 = vmatpush1.xpose.msra.mxu0 0.0
    %912 = vmatprep.subr.mxu0 0.0
    %913 = vmatpush1.xpose.msra.mxu0 0.0
    %914 = vmatprep.subr.mxu0 0.0
    %915 = vmatpush1.xpose.msra.mxu0 0.0
    %916 = vmatprep.subr.mxu0 0.0
    %917 = vmatpush1.xpose.msra.mxu0 0.0
    %918 = vmatprep.subr.mxu0 0.0
    %919 = vmatpush1.xpose.msra.mxu0 0.0
    %920 = vmatprep.subr.mxu0 0.0
    %921 = vmatpush1.xpose.msra.mxu0 0.0
    %922 = vmatprep.subr.mxu0 0.0
    %923 = vmatpush1.xpose.msra.mxu0 0.0
    %924 = vmatprep.subr.mxu0 0.0
    %925 = vmatpush1.xpose.msra.mxu0 0.0
    %926 = vmatprep.subr.mxu0 0.0
    %927 = vmatpush1.xpose.msra.mxu0 0.0
    %928 = vmatprep.subr.mxu0 0.0
    %929 = vmatpush1.xpose.msra.mxu0 0.0
    %930 = vmatprep.subr.mxu0 0.0
    %931 = vmatpush1.xpose.msra.mxu0 0.0
    %932 = vmatprep.subr.mxu0 0.0
    %933 = vmatpush1.xpose.msra.mxu0 0.0
    %934 = vmatprep.subr.mxu0 0.0
    %935 = vmatpush1.xpose.msra.mxu0 0.0
    %936 = vmatprep.subr.mxu0 0.0
    %937 = vmatpush1.xpose.msra.mxu0 0.0
    %938 = vmatprep.subr.mxu0 0.0
    %939 = vmatpush1.xpose.msra.mxu0 0.0
    %940 = vmatprep.subr.mxu0 0.0
    %941 = vmatpush1.xpose.msra.mxu0 0.0
    %942 = vmatprep.subr.mxu0 0.0
    %943 = vmatpush1.xpose.msra.mxu0 0.0
    %944 = vmatprep.subr.mxu0 0.0
    %945 = vmatpush1.xpose.msra.mxu0 0.0
    %946 = vmatprep.subr.mxu0 0.0
    %947 = vmatpush1.xpose.msra.mxu0 0.0
    %948 = vmatprep.subr.mxu0 0.0
    %949 = vmatpush1.xpose.msra.mxu0 0.0
    %950 = vmatprep.subr.mxu0 0.0
    %951 = vmatpush1.xpose.msra.mxu0 0.0
    %952 = vmatprep.subr.mxu0 0.0
    %953 = vmatpush1.xpose.msra.mxu0 0.0
    %954 = vmatprep.subr.mxu0 0.0
    %955 = vmatpush1.xpose.msra.mxu0 0.0
    %956 = vmatprep.subr.mxu0 0.0
    %957 = vmatpush1.xpose.msra.mxu0 0.0
    %958 = vmatprep.subr.mxu0 0.0
    %959 = vmatpush1.xpose.msra.mxu0 0.0
    %960 = vmatprep.subr.mxu0 0.0
    %961 = vmatpush1.xpose.msra.mxu0 0.0
    %962 = vmatprep.subr.mxu0 0.0
    %963 = vmatpush1.xpose.msra.mxu0 0.0
    %964 = vmatprep.subr.mxu0 0.0
    %965 = vmatpush1.xpose.msra.mxu0 0.0
    %966 = vmatprep.subr.mxu0 0.0
    %967 = vmatpush1.xpose.msra.mxu0 0.0
    %968 = vmatprep.subr.mxu0 0.0
    %969 = vmatpush1.xpose.msra.mxu0 0.0
    %970 = vmatprep.mubr.f32.mxu0 0.0
    %971 = vmatmul.mubr.f32.gmra.mrb[0].mxu0 %v902
    %v972 = vpop.f32.mrb[0].mxu0
    %v973 = vadd.f32 0.0, %v972
    %v974 = vpop.f32.mrb[0].mxu0
    %975 = vdwg.mxu0
    %976 = vrot.lane.b32.xlu0 %v223, 112
    %v977 = vpop.permute.xlu0 %976
    %978 = vrot.lane.b32.xlu0 %v219, 80
    %v979 = vpop.permute.xlu0 %978
    %v980 = vsel %vm227, %v977, 0
    %v982 = vsel %vm227, %v979, 0
    %984 = vmatprep.subr.mxu0 0.0
    %985 = vmatpush1.xpose.msra.mxu0 %v982
    %986 = vmatprep.subr.mxu0 0.0
    %987 = vmatpush1.xpose.msra.mxu0 0.0
    %988 = vmatprep.subr.mxu0 0.0
    %989 = vmatpush1.xpose.msra.mxu0 0.0
    %990 = vmatprep.subr.mxu0 0.0
    %991 = vmatpush1.xpose.msra.mxu0 0.0
    %992 = vmatprep.subr.mxu0 0.0
    %993 = vmatpush1.xpose.msra.mxu0 0.0
    %994 = vmatprep.subr.mxu0 0.0
    %995 = vmatpush1.xpose.msra.mxu0 0.0
    %996 = vmatprep.subr.mxu0 0.0
    %997 = vmatpush1.xpose.msra.mxu0 0.0
    %998 = vmatprep.subr.mxu0 0.0
    %999 = vmatpush1.xpose.msra.mxu0 0.0
    %1000 = vmatprep.subr.mxu0 0.0
    %1001 = vmatpush1.xpose.msra.mxu0 0.0
    %1002 = vmatprep.subr.mxu0 0.0
    %1003 = vmatpush1.xpose.msra.mxu0 0.0
    %1004 = vmatprep.subr.mxu0 0.0
    %1005 = vmatpush1.xpose.msra.mxu0 0.0
    %1006 = vmatprep.subr.mxu0 0.0
    %1007 = vmatpush1.xpose.msra.mxu0 0.0
    %1008 = vmatprep.subr.mxu0 0.0
    %1009 = vmatpush1.xpose.msra.mxu0 0.0
    %1010 = vmatprep.subr.mxu0 0.0
    %1011 = vmatpush1.xpose.msra.mxu0 0.0
    %1012 = vmatprep.subr.mxu0 0.0
    %1013 = vmatpush1.xpose.msra.mxu0 0.0
    %1014 = vmatprep.subr.mxu0 0.0
    %1015 = vmatpush1.xpose.msra.mxu0 0.0
    %1016 = vmatprep.subr.mxu0 0.0
    %1017 = vmatpush1.xpose.msra.mxu0 0.0
    %1018 = vmatprep.subr.mxu0 0.0
    %1019 = vmatpush1.xpose.msra.mxu0 0.0
    %1020 = vmatprep.subr.mxu0 0.0
    %1021 = vmatpush1.xpose.msra.mxu0 0.0
    %1022 = vmatprep.subr.mxu0 0.0
    %1023 = vmatpush1.xpose.msra.mxu0 0.0
    %1024 = vmatprep.subr.mxu0 0.0
    %1025 = vmatpush1.xpose.msra.mxu0 0.0
    %1026 = vmatprep.subr.mxu0 0.0
    %1027 = vmatpush1.xpose.msra.mxu0 0.0
    %1028 = vmatprep.subr.mxu0 0.0
    %1029 = vmatpush1.xpose.msra.mxu0 0.0
    %1030 = vmatprep.subr.mxu0 0.0
    %1031 = vmatpush1.xpose.msra.mxu0 0.0
    %1032 = vmatprep.subr.mxu0 0.0
    %1033 = vmatpush1.xpose.msra.mxu0 0.0
    %1034 = vmatprep.subr.mxu0 0.0
    %1035 = vmatpush1.xpose.msra.mxu0 0.0
    %1036 = vmatprep.subr.mxu0 0.0
    %1037 = vmatpush1.xpose.msra.mxu0 0.0
    %1038 = vmatprep.subr.mxu0 0.0
    %1039 = vmatpush1.xpose.msra.mxu0 0.0
    %1040 = vmatprep.subr.mxu0 0.0
    %1041 = vmatpush1.xpose.msra.mxu0 0.0
    %1042 = vmatprep.subr.mxu0 0.0
    %1043 = vmatpush1.xpose.msra.mxu0 0.0
    %1044 = vmatprep.subr.mxu0 0.0
    %1045 = vmatpush1.xpose.msra.mxu0 0.0
    %1046 = vmatprep.subr.mxu0 0.0
    %1047 = vmatpush1.xpose.msra.mxu0 0.0
    %1048 = vmatprep.mubr.f32.mxu0 0.0
    %1049 = vmatmul.mubr.f32.gmra.mrb[0].mxu0 %v980
    %v1050 = vpop.f32.mrb[0].mxu0
    %v1051 = vadd.f32 0.0, %v1050
    %v1052 = vpop.f32.mrb[0].mxu0
    %1053 = vdwg.mxu0
    %v1054 = vsel %vm227, %v973, -inf
    %1055 = vmax.xlane.f32.xlu0 %v1054
    %v1056 = vpop.xlane.xlu0 %1055
    %v1057 = vsel %vm227, %v1051, -inf
    %1058 = vmax.xlane.f32.xlu0 %v1057
    %v1059 = vpop.xlane.xlu0 %1058
    %v1060 = vsub.f32 %v973, %v1056
    %v1061 = vsub.f32 %v1051, %v1059
    %v1062 = vmul.f32 %v1060, 1.442695
    %v1063 = vpow.pop %v1062
    %v1064 = vmul.f32 %v1061, 1.442695
    %v1065 = vpow.pop %v1064
    %v1066 = vsel %vm227, %v1063, 0.0
    %1067 = vadd.xlane.f32.xlu0 %v1066
    %v1068 = vpop.xlane.xlu0 %1067
    %v1069 = vsel %vm227, %v1065, 0.0
    %1070 = vadd.xlane.f32.xlu0 %v1069
    %v1071 = vpop.xlane.xlu0 %1070
    %1072 = vrot.lane.b32.xlu0 %v214, 48
    %v1073 = vpop.permute.xlu0 %1072
    %v1076 = vsel %vm227, %v1063, 0
    %1078 = vmatprep.subr.mxu0 0.0
    %1079 = vmatpush1.msra.mxu0 %v1073
    %1080 = vmatprep.subr.mxu0 0.0
    %1081 = vmatpush1.msra.mxu0 0.0
    %1082 = vmatprep.subr.mxu0 0.0
    %1083 = vmatpush1.msra.mxu0 0.0
    %1084 = vmatprep.subr.mxu0 0.0
    %1085 = vmatpush1.msra.mxu0 0.0
    %1086 = vmatprep.subr.mxu0 0.0
    %1087 = vmatpush1.msra.mxu0 0.0
    %1088 = vmatprep.subr.mxu0 0.0
    %1089 = vmatpush1.msra.mxu0 0.0
    %1090 = vmatprep.subr.mxu0 0.0
    %1091 = vmatpush1.msra.mxu0 0.0
    %1092 = vmatprep.subr.mxu0 0.0
    %1093 = vmatpush1.msra.mxu0 0.0
    %1094 = vmatprep.subr.mxu0 0.0
    %1095 = vmatpush1.msra.mxu0 0.0
    %1096 = vmatprep.subr.mxu0 0.0
    %1097 = vmatpush1.msra.mxu0 0.0
    %1098 = vmatprep.subr.mxu0 0.0
    %1099 = vmatpush1.msra.mxu0 0.0
    %1100 = vmatprep.subr.mxu0 0.0
    %1101 = vmatpush1.msra.mxu0 0.0
    %1102 = vmatprep.subr.mxu0 0.0
    %1103 = vmatpush1.msra.mxu0 0.0
    %1104 = vmatprep.subr.mxu0 0.0
    %1105 = vmatpush1.msra.mxu0 0.0
    %1106 = vmatprep.subr.mxu0 0.0
    %1107 = vmatpush1.msra.mxu0 0.0
    %1108 = vmatprep.subr.mxu0 0.0
    %1109 = vmatpush1.msra.mxu0 0.0
    %1110 = vmatprep.subr.mxu0 0.0
    %1111 = vmatpush1.msra.mxu0 0.0
    %1112 = vmatprep.subr.mxu0 0.0
    %1113 = vmatpush1.msra.mxu0 0.0
    %1114 = vmatprep.subr.mxu0 0.0
    %1115 = vmatpush1.msra.mxu0 0.0
    %1116 = vmatprep.subr.mxu0 0.0
    %1117 = vmatpush1.msra.mxu0 0.0
    %1118 = vmatprep.subr.mxu0 0.0
    %1119 = vmatpush1.msra.mxu0 0.0
    %1120 = vmatprep.subr.mxu0 0.0
    %1121 = vmatpush1.msra.mxu0 0.0
    %1122 = vmatprep.subr.mxu0 0.0
    %1123 = vmatpush1.msra.mxu0 0.0
    %1124 = vmatprep.subr.mxu0 0.0
    %1125 = vmatpush1.msra.mxu0 0.0
    %1126 = vmatprep.subr.mxu0 0.0
    %1127 = vmatpush1.msra.mxu0 0.0
    %1128 = vmatprep.subr.mxu0 0.0
    %1129 = vmatpush1.msra.mxu0 0.0
    %1130 = vmatprep.subr.mxu0 0.0
    %1131 = vmatpush1.msra.mxu0 0.0
    %1132 = vmatprep.subr.mxu0 0.0
    %1133 = vmatpush1.msra.mxu0 0.0
    %1134 = vmatprep.subr.mxu0 0.0
    %1135 = vmatpush1.msra.mxu0 0.0
    %1136 = vmatprep.subr.mxu0 0.0
    %1137 = vmatpush1.msra.mxu0 0.0
    %1138 = vmatprep.subr.mxu0 0.0
    %1139 = vmatpush1.msra.mxu0 0.0
    %1140 = vmatprep.subr.mxu0 0.0
    %1141 = vmatpush1.msra.mxu0 0.0
    %1142 = vmatprep.mubr.f32.mxu0 0.0
    %1143 = vmatmul.mubr.f32.gmra.mrb[0].mxu0 %v1076
    %v1144 = vpop.f32.mrb[0].mxu0
    %v1145 = vadd.f32 0.0, %v1144
    %v1146 = vpop.f32.mrb[0].mxu0
    %1147 = vdwg.mxu0
    %1148 = vrot.lane.b32.xlu0 %v219, 48
    %v1149 = vpop.permute.xlu0 %1148
    %v1152 = vsel %vm227, %v1065, 0
    %1154 = vmatprep.subr.mxu0 0.0
    %1155 = vmatpush1.msra.mxu0 %v1149
    %1156 = vmatprep.subr.mxu0 0.0
    %1157 = vmatpush1.msra.mxu0 0.0
    %1158 = vmatprep.subr.mxu0 0.0
    %1159 = vmatpush1.msra.mxu0 0.0
    %1160 = vmatprep.subr.mxu0 0.0
    %1161 = vmatpush1.msra.mxu0 0.0
    %1162 = vmatprep.subr.mxu0 0.0
    %1163 = vmatpush1.msra.mxu0 0.0
    %1164 = vmatprep.subr.mxu0 0.0
    %1165 = vmatpush1.msra.mxu0 0.0
    %1166 = vmatprep.subr.mxu0 0.0
    %1167 = vmatpush1.msra.mxu0 0.0
    %1168 = vmatprep.subr.mxu0 0.0
    %1169 = vmatpush1.msra.mxu0 0.0
    %1170 = vmatprep.subr.mxu0 0.0
    %1171 = vmatpush1.msra.mxu0 0.0
    %1172 = vmatprep.subr.mxu0 0.0
    %1173 = vmatpush1.msra.mxu0 0.0
    %1174 = vmatprep.subr.mxu0 0.0
    %1175 = vmatpush1.msra.mxu0 0.0
    %1176 = vmatprep.subr.mxu0 0.0
    %1177 = vmatpush1.msra.mxu0 0.0
    %1178 = vmatprep.subr.mxu0 0.0
    %1179 = vmatpush1.msra.mxu0 0.0
    %1180 = vmatprep.subr.mxu0 0.0
    %1181 = vmatpush1.msra.mxu0 0.0
    %1182 = vmatprep.subr.mxu0 0.0
    %1183 = vmatpush1.msra.mxu0 0.0
    %1184 = vmatprep.subr.mxu0 0.0
    %1185 = vmatpush1.msra.mxu0 0.0
    %1186 = vmatprep.subr.mxu0 0.0
    %1187 = vmatpush1.msra.mxu0 0.0
    %1188 = vmatprep.subr.mxu0 0.0
    %1189 = vmatpush1.msra.mxu0 0.0
    %1190 = vmatprep.subr.mxu0 0.0
    %1191 = vmatpush1.msra.mxu0 0.0
    %1192 = vmatprep.subr.mxu0 0.0
    %1193 = vmatpush1.msra.mxu0 0.0
    %1194 = vmatprep.subr.mxu0 0.0
    %1195 = vmatpush1.msra.mxu0 0.0
    %1196 = vmatprep.subr.mxu0 0.0
    %1197 = vmatpush1.msra.mxu0 0.0
    %1198 = vmatprep.subr.mxu0 0.0
    %1199 = vmatpush1.msra.mxu0 0.0
    %1200 = vmatprep.subr.mxu0 0.0
    %1201 = vmatpush1.msra.mxu0 0.0
    %1202 = vmatprep.subr.mxu0 0.0
    %1203 = vmatpush1.msra.mxu0 0.0
    %1204 = vmatprep.subr.mxu0 0.0
    %1205 = vmatpush1.msra.mxu0 0.0
    %1206 = vmatprep.subr.mxu0 0.0
    %1207 = vmatpush1.msra.mxu0 0.0
    %1208 = vmatprep.subr.mxu0 0.0
    %1209 = vmatpush1.msra.mxu0 0.0
    %1210 = vmatprep.subr.mxu0 0.0
    %1211 = vmatpush1.msra.mxu0 0.0
    %1212 = vmatprep.subr.mxu0 0.0
    %1213 = vmatpush1.msra.mxu0 0.0
    %1214 = vmatprep.subr.mxu0 0.0
    %1215 = vmatpush1.msra.mxu0 0.0
    %1216 = vmatprep.subr.mxu0 0.0
    %1217 = vmatpush1.msra.mxu0 0.0
    %1218 = vmatprep.mubr.f32.mxu0 0.0
    %1219 = vmatmul.mubr.f32.gmra.mrb[0].mxu0 %v1152
    %v1220 = vpop.f32.mrb[0].mxu0
    %v1221 = vadd.f32 0.0, %v1220
    %v1222 = vpop.f32.mrb[0].mxu0
    %1223 = vdwg.mxu0
    %v1224 = vrcp.pop %v1068
    %v1225 = vmul.f32 %v1145, %v1224
    %v1226 = vrcp.pop %v1071
    %v1227 = vmul.f32 %v1221, %v1226
    %1230 = vrot.lane.b32.xlu0 %v1225, 16
    %v1231 = vpop.permute.xlu0 %1230
    %1232 = vrot.lane.b32.xlu0 %v1227, 16
    %v1233 = vpop.permute.xlu0 %1232
    %vm1236 = vcmask 195712
    %1237 = vst.msk [vmem:[#allocation2] sm:$0xff] %vm1236, %v1231
    %1238 = vst.msk [vmem:[#allocation2 + $0x8] sm:$0xff] %vm1236, %v1233
    %1239 = vrot.lane.b32.xlu0 %v222, 104
    %v1240 = vpop.permute.xlu0 %1239
    %1241 = vrot.lane.b32.xlu0 %v214, 72
    %v1242 = vpop.permute.xlu0 %1241
    %v1243 = vsel %vm227, %v1240, 0
    %v1245 = vsel %vm227, %v1242, 0
    %1247 = vmatprep.subr.mxu0 0.0
    %1248 = vmatpush1.xpose.msra.mxu0 %v1245
    %1249 = vmatprep.subr.mxu0 0.0
    %1250 = vmatpush1.xpose.msra.mxu0 0.0
    %1251 = vmatprep.subr.mxu0 0.0
    %1252 = vmatpush1.xpose.msra.mxu0 0.0
    %1253 = vmatprep.subr.mxu0 0.0
    %1254 = vmatpush1.xpose.msra.mxu0 0.0
    %1255 = vmatprep.subr.mxu0 0.0
    %1256 = vmatpush1.xpose.msra.mxu0 0.0
    %1257 = vmatprep.subr.mxu0 0.0
    %1258 = vmatpush1.xpose.msra.mxu0 0.0
    %1259 = vmatprep.subr.mxu0 0.0
    %1260 = vmatpush1.xpose.msra.mxu0 0.0
    %1261 = vmatprep.subr.mxu0 0.0
    %1262 = vmatpush1.xpose.msra.mxu0 0.0
    %1263 = vmatprep.subr.mxu0 0.0
    %1264 = vmatpush1.xpose.msra.mxu0 0.0
    %1265 = vmatprep.subr.mxu0 0.0
    %1266 = vmatpush1.xpose.msra.mxu0 0.0
    %1267 = vmatprep.subr.mxu0 0.0
    %1268 = vmatpush1.xpose.msra.mxu0 0.0
    %1269 = vmatprep.subr.mxu0 0.0
    %1270 = vmatpush1.xpose.msra.mxu0 0.0
    %1271 = vmatprep.subr.mxu0 0.0
    %1272 = vmatpush1.xpose.msra.mxu0 0.0
    %1273 = vmatprep.subr.mxu0 0.0
    %1274 = vmatpush1.xpose.msra.mxu0 0.0
    %1275 = vmatprep.subr.mxu0 0.0
    %1276 = vmatpush1.xpose.msra.mxu0 0.0
    %1277 = vmatprep.subr.mxu0 0.0
    %1278 = vmatpush1.xpose.msra.mxu0 0.0
    %1279 = vmatprep.subr.mxu0 0.0
    %1280 = vmatpush1.xpose.msra.mxu0 0.0
    %1281 = vmatprep.subr.mxu0 0.0
    %1282 = vmatpush1.xpose.msra.mxu0 0.0
    %1283 = vmatprep.subr.mxu0 0.0
    %1284 = vmatpush1.xpose.msra.mxu0 0.0
    %1285 = vmatprep.subr.mxu0 0.0
    %1286 = vmatpush1.xpose.msra.mxu0 0.0
    %1287 = vmatprep.subr.mxu0 0.0
    %1288 = vmatpush1.xpose.msra.mxu0 0.0
    %1289 = vmatprep.subr.mxu0 0.0
    %1290 = vmatpush1.xpose.msra.mxu0 0.0
    %1291 = vmatprep.subr.mxu0 0.0
    %1292 = vmatpush1.xpose.msra.mxu0 0.0
    %1293 = vmatprep.subr.mxu0 0.0
    %1294 = vmatpush1.xpose.msra.mxu0 0.0
    %1295 = vmatprep.subr.mxu0 0.0
    %1296 = vmatpush1.xpose.msra.mxu0 0.0
    %1297 = vmatprep.subr.mxu0 0.0
    %1298 = vmatpush1.xpose.msra.mxu0 0.0
    %1299 = vmatprep.subr.mxu0 0.0
    %1300 = vmatpush1.xpose.msra.mxu0 0.0
    %1301 = vmatprep.subr.mxu0 0.0
    %1302 = vmatpush1.xpose.msra.mxu0 0.0
    %1303 = vmatprep.subr.mxu0 0.0
    %1304 = vmatpush1.xpose.msra.mxu0 0.0
    %1305 = vmatprep.subr.mxu0 0.0
    %1306 = vmatpush1.xpose.msra.mxu0 0.0
    %1307 = vmatprep.subr.mxu0 0.0
    %1308 = vmatpush1.xpose.msra.mxu0 0.0
    %1309 = vmatprep.subr.mxu0 0.0
    %1310 = vmatpush1.xpose.msra.mxu0 0.0
    %1311 = vmatprep.mubr.f32.mxu0 0.0
    %1312 = vmatmul.mubr.f32.gmra.mrb[0].mxu0 %v1243
    %v1313 = vpop.f32.mrb[0].mxu0
    %v1314 = vadd.f32 0.0, %v1313
    %v1315 = vpop.f32.mrb[0].mxu0
    %1316 = vdwg.mxu0
    %1317 = vrot.lane.b32.xlu0 %v223, 104
    %v1318 = vpop.permute.xlu0 %1317
    %1319 = vrot.lane.b32.xlu0 %v219, 72
    %v1320 = vpop.permute.xlu0 %1319
    %v1321 = vsel %vm227, %v1318, 0
    %v1323 = vsel %vm227, %v1320, 0
    %1325 = vmatprep.subr.mxu0 0.0
    %1326 = vmatpush1.xpose.msra.mxu0 %v1323
    %1327 = vmatprep.subr.mxu0 0.0
    %1328 = vmatpush1.xpose.msra.mxu0 0.0
    %1329 = vmatprep.subr.mxu0 0.0
    %1330 = vmatpush1.xpose.msra.mxu0 0.0
    %1331 = vmatprep.subr.mxu0 0.0
    %1332 = vmatpush1.xpose.msra.mxu0 0.0
    %1333 = vmatprep.subr.mxu0 0.0
    %1334 = vmatpush1.xpose.msra.mxu0 0.0
    %1335 = vmatprep.subr.mxu0 0.0
    %1336 = vmatpush1.xpose.msra.mxu0 0.0
    %1337 = vmatprep.subr.mxu0 0.0
    %1338 = vmatpush1.xpose.msra.mxu0 0.0
    %1339 = vmatprep.subr.mxu0 0.0
    %1340 = vmatpush1.xpose.msra.mxu0 0.0
    %1341 = vmatprep.subr.mxu0 0.0
    %1342 = vmatpush1.xpose.msra.mxu0 0.0
    %1343 = vmatprep.subr.mxu0 0.0
    %1344 = vmatpush1.xpose.msra.mxu0 0.0
    %1345 = vmatprep.subr.mxu0 0.0
    %1346 = vmatpush1.xpose.msra.mxu0 0.0
    %1347 = vmatprep.subr.mxu0 0.0
    %1348 = vmatpush1.xpose.msra.mxu0 0.0
    %1349 = vmatprep.subr.mxu0 0.0
    %1350 = vmatpush1.xpose.msra.mxu0 0.0
    %1351 = vmatprep.subr.mxu0 0.0
    %1352 = vmatpush1.xpose.msra.mxu0 0.0
    %1353 = vmatprep.subr.mxu0 0.0
    %1354 = vmatpush1.xpose.msra.mxu0 0.0
    %1355 = vmatprep.subr.mxu0 0.0
    %1356 = vmatpush1.xpose.msra.mxu0 0.0
    %1357 = vmatprep.subr.mxu0 0.0
    %1358 = vmatpush1.xpose.msra.mxu0 0.0
    %1359 = vmatprep.subr.mxu0 0.0
    %1360 = vmatpush1.xpose.msra.mxu0 0.0
    %1361 = vmatprep.subr.mxu0 0.0
    %1362 = vmatpush1.xpose.msra.mxu0 0.0
    %1363 = vmatprep.subr.mxu0 0.0
    %1364 = vmatpush1.xpose.msra.mxu0 0.0
    %1365 = vmatprep.subr.mxu0 0.0
    %1366 = vmatpush1.xpose.msra.mxu0 0.0
    %1367 = vmatprep.subr.mxu0 0.0
    %1368 = vmatpush1.xpose.msra.mxu0 0.0
    %1369 = vmatprep.subr.mxu0 0.0
    %1370 = vmatpush1.xpose.msra.mxu0 0.0
    %1371 = vmatprep.subr.mxu0 0.0
    %1372 = vmatpush1.xpose.msra.mxu0 0.0
    %1373 = vmatprep.subr.mxu0 0.0
    %1374 = vmatpush1.xpose.msra.mxu0 0.0
    %1375 = vmatprep.subr.mxu0 0.0
    %1376 = vmatpush1.xpose.msra.mxu0 0.0
    %1377 = vmatprep.subr.mxu0 0.0
    %1378 = vmatpush1.xpose.msra.mxu0 0.0
    %1379 = vmatprep.subr.mxu0 0.0
    %1380 = vmatpush1.xpose.msra.mxu0 0.0
    %1381 = vmatprep.subr.mxu0 0.0
    %1382 = vmatpush1.xpose.msra.mxu0 0.0
    %1383 = vmatprep.subr.mxu0 0.0
    %1384 = vmatpush1.xpose.msra.mxu0 0.0
    %1385 = vmatprep.subr.mxu0 0.0
    %1386 = vmatpush1.xpose.msra.mxu0 0.0
    %1387 = vmatprep.subr.mxu0 0.0
    %1388 = vmatpush1.xpose.msra.mxu0 0.0
    %1389 = vmatprep.mubr.f32.mxu0 0.0
    %1390 = vmatmul.mubr.f32.gmra.mrb[0].mxu0 %v1321
    %v1391 = vpop.f32.mrb[0].mxu0
    %v1392 = vadd.f32 0.0, %v1391
    %v1393 = vpop.f32.mrb[0].mxu0
    %1394 = vdwg.mxu0
    %v1395 = vsel %vm227, %v1314, -inf
    %1396 = vmax.xlane.f32.xlu0 %v1395
    %v1397 = vpop.xlane.xlu0 %1396
    %v1398 = vsel %vm227, %v1392, -inf
    %1399 = vmax.xlane.f32.xlu0 %v1398
    %v1400 = vpop.xlane.xlu0 %1399
    %v1401 = vsub.f32 %v1314, %v1397
    %v1402 = vsub.f32 %v1392, %v1400
    %v1403 = vmul.f32 %v1401, 1.442695
    %v1404 = vpow.pop %v1403
    %v1405 = vmul.f32 %v1402, 1.442695
    %v1406 = vpow.pop %v1405
    %v1407 = vsel %vm227, %v1404, 0.0
    %1408 = vadd.xlane.f32.xlu0 %v1407
    %v1409 = vpop.xlane.xlu0 %1408
    %v1410 = vsel %vm227, %v1406, 0.0
    %1411 = vadd.xlane.f32.xlu0 %v1410
    %v1412 = vpop.xlane.xlu0 %1411
    %1413 = vrot.lane.b32.xlu0 %v214, 40
    %v1414 = vpop.permute.xlu0 %1413
    %v1417 = vsel %vm227, %v1404, 0
    %1419 = vmatprep.subr.mxu0 0.0
    %1420 = vmatpush1.msra.mxu0 %v1414
    %1421 = vmatprep.subr.mxu0 0.0
    %1422 = vmatpush1.msra.mxu0 0.0
    %1423 = vmatprep.subr.mxu0 0.0
    %1424 = vmatpush1.msra.mxu0 0.0
    %1425 = vmatprep.subr.mxu0 0.0
    %1426 = vmatpush1.msra.mxu0 0.0
    %1427 = vmatprep.subr.mxu0 0.0
    %1428 = vmatpush1.msra.mxu0 0.0
    %1429 = vmatprep.subr.mxu0 0.0
    %1430 = vmatpush1.msra.mxu0 0.0
    %1431 = vmatprep.subr.mxu0 0.0
    %1432 = vmatpush1.msra.mxu0 0.0
    %1433 = vmatprep.subr.mxu0 0.0
    %1434 = vmatpush1.msra.mxu0 0.0
    %1435 = vmatprep.subr.mxu0 0.0
    %1436 = vmatpush1.msra.mxu0 0.0
    %1437 = vmatprep.subr.mxu0 0.0
    %1438 = vmatpush1.msra.mxu0 0.0
    %1439 = vmatprep.subr.mxu0 0.0
    %1440 = vmatpush1.msra.mxu0 0.0
    %1441 = vmatprep.subr.mxu0 0.0
    %1442 = vmatpush1.msra.mxu0 0.0
    %1443 = vmatprep.subr.mxu0 0.0
    %1444 = vmatpush1.msra.mxu0 0.0
    %1445 = vmatprep.subr.mxu0 0.0
    %1446 = vmatpush1.msra.mxu0 0.0
    %1447 = vmatprep.subr.mxu0 0.0
    %1448 = vmatpush1.msra.mxu0 0.0
    %1449 = vmatprep.subr.mxu0 0.0
    %1450 = vmatpush1.msra.mxu0 0.0
    %1451 = vmatprep.subr.mxu0 0.0
    %1452 = vmatpush1.msra.mxu0 0.0
    %1453 = vmatprep.subr.mxu0 0.0
    %1454 = vmatpush1.msra.mxu0 0.0
    %1455 = vmatprep.subr.mxu0 0.0
    %1456 = vmatpush1.msra.mxu0 0.0
    %1457 = vmatprep.subr.mxu0 0.0
    %1458 = vmatpush1.msra.mxu0 0.0
    %1459 = vmatprep.subr.mxu0 0.0
    %1460 = vmatpush1.msra.mxu0 0.0
    %1461 = vmatprep.subr.mxu0 0.0
    %1462 = vmatpush1.msra.mxu0 0.0
    %1463 = vmatprep.subr.mxu0 0.0
    %1464 = vmatpush1.msra.mxu0 0.0
    %1465 = vmatprep.subr.mxu0 0.0
    %1466 = vmatpush1.msra.mxu0 0.0
    %1467 = vmatprep.subr.mxu0 0.0
    %1468 = vmatpush1.msra.mxu0 0.0
    %1469 = vmatprep.subr.mxu0 0.0
    %1470 = vmatpush1.msra.mxu0 0.0
    %1471 = vmatprep.subr.mxu0 0.0
    %1472 = vmatpush1.msra.mxu0 0.0
    %1473 = vmatprep.subr.mxu0 0.0
    %1474 = vmatpush1.msra.mxu0 0.0
    %1475 = vmatprep.subr.mxu0 0.0
    %1476 = vmatpush1.msra.mxu0 0.0
    %1477 = vmatprep.subr.mxu0 0.0
    %1478 = vmatpush1.msra.mxu0 0.0
    %1479 = vmatprep.subr.mxu0 0.0
    %1480 = vmatpush1.msra.mxu0 0.0
    %1481 = vmatprep.subr.mxu0 0.0
    %1482 = vmatpush1.msra.mxu0 0.0
    %1483 = vmatprep.mubr.f32.mxu0 0.0
    %1484 = vmatmul.mubr.f32.gmra.mrb[0].mxu0 %v1417
    %v1485 = vpop.f32.mrb[0].mxu0
    %v1486 = vadd.f32 0.0, %v1485
    %v1487 = vpop.f32.mrb[0].mxu0
    %1488 = vdwg.mxu0
    %1489 = vrot.lane.b32.xlu0 %v219, 40
    %v1490 = vpop.permute.xlu0 %1489
    %v1493 = vsel %vm227, %v1406, 0
    %1495 = vmatprep.subr.mxu0 0.0
    %1496 = vmatpush1.msra.mxu0 %v1490
    %1497 = vmatprep.subr.mxu0 0.0
    %1498 = vmatpush1.msra.mxu0 0.0
    %1499 = vmatprep.subr.mxu0 0.0
    %1500 = vmatpush1.msra.mxu0 0.0
    %1501 = vmatprep.subr.mxu0 0.0
    %1502 = vmatpush1.msra.mxu0 0.0
    %1503 = vmatprep.subr.mxu0 0.0
    %1504 = vmatpush1.msra.mxu0 0.0
    %1505 = vmatprep.subr.mxu0 0.0
    %1506 = vmatpush1.msra.mxu0 0.0
    %1507 = vmatprep.subr.mxu0 0.0
    %1508 = vmatpush1.msra.mxu0 0.0
    %1509 = vmatprep.subr.mxu0 0.0
    %1510 = vmatpush1.msra.mxu0 0.0
    %1511 = vmatprep.subr.mxu0 0.0
    %1512 = vmatpush1.msra.mxu0 0.0
    %1513 = vmatprep.subr.mxu0 0.0
    %1514 = vmatpush1.msra.mxu0 0.0
    %1515 = vmatprep.subr.mxu0 0.0
    %1516 = vmatpush1.msra.mxu0 0.0
    %1517 = vmatprep.subr.mxu0 0.0
    %1518 = vmatpush1.msra.mxu0 0.0
    %1519 = vmatprep.subr.mxu0 0.0
    %1520 = vmatpush1.msra.mxu0 0.0
    %1521 = vmatprep.subr.mxu0 0.0
    %1522 = vmatpush1.msra.mxu0 0.0
    %1523 = vmatprep.subr.mxu0 0.0
    %1524 = vmatpush1.msra.mxu0 0.0
    %1525 = vmatprep.subr.mxu0 0.0
    %1526 = vmatpush1.msra.mxu0 0.0
    %1527 = vmatprep.subr.mxu0 0.0
    %1528 = vmatpush1.msra.mxu0 0.0
    %1529 = vmatprep.subr.mxu0 0.0
    %1530 = vmatpush1.msra.mxu0 0.0
    %1531 = vmatprep.subr.mxu0 0.0
    %1532 = vmatpush1.msra.mxu0 0.0
    %1533 = vmatprep.subr.mxu0 0.0
    %1534 = vmatpush1.msra.mxu0 0.0
    %1535 = vmatprep.subr.mxu0 0.0
    %1536 = vmatpush1.msra.mxu0 0.0
    %1537 = vmatprep.subr.mxu0 0.0
    %1538 = vmatpush1.msra.mxu0 0.0
    %1539 = vmatprep.subr.mxu0 0.0
    %1540 = vmatpush1.msra.mxu0 0.0
    %1541 = vmatprep.subr.mxu0 0.0
    %1542 = vmatpush1.msra.mxu0 0.0
    %1543 = vmatprep.subr.mxu0 0.0
    %1544 = vmatpush1.msra.mxu0 0.0
    %1545 = vmatprep.subr.mxu0 0.0
    %1546 = vmatpush1.msra.mxu0 0.0
    %1547 = vmatprep.subr.mxu0 0.0
    %1548 = vmatpush1.msra.mxu0 0.0
    %1549 = vmatprep.subr.mxu0 0.0
    %1550 = vmatpush1.msra.mxu0 0.0
    %1551 = vmatprep.subr.mxu0 0.0
    %1552 = vmatpush1.msra.mxu0 0.0
    %1553 = vmatprep.subr.mxu0 0.0
    %1554 = vmatpush1.msra.mxu0 0.0
    %1555 = vmatprep.subr.mxu0 0.0
    %1556 = vmatpush1.msra.mxu0 0.0
    %1557 = vmatprep.subr.mxu0 0.0
    %1558 = vmatpush1.msra.mxu0 0.0
    %1559 = vmatprep.mubr.f32.mxu0 0.0
    %1560 = vmatmul.mubr.f32.gmra.mrb[0].mxu0 %v1493
    %v1561 = vpop.f32.mrb[0].mxu0
    %v1562 = vadd.f32 0.0, %v1561
    %v1563 = vpop.f32.mrb[0].mxu0
    %1564 = vdwg.mxu0
    %v1565 = vrcp.pop %v1409
    %v1566 = vmul.f32 %v1486, %v1565
    %v1567 = vrcp.pop %v1412
    %v1568 = vmul.f32 %v1562, %v1567
    %1571 = vrot.lane.b32.xlu0 %v1566, 24
    %v1572 = vpop.permute.xlu0 %1571
    %1573 = vrot.lane.b32.xlu0 %v1568, 24
    %v1574 = vpop.permute.xlu0 %1573
    %vm1577 = vcmask 261312
    %1578 = vst.msk [vmem:[#allocation2] sm:$0xff] %vm1577, %v1572
    %1579 = vst.msk [vmem:[#allocation2 + $0x8] sm:$0xff] %vm1577, %v1574
    %v1580 = vld [vmem:[#allocation2] sm:$0xff]
    %v1581 = vld [vmem:[#allocation2 + $0x8] sm:$0xff]
    %v1582 = vld [vmem:[%s4] sm:$0xff]
    %v1583 = vld [vmem:[%s4 + $0x8] sm:$0xff]
    %v1584 = vld [vmem:[%s4 + $0x10] sm:$0xff]
    %v1585 = vld [vmem:[%s4 + $0x18] sm:$0xff]
    %v1586 = vld [vmem:[%s5] sm:$0x1]
    %v1588 = vlaneseq
    %v1589 = vshrl.u32 %v1588, 7
    %v1590 = vsub.s32 0, %v1589
    %v1591 = vrot.slane %v1586, %v1590
    %v1594 = vsel %vm140, %v1580, 0
    %v1597 = vsel %vm140, %v1581, 0
    %1599 = vmatprep.subr.mxu0 0.0
    %1600 = vmatpush1.msra.mxu0 %v1582
    %1601 = vmatprep.subr.mxu0 0.0
    %1602 = vmatpush1.msra.mxu0 %v1583
    %1603 = vmatprep.subr.mxu0 0.0
    %1604 = vmatpush1.msra.mxu0 %v1584
    %1605 = vmatprep.subr.mxu0 0.0
    %1606 = vmatpush1.msra.mxu0 %v1585
    %1607 = vmatprep.subr.mxu0 0.0
    %1608 = vmatpush1.msra.mxu0 0.0
    %1609 = vmatprep.subr.mxu0 0.0
    %1610 = vmatpush1.msra.mxu0 0.0
    %1611 = vmatprep.subr.mxu0 0.0
    %1612 = vmatpush1.msra.mxu0 0.0
    %1613 = vmatprep.subr.mxu0 0.0
    %1614 = vmatpush1.msra.mxu0 0.0
    %1615 = vmatprep.subr.mxu0 0.0
    %1616 = vmatpush1.msra.mxu0 0.0
    %1617 = vmatprep.subr.mxu0 0.0
    %1618 = vmatpush1.msra.mxu0 0.0
    %1619 = vmatprep.subr.mxu0 0.0
    %1620 = vmatpush1.msra.mxu0 0.0
    %1621 = vmatprep.subr.mxu0 0.0
    %1622 = vmatpush1.msra.mxu0 0.0
    %1623 = vmatprep.subr.mxu0 0.0
    %1624 = vmatpush1.msra.mxu0 0.0
    %1625 = vmatprep.subr.mxu0 0.0
    %1626 = vmatpush1.msra.mxu0 0.0
    %1627 = vmatprep.subr.mxu0 0.0
    %1628 = vmatpush1.msra.mxu0 0.0
    %1629 = vmatprep.subr.mxu0 0.0
    %1630 = vmatpush1.msra.mxu0 0.0
    %1631 = vmatprep.subr.mxu0 0.0
    %1632 = vmatpush1.msra.mxu0 0.0
    %1633 = vmatprep.subr.mxu0 0.0
    %1634 = vmatpush1.msra.mxu0 0.0
    %1635 = vmatprep.subr.mxu0 0.0
    %1636 = vmatpush1.msra.mxu0 0.0
    %1637 = vmatprep.subr.mxu0 0.0
    %1638 = vmatpush1.msra.mxu0 0.0
    %1639 = vmatprep.subr.mxu0 0.0
    %1640 = vmatpush1.msra.mxu0 0.0
    %1641 = vmatprep.subr.mxu0 0.0
    %1642 = vmatpush1.msra.mxu0 0.0
    %1643 = vmatprep.subr.mxu0 0.0
    %1644 = vmatpush1.msra.mxu0 0.0
    %1645 = vmatprep.subr.mxu0 0.0
    %1646 = vmatpush1.msra.mxu0 0.0
    %1647 = vmatprep.subr.mxu0 0.0
    %1648 = vmatpush1.msra.mxu0 0.0
    %1649 = vmatprep.subr.mxu0 0.0
    %1650 = vmatpush1.msra.mxu0 0.0
    %1651 = vmatprep.subr.mxu0 0.0
    %1652 = vmatpush1.msra.mxu0 0.0
    %1653 = vmatprep.subr.mxu0 0.0
    %1654 = vmatpush1.msra.mxu0 0.0
    %1655 = vmatprep.subr.mxu0 0.0
    %1656 = vmatpush1.msra.mxu0 0.0
    %1657 = vmatprep.subr.mxu0 0.0
    %1658 = vmatpush1.msra.mxu0 0.0
    %1659 = vmatprep.subr.mxu0 0.0
    %1660 = vmatpush1.msra.mxu0 0.0
    %1661 = vmatprep.subr.mxu0 0.0
    %1662 = vmatpush1.msra.mxu0 0.0
    %1663 = vmatprep.mubr.f32.mxu0 0.0
    %1664 = vmatmul.mubr.f32.gmra.mrb[0].mxu0 %v1594
    %v1665 = vpop.f32.mrb[0].mxu0
    %v1666 = vadd.f32 %v1591, %v1665
    %v1667 = vpop.f32.mrb[0].mxu0
    %1668 = vmatprep.mubr.f32.mxu0 0.0
    %1669 = vmatmul.mubr.f32.gmra.mrb[0].mxu0 %v1597
    %v1670 = vpop.f32.mrb[0].mxu0
    %v1671 = vadd.f32 %v1591, %v1670
    %v1672 = vpop.f32.mrb[0].mxu0
    %1673 = vdwg.mxu0
    %v1674 = vadd.f32 %v125, %v1666
    %v1675 = vadd.f32 %v126, %v1671
    %v1676 = vld [vmem:[%s16] sm:$0x1]
    %s1677 = scalar_lea.vmem %s16, 1
    %v1678 = vld [vmem:[%s1677] sm:$0x1]
    %v1679 = vsel %vm140, %v1674, 0.0
    %1680 = vadd.xlane.f32.xlu0 %v1679
    %v1681 = vpop.xlane.xlu0 %1680
    %v1682 = vsel %vm140, %v1675, 0.0
    %1683 = vadd.xlane.f32.xlu0 %v1682
    %v1684 = vpop.xlane.xlu0 %1683
    %v1685 = vrcp.pop 32.0
    %v1686 = vmul.f32 %v1681, %v1685
    %v1687 = vmul.f32 %v1684, %v1685
    %v1688 = vsub.f32 %v1674, %v1686
    %v1689 = vsub.f32 %v1675, %v1687
    %v1690 = vmul.f32 %v1688, %v1688
    %v1691 = vmul.f32 %v1689, %v1689
    %v1692 = vsel %vm140, %v1690, 0.0
    %1693 = vadd.xlane.f32.xlu0 %v1692
    %v1694 = vpop.xlane.xlu0 %1693
    %v1695 = vsel %vm140, %v1691, 0.0
    %1696 = vadd.xlane.f32.xlu0 %v1695
    %v1697 = vpop.xlane.xlu0 %1696
    %v1698 = vmul.f32 %v1694, %v1685
    %v1699 = vmul.f32 %v1697, %v1685
    %v1700 = vadd.f32 %v1698, 1e-05
    %v1701 = vadd.f32 %v1699, 1e-05
    %v1702 = vrsqrt.pop %v1700
    %v1703 = vrsqrt.pop %v1701
    %v1704 = vmul.f32 %v1688, %v1702
    %v1705 = vmul.f32 %v1689, %v1703
    %v1707 = vlaneseq
    %v1708 = vshrl.u32 %v1707, 7
    %v1709 = vsub.s32 0, %v1708
    %v1710 = vrot.slane %v1676, %v1709
    %v1712 = vmul.f32 %v1704, %v1710
    %v1713 = vmul.f32 %v1705, %v1710
    %v1715 = vlaneseq
    %v1716 = vshrl.u32 %v1715, 7
    %v1717 = vsub.s32 0, %v1716
    %v1718 = vrot.slane %v1678, %v1717
    %v1720 = vadd.f32 %v1712, %v1718
    %v1721 = vadd.f32 %v1713, %v1718
    %v1722 = vld [vmem:[%s6] sm:$0xff]
    %v1723 = vld [vmem:[%s6 + $0x8] sm:$0xff]
    %v1724 = vld [vmem:[%s6 + $0x10] sm:$0xff]
    %v1725 = vld [vmem:[%s6 + $0x18] sm:$0xff]
    %v1726 = vld [vmem:[%s7] sm:$0x1]
    %v1728 = vlaneseq
    %v1729 = vshrl.u32 %v1728, 7
    %v1730 = vsub.s32 0, %v1729
    %v1731 = vrot.slane %v1726, %v1730
    %v1734 = vsel %vm140, %v1720, 0
    %v1737 = vsel %vm140, %v1721, 0
    %1739 = vmatprep.subr.mxu0 0.0
    %1740 = vmatpush1.msra.mxu0 %v1722
    %1741 = vmatprep.subr.mxu0 0.0
    %1742 = vmatpush1.msra.mxu0 %v1723
    %1743 = vmatprep.subr.mxu0 0.0
    %1744 = vmatpush1.msra.mxu0 %v1724
    %1745 = vmatprep.subr.mxu0 0.0
    %1746 = vmatpush1.msra.mxu0 %v1725
    %1747 = vmatprep.subr.mxu0 0.0
    %1748 = vmatpush1.msra.mxu0 0.0
    %1749 = vmatprep.subr.mxu0 0.0
    %1750 = vmatpush1.msra.mxu0 0.0
    %1751 = vmatprep.subr.mxu0 0.0
    %1752 = vmatpush1.msra.mxu0 0.0
    %1753 = vmatprep.subr.mxu0 0.0
    %1754 = vmatpush1.msra.mxu0 0.0
    %1755 = vmatprep.subr.mxu0 0.0
    %1756 = vmatpush1.msra.mxu0 0.0
    %1757 = vmatprep.subr.mxu0 0.0
    %1758 = vmatpush1.msra.mxu0 0.0
    %1759 = vmatprep.subr.mxu0 0.0
    %1760 = vmatpush1.msra.mxu0 0.0
    %1761 = vmatprep.subr.mxu0 0.0
    %1762 = vmatpush1.msra.mxu0 0.0
    %1763 = vmatprep.subr.mxu0 0.0
    %1764 = vmatpush1.msra.mxu0 0.0
    %1765 = vmatprep.subr.mxu0 0.0
    %1766 = vmatpush1.msra.mxu0 0.0
    %1767 = vmatprep.subr.mxu0 0.0
    %1768 = vmatpush1.msra.mxu0 0.0
    %1769 = vmatprep.subr.mxu0 0.0
    %1770 = vmatpush1.msra.mxu0 0.0
    %1771 = vmatprep.subr.mxu0 0.0
    %1772 = vmatpush1.msra.mxu0 0.0
    %1773 = vmatprep.subr.mxu0 0.0
    %1774 = vmatpush1.msra.mxu0 0.0
    %1775 = vmatprep.subr.mxu0 0.0
    %1776 = vmatpush1.msra.mxu0 0.0
    %1777 = vmatprep.subr.mxu0 0.0
    %1778 = vmatpush1.msra.mxu0 0.0
    %1779 = vmatprep.subr.mxu0 0.0
    %1780 = vmatpush1.msra.mxu0 0.0
    %1781 = vmatprep.subr.mxu0 0.0
    %1782 = vmatpush1.msra.mxu0 0.0
    %1783 = vmatprep.subr.mxu0 0.0
    %1784 = vmatpush1.msra.mxu0 0.0
    %1785 = vmatprep.subr.mxu0 0.0
    %1786 = vmatpush1.msra.mxu0 0.0
    %1787 = vmatprep.subr.mxu0 0.0
    %1788 = vmatpush1.msra.mxu0 0.0
    %1789 = vmatprep.subr.mxu0 0.0
    %1790 = vmatpush1.msra.mxu0 0.0
    %1791 = vmatprep.subr.mxu0 0.0
    %1792 = vmatpush1.msra.mxu0 0.0
    %1793 = vmatprep.subr.mxu0 0.0
    %1794 = vmatpush1.msra.mxu0 0.0
    %1795 = vmatprep.subr.mxu0 0.0
    %1796 = vmatpush1.msra.mxu0 0.0
    %1797 = vmatprep.subr.mxu0 0.0
    %1798 = vmatpush1.msra.mxu0 0.0
    %1799 = vmatprep.subr.mxu0 0.0
    %1800 = vmatpush1.msra.mxu0 0.0
    %1801 = vmatprep.subr.mxu0 0.0
    %1802 = vmatpush1.msra.mxu0 0.0
    %1803 = vmatprep.mubr.f32.mxu0 0.0
    %1804 = vmatmul.mubr.f32.gmra.mrb[0].mxu0 %v1734
    %v1805 = vpop.f32.mrb[0].mxu0
    %v1806 = vadd.f32 %v1731, %v1805
    %v1807 = vpop.f32.mrb[0].mxu0
    %1808 = vmatprep.mubr.f32.mxu0 0.0
    %1809 = vmatmul.mubr.f32.gmra.mrb[0].mxu0 %v1737
    %v1810 = vpop.f32.mrb[0].mxu0
    %v1811 = vadd.f32 %v1731, %v1810
    %v1812 = vpop.f32.mrb[0].mxu0
    %1813 = vdwg.mxu0
    %v1814 = vmul.f32 %v1806, 0.35355338
    %v1815 = vmul.f32 %v1811, 0.35355338
    %v1816 = vld [vmem:[#allocation8] sm:$0xff]
    %v1817 = vld [vmem:[#allocation8 + $0x8] sm:$0xff]
    %v1818 = vld [vmem:[#allocation8 + $0x10] sm:$0xff]
    %v1819 = vld [vmem:[#allocation8 + $0x18] sm:$0xff]
    %v1820 = vld [vmem:[%s9] sm:$0x1]
    %v1822 = vlaneseq
    %v1823 = vshrl.u32 %v1822, 7
    %v1824 = vsub.s32 0, %v1823
    %v1825 = vrot.slane %v1820, %v1824
    %v1828 = vsel %vm140, %v127, 0
    %v1831 = vsel %vm140, %v128, 0
    %1833 = vmatprep.subr.mxu0 0.0
    %1834 = vmatpush1.msra.mxu0 %v1816
    %1835 = vmatprep.subr.mxu0 0.0
    %1836 = vmatpush1.msra.mxu0 %v1817
    %1837 = vmatprep.subr.mxu0 0.0
    %1838 = vmatpush1.msra.mxu0 %v1818
    %1839 = vmatprep.subr.mxu0 0.0
    %1840 = vmatpush1.msra.mxu0 %v1819
    %1841 = vmatprep.subr.mxu0 0.0
    %1842 = vmatpush1.msra.mxu0 0.0
    %1843 = vmatprep.subr.mxu0 0.0
    %1844 = vmatpush1.msra.mxu0 0.0
    %1845 = vmatprep.subr.mxu0 0.0
    %1846 = vmatpush1.msra.mxu0 0.0
    %1847 = vmatprep.subr.mxu0 0.0
    %1848 = vmatpush1.msra.mxu0 0.0
    %1849 = vmatprep.subr.mxu0 0.0
    %1850 = vmatpush1.msra.mxu0 0.0
    %1851 = vmatprep.subr.mxu0 0.0
    %1852 = vmatpush1.msra.mxu0 0.0
    %1853 = vmatprep.subr.mxu0 0.0
    %1854 = vmatpush1.msra.mxu0 0.0
    %1855 = vmatprep.subr.mxu0 0.0
    %1856 = vmatpush1.msra.mxu0 0.0
    %1857 = vmatprep.subr.mxu0 0.0
    %1858 = vmatpush1.msra.mxu0 0.0
    %1859 = vmatprep.subr.mxu0 0.0
    %1860 = vmatpush1.msra.mxu0 0.0
    %1861 = vmatprep.subr.mxu0 0.0
    %1862 = vmatpush1.msra.mxu0 0.0
    %1863 = vmatprep.subr.mxu0 0.0
    %1864 = vmatpush1.msra.mxu0 0.0
    %1865 = vmatprep.subr.mxu0 0.0
    %1866 = vmatpush1.msra.mxu0 0.0
    %1867 = vmatprep.subr.mxu0 0.0
    %1868 = vmatpush1.msra.mxu0 0.0
    %1869 = vmatprep.subr.mxu0 0.0
    %1870 = vmatpush1.msra.mxu0 0.0
    %1871 = vmatprep.subr.mxu0 0.0
    %1872 = vmatpush1.msra.mxu0 0.0
    %1873 = vmatprep.subr.mxu0 0.0
    %1874 = vmatpush1.msra.mxu0 0.0
    %1875 = vmatprep.subr.mxu0 0.0
    %1876 = vmatpush1.msra.mxu0 0.0
    %1877 = vmatprep.subr.mxu0 0.0
    %1878 = vmatpush1.msra.mxu0 0.0
    %1879 = vmatprep.subr.mxu0 0.0
    %1880 = vmatpush1.msra.mxu0 0.0
    %1881 = vmatprep.subr.mxu0 0.0
    %1882 = vmatpush1.msra.mxu0 0.0
    %1883 = vmatprep.subr.mxu0 0.0
    %1884 = vmatpush1.msra.mxu0 0.0
    %1885 = vmatprep.subr.mxu0 0.0
    %1886 = vmatpush1.msra.mxu0 0.0
    %1887 = vmatprep.subr.mxu0 0.0
    %1888 = vmatpush1.msra.mxu0 0.0
    %1889 = vmatprep.subr.mxu0 0.0
    %1890 = vmatpush1.msra.mxu0 0.0
    %1891 = vmatprep.subr.mxu0 0.0
    %1892 = vmatpush1.msra.mxu0 0.0
    %1893 = vmatprep.subr.mxu0 0.0
    %1894 = vmatpush1.msra.mxu0 0.0
    %1895 = vmatprep.subr.mxu0 0.0
    %1896 = vmatpush1.msra.mxu0 0.0
    %1897 = vmatprep.mubr.f32.mxu0 0.0
    %1898 = vmatmul.mubr.f32.gmra.mrb[0].mxu0 %v1828
    %v1899 = vpop.f32.mrb[0].mxu0
    %v1900 = vadd.f32 %v1825, %v1899
    %v1901 = vpop.f32.mrb[0].mxu0
    %1902 = vmatprep.mubr.f32.mxu0 0.0
    %1903 = vmatmul.mubr.f32.gmra.mrb[0].mxu0 %v1831
    %v1904 = vpop.f32.mrb[0].mxu0
    %v1905 = vadd.f32 %v1825, %v1904
    %v1906 = vpop.f32.mrb[0].mxu0
    %1907 = vdwg.mxu0
    %v1909 = vsel %vm227, %v1814, 0
    %v1912 = vsel %vm227, %v1900, 0
    %1914 = vmatprep.subr.mxu0 0.0
    %1915 = vmatpush1.xpose.msra.mxu0 %v1912
    %1916 = vmatprep.subr.mxu0 0.0
    %1917 = vmatpush1.xpose.msra.mxu0 0.0
    %1918 = vmatprep.subr.mxu0 0.0
    %1919 = vmatpush1.xpose.msra.mxu0 0.0
    %1920 = vmatprep.subr.mxu0 0.0
    %1921 = vmatpush1.xpose.msra.mxu0 0.0
    %1922 = vmatprep.subr.mxu0 0.0
    %1923 = vmatpush1.xpose.msra.mxu0 0.0
    %1924 = vmatprep.subr.mxu0 0.0
    %1925 = vmatpush1.xpose.msra.mxu0 0.0
    %1926 = vmatprep.subr.mxu0 0.0
    %1927 = vmatpush1.xpose.msra.mxu0 0.0
    %1928 = vmatprep.subr.mxu0 0.0
    %1929 = vmatpush1.xpose.msra.mxu0 0.0
    %1930 = vmatprep.subr.mxu0 0.0
    %1931 = vmatpush1.xpose.msra.mxu0 0.0
    %1932 = vmatprep.subr.mxu0 0.0
    %1933 = vmatpush1.xpose.msra.mxu0 0.0
    %1934 = vmatprep.subr.mxu0 0.0
    %1935 = vmatpush1.xpose.msra.mxu0 0.0
    %1936 = vmatprep.subr.mxu0 0.0
    %1937 = vmatpush1.xpose.msra.mxu0 0.0
    %1938 = vmatprep.subr.mxu0 0.0
    %1939 = vmatpush1.xpose.msra.mxu0 0.0
    %1940 = vmatprep.subr.mxu0 0.0
    %1941 = vmatpush1.xpose.msra.mxu0 0.0
    %1942 = vmatprep.subr.mxu0 0.0
    %1943 = vmatpush1.xpose.msra.mxu0 0.0
    %1944 = vmatprep.subr.mxu0 0.0
    %1945 = vmatpush1.xpose.msra.mxu0 0.0
    %1946 = vmatprep.subr.mxu0 0.0
    %1947 = vmatpush1.xpose.msra.mxu0 0.0
    %1948 = vmatprep.subr.mxu0 0.0
    %1949 = vmatpush1.xpose.msra.mxu0 0.0
    %1950 = vmatprep.subr.mxu0 0.0
    %1951 = vmatpush1.xpose.msra.mxu0 0.0
    %1952 = vmatprep.subr.mxu0 0.0
    %1953 = vmatpush1.xpose.msra.mxu0 0.0
    %1954 = vmatprep.subr.mxu0 0.0
    %1955 = vmatpush1.xpose.msra.mxu0 0.0
    %1956 = vmatprep.subr.mxu0 0.0
    %1957 = vmatpush1.xpose.msra.mxu0 0.0
    %1958 = vmatprep.subr.mxu0 0.0
    %1959 = vmatpush1.xpose.msra.mxu0 0.0
    %1960 = vmatprep.subr.mxu0 0.0
    %1961 = vmatpush1.xpose.msra.mxu0 0.0
    %1962 = vmatprep.subr.mxu0 0.0
    %1963 = vmatpush1.xpose.msra.mxu0 0.0
    %1964 = vmatprep.subr.mxu0 0.0
    %1965 = vmatpush1.xpose.msra.mxu0 0.0
    %1966 = vmatprep.subr.mxu0 0.0
    %1967 = vmatpush1.xpose.msra.mxu0 0.0
    %1968 = vmatprep.subr.mxu0 0.0
    %1969 = vmatpush1.xpose.msra.mxu0 0.0
    %1970 = vmatprep.subr.mxu0 0.0
    %1971 = vmatpush1.xpose.msra.mxu0 0.0
    %1972 = vmatprep.subr.mxu0 0.0
    %1973 = vmatpush1.xpose.msra.mxu0 0.0
    %1974 = vmatprep.subr.mxu0 0.0
    %1975 = vmatpush1.xpose.msra.mxu0 0.0
    %1976 = vmatprep.subr.mxu0 0.0
    %1977 = vmatpush1.xpose.msra.mxu0 0.0
    %1978 = vmatprep.mubr.f32.mxu0 0.0
    %1979 = vmatmul.mubr.f32.gmra.mrb[0].mxu0 %v1909
    %v1980 = vpop.f32.mrb[0].mxu0
    %v1981 = vadd.f32 0.0, %v1980
    %v1982 = vpop.f32.mrb[0].mxu0
    %1983 = vdwg.mxu0
    %v1985 = vsel %vm227, %v1815, 0
    %v1988 = vsel %vm227, %v1905, 0
    %1990 = vmatprep.subr.mxu0 0.0
    %1991 = vmatpush1.xpose.msra.mxu0 %v1988
    %1992 = vmatprep.subr.mxu0 0.0
    %1993 = vmatpush1.xpose.msra.mxu0 0.0
    %1994 = vmatprep.subr.mxu0 0.0
    %1995 = vmatpush1.xpose.msra.mxu0 0.0
    %1996 = vmatprep.subr.mxu0 0.0
    %1997 = vmatpush1.xpose.msra.mxu0 0.0
    %1998 = vmatprep.subr.mxu0 0.0
    %1999 = vmatpush1.xpose.msra.mxu0 0.0
    %2000 = vmatprep.subr.mxu0 0.0
    %2001 = vmatpush1.xpose.msra.mxu0 0.0
    %2002 = vmatprep.subr.mxu0 0.0
    %2003 = vmatpush1.xpose.msra.mxu0 0.0
    %2004 = vmatprep.subr.mxu0 0.0
    %2005 = vmatpush1.xpose.msra.mxu0 0.0
    %2006 = vmatprep.subr.mxu0 0.0
    %2007 = vmatpush1.xpose.msra.mxu0 0.0
    %2008 = vmatprep.subr.mxu0 0.0
    %2009 = vmatpush1.xpose.msra.mxu0 0.0
    %2010 = vmatprep.subr.mxu0 0.0
    %2011 = vmatpush1.xpose.msra.mxu0 0.0
    %2012 = vmatprep.subr.mxu0 0.0
    %2013 = vmatpush1.xpose.msra.mxu0 0.0
    %2014 = vmatprep.subr.mxu0 0.0
    %2015 = vmatpush1.xpose.msra.mxu0 0.0
    %2016 = vmatprep.subr.mxu0 0.0
    %2017 = vmatpush1.xpose.msra.mxu0 0.0
    %2018 = vmatprep.subr.mxu0 0.0
    %2019 = vmatpush1.xpose.msra.mxu0 0.0
    %2020 = vmatprep.subr.mxu0 0.0
    %2021 = vmatpush1.xpose.msra.mxu0 0.0
    %2022 = vmatprep.subr.mxu0 0.0
    %2023 = vmatpush1.xpose.msra.mxu0 0.0
    %2024 = vmatprep.subr.mxu0 0.0
    %2025 = vmatpush1.xpose.msra.mxu0 0.0
    %2026 = vmatprep.subr.mxu0 0.0
    %2027 = vmatpush1.xpose.msra.mxu0 0.0
    %2028 = vmatprep.subr.mxu0 0.0
    %2029 = vmatpush1.xpose.msra.mxu0 0.0
    %2030 = vmatprep.subr.mxu0 0.0
    %2031 = vmatpush1.xpose.msra.mxu0 0.0
    %2032 = vmatprep.subr.mxu0 0.0
    %2033 = vmatpush1.xpose.msra.mxu0 0.0
    %2034 = vmatprep.subr.mxu0 0.0
    %2035 = vmatpush1.xpose.msra.mxu0 0.0
    %2036 = vmatprep.subr.mxu0 0.0
    %2037 = vmatpush1.xpose.msra.mxu0 0.0
    %2038 = vmatprep.subr.mxu0 0.0
    %2039 = vmatpush1.xpose.msra.mxu0 0.0
    %2040 = vmatprep.subr.mxu0 0.0
    %2041 = vmatpush1.xpose.msra.mxu0 0.0
    %2042 = vmatprep.subr.mxu0 0.0
    %2043 = vmatpush1.xpose.msra.mxu0 0.0
    %2044 = vmatprep.subr.mxu0 0.0
    %2045 = vmatpush1.xpose.msra.mxu0 0.0
    %2046 = vmatprep.subr.mxu0 0.0
    %2047 = vmatpush1.xpose.msra.mxu0 0.0
    %2048 = vmatprep.subr.mxu0 0.0
    %2049 = vmatpush1.xpose.msra.mxu0 0.0
    %2050 = vmatprep.subr.mxu0 0.0
    %2051 = vmatpush1.xpose.msra.mxu0 0.0
    %2052 = vmatprep.subr.mxu0 0.0
    %2053 = vmatpush1.xpose.msra.mxu0 0.0
    %2054 = vmatprep.mubr.f32.mxu0 0.0
    %2055 = vmatmul.mubr.f32.gmra.mrb[0].mxu0 %v1985
    %v2056 = vpop.f32.mrb[0].mxu0
    %v2057 = vadd.f32 0.0, %v2056
    %v2058 = vpop.f32.mrb[0].mxu0
    %2059 = vdwg.mxu0
    %v2060 = vsel %vm227, %v1981, -inf
    %2061 = vmax.xlane.f32.xlu0 %v2060
    %v2062 = vpop.xlane.xlu0 %2061
    %v2063 = vsel %vm227, %v2057, -inf
    %2064 = vmax.xlane.f32.xlu0 %v2063
    %v2065 = vpop.xlane.xlu0 %2064
    %v2066 = vsub.f32 %v1981, %v2062
    %v2067 = vsub.f32 %v2057, %v2065
    %v2068 = vmul.f32 %v2066, 1.442695
    %v2069 = vpow.pop %v2068
    %v2070 = vmul.f32 %v2067, 1.442695
    %v2071 = vpow.pop %v2070
    %v2072 = vsel %vm227, %v2069, 0.0
    %2073 = vadd.xlane.f32.xlu0 %v2072
    %v2074 = vpop.xlane.xlu0 %2073
    %v2075 = vsel %vm227, %v2071, 0.0
    %2076 = vadd.xlane.f32.xlu0 %v2075
    %v2077 = vpop.xlane.xlu0 %2076
    %2078 = vrot.lane.b32.xlu0 %v1900, 96
    %v2079 = vpop.permute.xlu0 %2078
    %v2082 = vsel %vm227, %v2069, 0
    %2084 = vmatprep.subr.mxu0 0.0
    %2085 = vmatpush1.msra.mxu0 %v2079
    %2086 = vmatprep.subr.mxu0 0.0
    %2087 = vmatpush1.msra.mxu0 0.0
    %2088 = vmatprep.subr.mxu0 0.0
    %2089 = vmatpush1.msra.mxu0 0.0
    %2090 = vmatprep.subr.mxu0 0.0
    %2091 = vmatpush1.msra.mxu0 0.0
    %2092 = vmatprep.subr.mxu0 0.0
    %2093 = vmatpush1.msra.mxu0 0.0
    %2094 = vmatprep.subr.mxu0 0.0
    %2095 = vmatpush1.msra.mxu0 0.0
    %2096 = vmatprep.subr.mxu0 0.0
    %2097 = vmatpush1.msra.mxu0 0.0
    %2098 = vmatprep.subr.mxu0 0.0
    %2099 = vmatpush1.msra.mxu0 0.0
    %2100 = vmatprep.subr.mxu0 0.0
    %2101 = vmatpush1.msra.mxu0 0.0
    %2102 = vmatprep.subr.mxu0 0.0
    %2103 = vmatpush1.msra.mxu0 0.0
    %2104 = vmatprep.subr.mxu0 0.0
    %2105 = vmatpush1.msra.mxu0 0.0
    %2106 = vmatprep.subr.mxu0 0.0
    %2107 = vmatpush1.msra.mxu0 0.0
    %2108 = vmatprep.subr.mxu0 0.0
    %2109 = vmatpush1.msra.mxu0 0.0
    %2110 = vmatprep.subr.mxu0 0.0
    %2111 = vmatpush1.msra.mxu0 0.0
    %2112 = vmatprep.subr.mxu0 0.0
    %2113 = vmatpush1.msra.mxu0 0.0
    %2114 = vmatprep.subr.mxu0 0.0
    %2115 = vmatpush1.msra.mxu0 0.0
    %2116 = vmatprep.subr.mxu0 0.0
    %2117 = vmatpush1.msra.mxu0 0.0
    %2118 = vmatprep.subr.mxu0 0.0
    %2119 = vmatpush1.msra.mxu0 0.0
    %2120 = vmatprep.subr.mxu0 0.0
    %2121 = vmatpush1.msra.mxu0 0.0
    %2122 = vmatprep.subr.mxu0 0.0
    %2123 = vmatpush1.msra.mxu0 0.0
    %2124 = vmatprep.subr.mxu0 0.0
    %2125 = vmatpush1.msra.mxu0 0.0
    %2126 = vmatprep.subr.mxu0 0.0
    %2127 = vmatpush1.msra.mxu0 0.0
    %2128 = vmatprep.subr.mxu0 0.0
    %2129 = vmatpush1.msra.mxu0 0.0
    %2130 = vmatprep.subr.mxu0 0.0
    %2131 = vmatpush1.msra.mxu0 0.0
    %2132 = vmatprep.subr.mxu0 0.0
    %2133 = vmatpush1.msra.mxu0 0.0
    %2134 = vmatprep.subr.mxu0 0.0
    %2135 = vmatpush1.msra.mxu0 0.0
    %2136 = vmatprep.subr.mxu0 0.0
    %2137 = vmatpush1.msra.mxu0 0.0
    %2138 = vmatprep.subr.mxu0 0.0
    %2139 = vmatpush1.msra.mxu0 0.0
    %2140 = vmatprep.subr.mxu0 0.0
    %2141 = vmatpush1.msra.mxu0 0.0
    %2142 = vmatprep.subr.mxu0 0.0
    %2143 = vmatpush1.msra.mxu0 0.0
    %2144 = vmatprep.subr.mxu0 0.0
    %2145 = vmatpush1.msra.mxu0 0.0
    %2146 = vmatprep.subr.mxu0 0.0
    %2147 = vmatpush1.msra.mxu0 0.0
    %2148 = vmatprep.mubr.f32.mxu0 0.0
    %2149 = vmatmul.mubr.f32.gmra.mrb[0].mxu0 %v2082
    %v2150 = vpop.f32.mrb[0].mxu0
    %v2151 = vadd.f32 0.0, %v2150
    %v2152 = vpop.f32.mrb[0].mxu0
    %2153 = vdwg.mxu0
    %2154 = vrot.lane.b32.xlu0 %v1905, 96
    %v2155 = vpop.permute.xlu0 %2154
    %v2158 = vsel %vm227, %v2071, 0
    %2160 = vmatprep.subr.mxu0 0.0
    %2161 = vmatpush1.msra.mxu0 %v2155
    %2162 = vmatprep.subr.mxu0 0.0
    %2163 = vmatpush1.msra.mxu0 0.0
    %2164 = vmatprep.subr.mxu0 0.0
    %2165 = vmatpush1.msra.mxu0 0.0
    %2166 = vmatprep.subr.mxu0 0.0
    %2167 = vmatpush1.msra.mxu0 0.0
    %2168 = vmatprep.subr.mxu0 0.0
    %2169 = vmatpush1.msra.mxu0 0.0
    %2170 = vmatprep.subr.mxu0 0.0
    %2171 = vmatpush1.msra.mxu0 0.0
    %2172 = vmatprep.subr.mxu0 0.0
    %2173 = vmatpush1.msra.mxu0 0.0
    %2174 = vmatprep.subr.mxu0 0.0
    %2175 = vmatpush1.msra.mxu0 0.0
    %2176 = vmatprep.subr.mxu0 0.0
    %2177 = vmatpush1.msra.mxu0 0.0
    %2178 = vmatprep.subr.mxu0 0.0
    %2179 = vmatpush1.msra.mxu0 0.0
    %2180 = vmatprep.subr.mxu0 0.0
    %2181 = vmatpush1.msra.mxu0 0.0
    %2182 = vmatprep.subr.mxu0 0.0
    %2183 = vmatpush1.msra.mxu0 0.0
    %2184 = vmatprep.subr.mxu0 0.0
    %2185 = vmatpush1.msra.mxu0 0.0
    %2186 = vmatprep.subr.mxu0 0.0
    %2187 = vmatpush1.msra.mxu0 0.0
    %2188 = vmatprep.subr.mxu0 0.0
    %2189 = vmatpush1.msra.mxu0 0.0
    %2190 = vmatprep.subr.mxu0 0.0
    %2191 = vmatpush1.msra.mxu0 0.0
    %2192 = vmatprep.subr.mxu0 0.0
    %2193 = vmatpush1.msra.mxu0 0.0
    %2194 = vmatprep.subr.mxu0 0.0
    %2195 = vmatpush1.msra.mxu0 0.0
    %2196 = vmatprep.subr.mxu0 0.0
    %2197 = vmatpush1.msra.mxu0 0.0
    %2198 = vmatprep.subr.mxu0 0.0
    %2199 = vmatpush1.msra.mxu0 0.0
    %2200 = vmatprep.subr.mxu0 0.0
    %2201 = vmatpush1.msra.mxu0 0.0
    %2202 = vmatprep.subr.mxu0 0.0
    %2203 = vmatpush1.msra.mxu0 0.0
    %2204 = vmatprep.subr.mxu0 0.0
    %2205 = vmatpush1.msra.mxu0 0.0
    %2206 = vmatprep.subr.mxu0 0.0
    %2207 = vmatpush1.msra.mxu0 0.0
    %2208 = vmatprep.subr.mxu0 0.0
    %2209 = vmatpush1.msra.mxu0 0.0
    %2210 = vmatprep.subr.mxu0 0.0
    %2211 = vmatpush1.msra.mxu0 0.0
    %2212 = vmatprep.subr.mxu0 0.0
    %2213 = vmatpush1.msra.mxu0 0.0
    %2214 = vmatprep.subr.mxu0 0.0
    %2215 = vmatpush1.msra.mxu0 0.0
    %2216 = vmatprep.subr.mxu0 0.0
    %2217 = vmatpush1.msra.mxu0 0.0
    %2218 = vmatprep.subr.mxu0 0.0
    %2219 = vmatpush1.msra.mxu0 0.0
    %2220 = vmatprep.subr.mxu0 0.0
    %2221 = vmatpush1.msra.mxu0 0.0
    %2222 = vmatprep.subr.mxu0 0.0
    %2223 = vmatpush1.msra.mxu0 0.0
    %2224 = vmatprep.mubr.f32.mxu0 0.0
    %2225 = vmatmul.mubr.f32.gmra.mrb[0].mxu0 %v2158
    %v2226 = vpop.f32.mrb[0].mxu0
    %v2227 = vadd.f32 0.0, %v2226
    %v2228 = vpop.f32.mrb[0].mxu0
    %2229 = vdwg.mxu0
    %v2230 = vrcp.pop %v2074
    %v2231 = vmul.f32 %v2151, %v2230
    %v2232 = vrcp.pop %v2077
    %v2233 = vmul.f32 %v2227, %v2232
    %2234 = vst.msk [vmem:[#allocation2] sm:$0xff] %vm227, %v2231
    %2235 = vst.msk [vmem:[#allocation2 + $0x8] sm:$0xff] %vm227, %v2233
    %2236 = vrot.lane.b32.xlu0 %v1814, 120
    %v2237 = vpop.permute.xlu0 %2236
    %2238 = vrot.lane.b32.xlu0 %v1900, 120
    %v2239 = vpop.permute.xlu0 %2238
    %v2240 = vsel %vm227, %v2237, 0
    %v2242 = vsel %vm227, %v2239, 0
    %2244 = vmatprep.subr.mxu0 0.0
    %2245 = vmatpush1.xpose.msra.mxu0 %v2242
    %2246 = vmatprep.subr.mxu0 0.0
    %2247 = vmatpush1.xpose.msra.mxu0 0.0
    %2248 = vmatprep.subr.mxu0 0.0
    %2249 = vmatpush1.xpose.msra.mxu0 0.0
    %2250 = vmatprep.subr.mxu0 0.0
    %2251 = vmatpush1.xpose.msra.mxu0 0.0
    %2252 = vmatprep.subr.mxu0 0.0
    %2253 = vmatpush1.xpose.msra.mxu0 0.0
    %2254 = vmatprep.subr.mxu0 0.0
    %2255 = vmatpush1.xpose.msra.mxu0 0.0
    %2256 = vmatprep.subr.mxu0 0.0
    %2257 = vmatpush1.xpose.msra.mxu0 0.0
    %2258 = vmatprep.subr.mxu0 0.0
    %2259 = vmatpush1.xpose.msra.mxu0 0.0
    %2260 = vmatprep.subr.mxu0 0.0
    %2261 = vmatpush1.xpose.msra.mxu0 0.0
    %2262 = vmatprep.subr.mxu0 0.0
    %2263 = vmatpush1.xpose.msra.mxu0 0.0
    %2264 = vmatprep.subr.mxu0 0.0
    %2265 = vmatpush1.xpose.msra.mxu0 0.0
    %2266 = vmatprep.subr.mxu0 0.0
    %2267 = vmatpush1.xpose.msra.mxu0 0.0
    %2268 = vmatprep.subr.mxu0 0.0
    %2269 = vmatpush1.xpose.msra.mxu0 0.0
    %2270 = vmatprep.subr.mxu0 0.0
    %2271 = vmatpush1.xpose.msra.mxu0 0.0
    %2272 = vmatprep.subr.mxu0 0.0
    %2273 = vmatpush1.xpose.msra.mxu0 0.0
    %2274 = vmatprep.subr.mxu0 0.0
    %2275 = vmatpush1.xpose.msra.mxu0 0.0
    %2276 = vmatprep.subr.mxu0 0.0
    %2277 = vmatpush1.xpose.msra.mxu0 0.0
    %2278 = vmatprep.subr.mxu0 0.0
    %2279 = vmatpush1.xpose.msra.mxu0 0.0
    %2280 = vmatprep.subr.mxu0 0.0
    %2281 = vmatpush1.xpose.msra.mxu0 0.0
    %2282 = vmatprep.subr.mxu0 0.0
    %2283 = vmatpush1.xpose.msra.mxu0 0.0
    %2284 = vmatprep.subr.mxu0 0.0
    %2285 = vmatpush1.xpose.msra.mxu0 0.0
    %2286 = vmatprep.subr.mxu0 0.0
    %2287 = vmatpush1.xpose.msra.mxu0 0.0
    %2288 = vmatprep.subr.mxu0 0.0
    %2289 = vmatpush1.xpose.msra.mxu0 0.0
    %2290 = vmatprep.subr.mxu0 0.0
    %2291 = vmatpush1.xpose.msra.mxu0 0.0
    %2292 = vmatprep.subr.mxu0 0.0
    %2293 = vmatpush1.xpose.msra.mxu0 0.0
    %2294 = vmatprep.subr.mxu0 0.0
    %2295 = vmatpush1.xpose.msra.mxu0 0.0
    %2296 = vmatprep.subr.mxu0 0.0
    %2297 = vmatpush1.xpose.msra.mxu0 0.0
    %2298 = vmatprep.subr.mxu0 0.0
    %2299 = vmatpush1.xpose.msra.mxu0 0.0
    %2300 = vmatprep.subr.mxu0 0.0
    %2301 = vmatpush1.xpose.msra.mxu0 0.0
    %2302 = vmatprep.subr.mxu0 0.0
    %2303 = vmatpush1.xpose.msra.mxu0 0.0
    %2304 = vmatprep.subr.mxu0 0.0
    %2305 = vmatpush1.xpose.msra.mxu0 0.0
    %2306 = vmatprep.subr.mxu0 0.0
    %2307 = vmatpush1.xpose.msra.mxu0 0.0
    %2308 = vmatprep.mubr.f32.mxu0 0.0
    %2309 = vmatmul.mubr.f32.gmra.mrb[0].mxu0 %v2240
    %v2310 = vpop.f32.mrb[0].mxu0
    %v2311 = vadd.f32 0.0, %v2310
    %v2312 = vpop.f32.mrb[0].mxu0
    %2313 = vdwg.mxu0
    %2314 = vrot.lane.b32.xlu0 %v1815, 120
    %v2315 = vpop.permute.xlu0 %2314
    %2316 = vrot.lane.b32.xlu0 %v1905, 120
    %v2317 = vpop.permute.xlu0 %2316
    %v2318 = vsel %vm227, %v2315, 0
    %v2320 = vsel %vm227, %v2317, 0
    %2322 = vmatprep.subr.mxu0 0.0
    %2323 = vmatpush1.xpose.msra.mxu0 %v2320
    %2324 = vmatprep.subr.mxu0 0.0
    %2325 = vmatpush1.xpose.msra.mxu0 0.0
    %2326 = vmatprep.subr.mxu0 0.0
    %2327 = vmatpush1.xpose.msra.mxu0 0.0
    %2328 = vmatprep.subr.mxu0 0.0
    %2329 = vmatpush1.xpose.msra.mxu0 0.0
    %2330 = vmatprep.subr.mxu0 0.0
    %2331 = vmatpush1.xpose.msra.mxu0 0.0
    %2332 = vmatprep.subr.mxu0 0.0
    %2333 = vmatpush1.xpose.msra.mxu0 0.0
    %2334 = vmatprep.subr.mxu0 0.0
    %2335 = vmatpush1.xpose.msra.mxu0 0.0
    %2336 = vmatprep.subr.mxu0 0.0
    %2337 = vmatpush1.xpose.msra.mxu0 0.0
    %2338 = vmatprep.subr.mxu0 0.0
    %2339 = vmatpush1.xpose.msra.mxu0 0.0
    %2340 = vmatprep.subr.mxu0 0.0
    %2341 = vmatpush1.xpose.msra.mxu0 0.0
    %2342 = vmatprep.subr.mxu0 0.0
    %2343 = vmatpush1.xpose.msra.mxu0 0.0
    %2344 = vmatprep.subr.mxu0 0.0
    %2345 = vmatpush1.xpose.msra.mxu0 0.0
    %2346 = vmatprep.subr.mxu0 0.0
    %2347 = vmatpush1.xpose.msra.mxu0 0.0
    %2348 = vmatprep.subr.mxu0 0.0
    %2349 = vmatpush1.xpose.msra.mxu0 0.0
    %2350 = vmatprep.subr.mxu0 0.0
    %2351 = vmatpush1.xpose.msra.mxu0 0.0
    %2352 = vmatprep.subr.mxu0 0.0
    %2353 = vmatpush1.xpose.msra.mxu0 0.0
    %2354 = vmatprep.subr.mxu0 0.0
    %2355 = vmatpush1.xpose.msra.mxu0 0.0
    %2356 = vmatprep.subr.mxu0 0.0
    %2357 = vmatpush1.xpose.msra.mxu0 0.0
    %2358 = vmatprep.subr.mxu0 0.0
    %2359 = vmatpush1.xpose.msra.mxu0 0.0
    %2360 = vmatprep.subr.mxu0 0.0
    %2361 = vmatpush1.xpose.msra.mxu0 0.0
    %2362 = vmatprep.subr.mxu0 0.0
    %2363 = vmatpush1.xpose.msra.mxu0 0.0
    %2364 = vmatprep.subr.mxu0 0.0
    %2365 = vmatpush1.xpose.msra.mxu0 0.0
    %2366 = vmatprep.subr.mxu0 0.0
    %2367 = vmatpush1.xpose.msra.mxu0 0.0
    %2368 = vmatprep.subr.mxu0 0.0
    %2369 = vmatpush1.xpose.msra.mxu0 0.0
    %2370 = vmatprep.subr.mxu0 0.0
    %2371 = vmatpush1.xpose.msra.mxu0 0.0
    %2372 = vmatprep.subr.mxu0 0.0
    %2373 = vmatpush1.xpose.msra.mxu0 0.0
    %2374 = vmatprep.subr.mxu0 0.0
    %2375 = vmatpush1.xpose.msra.mxu0 0.0
    %2376 = vmatprep.subr.mxu0 0.0
    %2377 = vmatpush1.xpose.msra.mxu0 0.0
    %2378 = vmatprep.subr.mxu0 0.0
    %2379 = vmatpush1.xpose.msra.mxu0 0.0
    %2380 = vmatprep.subr.mxu0 0.0
    %2381 = vmatpush1.xpose.msra.mxu0 0.0
    %2382 = vmatprep.subr.mxu0 0.0
    %2383 = vmatpush1.xpose.msra.mxu0 0.0
    %2384 = vmatprep.subr.mxu0 0.0
    %2385 = vmatpush1.xpose.msra.mxu0 0.0
    %2386 = vmatprep.mubr.f32.mxu0 0.0
    %2387 = vmatmul.mubr.f32.gmra.mrb[0].mxu0 %v2318
    %v2388 = vpop.f32.mrb[0].mxu0
    %v2389 = vadd.f32 0.0, %v2388
    %v2390 = vpop.f32.mrb[0].mxu0
    %2391 = vdwg.mxu0
    %v2392 = vsel %vm227, %v2311, -inf
    %2393 = vmax.xlane.f32.xlu0 %v2392
    %v2394 = vpop.xlane.xlu0 %2393
    %v2395 = vsel %vm227, %v2389, -inf
    %2396 = vmax.xlane.f32.xlu0 %v2395
    %v2397 = vpop.xlane.xlu0 %2396
    %v2398 = vsub.f32 %v2311, %v2394
    %v2399 = vsub.f32 %v2389, %v2397
    %v2400 = vmul.f32 %v2398, 1.442695
    %v2401 = vpow.pop %v2400
    %v2402 = vmul.f32 %v2399, 1.442695
    %v2403 = vpow.pop %v2402
    %v2404 = vsel %vm227, %v2401, 0.0
    %2405 = vadd.xlane.f32.xlu0 %v2404
    %v2406 = vpop.xlane.xlu0 %2405
    %v2407 = vsel %vm227, %v2403, 0.0
    %2408 = vadd.xlane.f32.xlu0 %v2407
    %v2409 = vpop.xlane.xlu0 %2408
    %2410 = vrot.lane.b32.xlu0 %v1900, 88
    %v2411 = vpop.permute.xlu0 %2410
    %v2414 = vsel %vm227, %v2401, 0
    %2416 = vmatprep.subr.mxu0 0.0
    %2417 = vmatpush1.msra.mxu0 %v2411
    %2418 = vmatprep.subr.mxu0 0.0
    %2419 = vmatpush1.msra.mxu0 0.0
    %2420 = vmatprep.subr.mxu0 0.0
    %2421 = vmatpush1.msra.mxu0 0.0
    %2422 = vmatprep.subr.mxu0 0.0
    %2423 = vmatpush1.msra.mxu0 0.0
    %2424 = vmatprep.subr.mxu0 0.0
    %2425 = vmatpush1.msra.mxu0 0.0
    %2426 = vmatprep.subr.mxu0 0.0
    %2427 = vmatpush1.msra.mxu0 0.0
    %2428 = vmatprep.subr.mxu0 0.0
    %2429 = vmatpush1.msra.mxu0 0.0
    %2430 = vmatprep.subr.mxu0 0.0
    %2431 = vmatpush1.msra.mxu0 0.0
    %2432 = vmatprep.subr.mxu0 0.0
    %2433 = vmatpush1.msra.mxu0 0.0
    %2434 = vmatprep.subr.mxu0 0.0
    %2435 = vmatpush1.msra.mxu0 0.0
    %2436 = vmatprep.subr.mxu0 0.0
    %2437 = vmatpush1.msra.mxu0 0.0
    %2438 = vmatprep.subr.mxu0 0.0
    %2439 = vmatpush1.msra.mxu0 0.0
    %2440 = vmatprep.subr.mxu0 0.0
    %2441 = vmatpush1.msra.mxu0 0.0
    %2442 = vmatprep.subr.mxu0 0.0
    %2443 = vmatpush1.msra.mxu0 0.0
    %2444 = vmatprep.subr.mxu0 0.0
    %2445 = vmatpush1.msra.mxu0 0.0
    %2446 = vmatprep.subr.mxu0 0.0
    %2447 = vmatpush1.msra.mxu0 0.0
    %2448 = vmatprep.subr.mxu0 0.0
    %2449 = vmatpush1.msra.mxu0 0.0
    %2450 = vmatprep.subr.mxu0 0.0
    %2451 = vmatpush1.msra.mxu0 0.0
    %2452 = vmatprep.subr.mxu0 0.0
    %2453 = vmatpush1.msra.mxu0 0.0
    %2454 = vmatprep.subr.mxu0 0.0
    %2455 = vmatpush1.msra.mxu0 0.0
    %2456 = vmatprep.subr.mxu0 0.0
    %2457 = vmatpush1.msra.mxu0 0.0
    %2458 = vmatprep.subr.mxu0 0.0
    %2459 = vmatpush1.msra.mxu0 0.0
    %2460 = vmatprep.subr.mxu0 0.0
    %2461 = vmatpush1.msra.mxu0 0.0
    %2462 = vmatprep.subr.mxu0 0.0
    %2463 = vmatpush1.msra.mxu0 0.0
    %2464 = vmatprep.subr.mxu0 0.0
    %2465 = vmatpush1.msra.mxu0 0.0
    %2466 = vmatprep.subr.mxu0 0.0
    %2467 = vmatpush1.msra.mxu0 0.0
    %2468 = vmatprep.subr.mxu0 0.0
    %2469 = vmatpush1.msra.mxu0 0.0
    %2470 = vmatprep.subr.mxu0 0.0
    %2471 = vmatpush1.msra.mxu0 0.0
    %2472 = vmatprep.subr.mxu0 0.0
    %2473 = vmatpush1.msra.mxu0 0.0
    %2474 = vmatprep.subr.mxu0 0.0
    %2475 = vmatpush1.msra.mxu0 0.0
    %2476 = vmatprep.subr.mxu0 0.0
    %2477 = vmatpush1.msra.mxu0 0.0
    %2478 = vmatprep.subr.mxu0 0.0
    %2479 = vmatpush1.msra.mxu0 0.0
    %2480 = vmatprep.mubr.f32.mxu0 0.0
    %2481 = vmatmul.mubr.f32.gmra.mrb[0].mxu0 %v2414
    %v2482 = vpop.f32.mrb[0].mxu0
    %v2483 = vadd.f32 0.0, %v2482
    %v2484 = vpop.f32.mrb[0].mxu0
    %2485 = vdwg.mxu0
    %2486 = vrot.lane.b32.xlu0 %v1905, 88
    %v2487 = vpop.permute.xlu0 %2486
    %v2490 = vsel %vm227, %v2403, 0
    %2492 = vmatprep.subr.mxu0 0.0
    %2493 = vmatpush1.msra.mxu0 %v2487
    %2494 = vmatprep.subr.mxu0 0.0
    %2495 = vmatpush1.msra.mxu0 0.0
    %2496 = vmatprep.subr.mxu0 0.0
    %2497 = vmatpush1.msra.mxu0 0.0
    %2498 = vmatprep.subr.mxu0 0.0
    %2499 = vmatpush1.msra.mxu0 0.0
    %2500 = vmatprep.subr.mxu0 0.0
    %2501 = vmatpush1.msra.mxu0 0.0
    %2502 = vmatprep.subr.mxu0 0.0
    %2503 = vmatpush1.msra.mxu0 0.0
    %2504 = vmatprep.subr.mxu0 0.0
    %2505 = vmatpush1.msra.mxu0 0.0
    %2506 = vmatprep.subr.mxu0 0.0
    %2507 = vmatpush1.msra.mxu0 0.0
    %2508 = vmatprep.subr.mxu0 0.0
    %2509 = vmatpush1.msra.mxu0 0.0
    %2510 = vmatprep.subr.mxu0 0.0
    %2511 = vmatpush1.msra.mxu0 0.0
    %2512 = vmatprep.subr.mxu0 0.0
    %2513 = vmatpush1.msra.mxu0 0.0
    %2514 = vmatprep.subr.mxu0 0.0
    %2515 = vmatpush1.msra.mxu0 0.0
    %2516 = vmatprep.subr.mxu0 0.0
    %2517 = vmatpush1.msra.mxu0 0.0
    %2518 = vmatprep.subr.mxu0 0.0
    %2519 = vmatpush1.msra.mxu0 0.0
    %2520 = vmatprep.subr.mxu0 0.0
    %2521 = vmatpush1.msra.mxu0 0.0
    %2522 = vmatprep.subr.mxu0 0.0
    %2523 = vmatpush1.msra.mxu0 0.0
    %2524 = vmatprep.subr.mxu0 0.0
    %2525 = vmatpush1.msra.mxu0 0.0
    %2526 = vmatprep.subr.mxu0 0.0
    %2527 = vmatpush1.msra.mxu0 0.0
    %2528 = vmatprep.subr.mxu0 0.0
    %2529 = vmatpush1.msra.mxu0 0.0
    %2530 = vmatprep.subr.mxu0 0.0
    %2531 = vmatpush1.msra.mxu0 0.0
    %2532 = vmatprep.subr.mxu0 0.0
    %2533 = vmatpush1.msra.mxu0 0.0
    %2534 = vmatprep.subr.mxu0 0.0
    %2535 = vmatpush1.msra.mxu0 0.0
    %2536 = vmatprep.subr.mxu0 0.0
    %2537 = vmatpush1.msra.mxu0 0.0
    %2538 = vmatprep.subr.mxu0 0.0
    %2539 = vmatpush1.msra.mxu0 0.0
    %2540 = vmatprep.subr.mxu0 0.0
    %2541 = vmatpush1.msra.mxu0 0.0
    %2542 = vmatprep.subr.mxu0 0.0
    %2543 = vmatpush1.msra.mxu0 0.0
    %2544 = vmatprep.subr.mxu0 0.0
    %2545 = vmatpush1.msra.mxu0 0.0
    %2546 = vmatprep.subr.mxu0 0.0
    %2547 = vmatpush1.msra.mxu0 0.0
    %2548 = vmatprep.subr.mxu0 0.0
    %2549 = vmatpush1.msra.mxu0 0.0
    %2550 = vmatprep.subr.mxu0 0.0
    %2551 = vmatpush1.msra.mxu0 0.0
    %2552 = vmatprep.subr.mxu0 0.0
    %2553 = vmatpush1.msra.mxu0 0.0
    %2554 = vmatprep.subr.mxu0 0.0
    %2555 = vmatpush1.msra.mxu0 0.0
    %2556 = vmatprep.mubr.f32.mxu0 0.0
    %2557 = vmatmul.mubr.f32.gmra.mrb[0].mxu0 %v2490
    %v2558 = vpop.f32.mrb[0].mxu0
    %v2559 = vadd.f32 0.0, %v2558
    %v2560 = vpop.f32.mrb[0].mxu0
    %2561 = vdwg.mxu0
    %v2562 = vrcp.pop %v2406
    %v2563 = vmul.f32 %v2483, %v2562
    %v2564 = vrcp.pop %v2409
    %v2565 = vmul.f32 %v2559, %v2564
    %2568 = vrot.lane.b32.xlu0 %v2563, 8
    %v2569 = vpop.permute.xlu0 %2568
    %2570 = vrot.lane.b32.xlu0 %v2565, 8
    %v2571 = vpop.permute.xlu0 %2570
    %2574 = vst.msk [vmem:[#allocation2] sm:$0xff] %vm895, %v2569
    %2575 = vst.msk [vmem:[#allocation2 + $0x8] sm:$0xff] %vm895, %v2571
    %2576 = vrot.lane.b32.xlu0 %v1814, 112
    %v2577 = vpop.permute.xlu0 %2576
    %2578 = vrot.lane.b32.xlu0 %v1900, 112
    %v2579 = vpop.permute.xlu0 %2578
    %v2580 = vsel %vm227, %v2577, 0
    %v2582 = vsel %vm227, %v2579, 0
    %2584 = vmatprep.subr.mxu0 0.0
    %2585 = vmatpush1.xpose.msra.mxu0 %v2582
    %2586 = vmatprep.subr.mxu0 0.0
    %2587 = vmatpush1.xpose.msra.mxu0 0.0
    %2588 = vmatprep.subr.mxu0 0.0
    %2589 = vmatpush1.xpose.msra.mxu0 0.0
    %2590 = vmatprep.subr.mxu0 0.0
    %2591 = vmatpush1.xpose.msra.mxu0 0.0
    %2592 = vmatprep.subr.mxu0 0.0
    %2593 = vmatpush1.xpose.msra.mxu0 0.0
    %2594 = vmatprep.subr.mxu0 0.0
    %2595 = vmatpush1.xpose.msra.mxu0 0.0
    %2596 = vmatprep.subr.mxu0 0.0
    %2597 = vmatpush1.xpose.msra.mxu0 0.0
    %2598 = vmatprep.subr.mxu0 0.0
    %2599 = vmatpush1.xpose.msra.mxu0 0.0
    %2600 = vmatprep.subr.mxu0 0.0
    %2601 = vmatpush1.xpose.msra.mxu0 0.0
    %2602 = vmatprep.subr.mxu0 0.0
    %2603 = vmatpush1.xpose.msra.mxu0 0.0
    %2604 = vmatprep.subr.mxu0 0.0
    %2605 = vmatpush1.xpose.msra.mxu0 0.0
    %2606 = vmatprep.subr.mxu0 0.0
    %2607 = vmatpush1.xpose.msra.mxu0 0.0
    %2608 = vmatprep.subr.mxu0 0.0
    %2609 = vmatpush1.xpose.msra.mxu0 0.0
    %2610 = vmatprep.subr.mxu0 0.0
    %2611 = vmatpush1.xpose.msra.mxu0 0.0
    %2612 = vmatprep.subr.mxu0 0.0
    %2613 = vmatpush1.xpose.msra.mxu0 0.0
    %2614 = vmatprep.subr.mxu0 0.0
    %2615 = vmatpush1.xpose.msra.mxu0 0.0
    %2616 = vmatprep.subr.mxu0 0.0
    %2617 = vmatpush1.xpose.msra.mxu0 0.0
    %2618 = vmatprep.subr.mxu0 0.0
    %2619 = vmatpush1.xpose.msra.mxu0 0.0
    %2620 = vmatprep.subr.mxu0 0.0
    %2621 = vmatpush1.xpose.msra.mxu0 0.0
    %2622 = vmatprep.subr.mxu0 0.0
    %2623 = vmatpush1.xpose.msra.mxu0 0.0
    %2624 = vmatprep.subr.mxu0 0.0
    %2625 = vmatpush1.xpose.msra.mxu0 0.0
    %2626 = vmatprep.subr.mxu0 0.0
    %2627 = vmatpush1.xpose.msra.mxu0 0.0
    %2628 = vmatprep.subr.mxu0 0.0
    %2629 = vmatpush1.xpose.msra.mxu0 0.0
    %2630 = vmatprep.subr.mxu0 0.0
    %2631 = vmatpush1.xpose.msra.mxu0 0.0
    %2632 = vmatprep.subr.mxu0 0.0
    %2633 = vmatpush1.xpose.msra.mxu0 0.0
    %2634 = vmatprep.subr.mxu0 0.0
    %2635 = vmatpush1.xpose.msra.mxu0 0.0
    %2636 = vmatprep.subr.mxu0 0.0
    %2637 = vmatpush1.xpose.msra.mxu0 0.0
    %2638 = vmatprep.subr.mxu0 0.0
    %2639 = vmatpush1.xpose.msra.mxu0 0.0
    %2640 = vmatprep.subr.mxu0 0.0
    %2641 = vmatpush1.xpose.msra.mxu0 0.0
    %2642 = vmatprep.subr.mxu0 0.0
    %2643 = vmatpush1.xpose.msra.mxu0 0.0
    %2644 = vmatprep.subr.mxu0 0.0
    %2645 = vmatpush1.xpose.msra.mxu0 0.0
    %2646 = vmatprep.subr.mxu0 0.0
    %2647 = vmatpush1.xpose.msra.mxu0 0.0
    %2648 = vmatprep.mubr.f32.mxu0 0.0
    %2649 = vmatmul.mubr.f32.gmra.mrb[0].mxu0 %v2580
    %v2650 = vpop.f32.mrb[0].mxu0
    %v2651 = vadd.f32 0.0, %v2650
    %v2652 = vpop.f32.mrb[0].mxu0
    %2653 = vdwg.mxu0
    %2654 = vrot.lane.b32.xlu0 %v1815, 112
    %v2655 = vpop.permute.xlu0 %2654
    %2656 = vrot.lane.b32.xlu0 %v1905, 112
    %v2657 = vpop.permute.xlu0 %2656
    %v2658 = vsel %vm227, %v2655, 0
    %v2660 = vsel %vm227, %v2657, 0
    %2662 = vmatprep.subr.mxu0 0.0
    %2663 = vmatpush1.xpose.msra.mxu0 %v2660
    %2664 = vmatprep.subr.mxu0 0.0
    %2665 = vmatpush1.xpose.msra.mxu0 0.0
    %2666 = vmatprep.subr.mxu0 0.0
    %2667 = vmatpush1.xpose.msra.mxu0 0.0
    %2668 = vmatprep.subr.mxu0 0.0
    %2669 = vmatpush1.xpose.msra.mxu0 0.0
    %2670 = vmatprep.subr.mxu0 0.0
    %2671 = vmatpush1.xpose.msra.mxu0 0.0
    %2672 = vmatprep.subr.mxu0 0.0
    %2673 = vmatpush1.xpose.msra.mxu0 0.0
    %2674 = vmatprep.subr.mxu0 0.0
    %2675 = vmatpush1.xpose.msra.mxu0 0.0
    %2676 = vmatprep.subr.mxu0 0.0
    %2677 = vmatpush1.xpose.msra.mxu0 0.0
    %2678 = vmatprep.subr.mxu0 0.0
    %2679 = vmatpush1.xpose.msra.mxu0 0.0
    %2680 = vmatprep.subr.mxu0 0.0
    %2681 = vmatpush1.xpose.msra.mxu0 0.0
    %2682 = vmatprep.subr.mxu0 0.0
    %2683 = vmatpush1.xpose.msra.mxu0 0.0
    %2684 = vmatprep.subr.mxu0 0.0
    %2685 = vmatpush1.xpose.msra.mxu0 0.0
    %2686 = vmatprep.subr.mxu0 0.0
    %2687 = vmatpush1.xpose.msra.mxu0 0.0
    %2688 = vmatprep.subr.mxu0 0.0
    %2689 = vmatpush1.xpose.msra.mxu0 0.0
    %2690 = vmatprep.subr.mxu0 0.0
    %2691 = vmatpush1.xpose.msra.mxu0 0.0
    %2692 = vmatprep.subr.mxu0 0.0
    %2693 = vmatpush1.xpose.msra.mxu0 0.0
    %2694 = vmatprep.subr.mxu0 0.0
    %2695 = vmatpush1.xpose.msra.mxu0 0.0
    %2696 = vmatprep.subr.mxu0 0.0
    %2697 = vmatpush1.xpose.msra.mxu0 0.0
    %2698 = vmatprep.subr.mxu0 0.0
    %2699 = vmatpush1.xpose.msra.mxu0 0.0
    %2700 = vmatprep.subr.mxu0 0.0
    %2701 = vmatpush1.xpose.msra.mxu0 0.0
    %2702 = vmatprep.subr.mxu0 0.0
    %2703 = vmatpush1.xpose.msra.mxu0 0.0
    %2704 = vmatprep.subr.mxu0 0.0
    %2705 = vmatpush1.xpose.msra.mxu0 0.0
    %2706 = vmatprep.subr.mxu0 0.0
    %2707 = vmatpush1.xpose.msra.mxu0 0.0
    %2708 = vmatprep.subr.mxu0 0.0
    %2709 = vmatpush1.xpose.msra.mxu0 0.0
    %2710 = vmatprep.subr.mxu0 0.0
    %2711 = vmatpush1.xpose.msra.mxu0 0.0
    %2712 = vmatprep.subr.mxu0 0.0
    %2713 = vmatpush1.xpose.msra.mxu0 0.0
    %2714 = vmatprep.subr.mxu0 0.0
    %2715 = vmatpush1.xpose.msra.mxu0 0.0
    %2716 = vmatprep.subr.mxu0 0.0
    %2717 = vmatpush1.xpose.msra.mxu0 0.0
    %2718 = vmatprep.subr.mxu0 0.0
    %2719 = vmatpush1.xpose.msra.mxu0 0.0
    %2720 = vmatprep.subr.mxu0 0.0
    %2721 = vmatpush1.xpose.msra.mxu0 0.0
    %2722 = vmatprep.subr.mxu0 0.0
    %2723 = vmatpush1.xpose.msra.mxu0 0.0
    %2724 = vmatprep.subr.mxu0 0.0
    %2725 = vmatpush1.xpose.msra.mxu0 0.0
    %2726 = vmatprep.mubr.f32.mxu0 0.0
    %2727 = vmatmul.mubr.f32.gmra.mrb[0].mxu0 %v2658
    %v2728 = vpop.f32.mrb[0].mxu0
    %v2729 = vadd.f32 0.0, %v2728
    %v2730 = vpop.f32.mrb[0].mxu0
    %2731 = vdwg.mxu0
    %v2732 = vsel %vm227, %v2651, -inf
    %2733 = vmax.xlane.f32.xlu0 %v2732
    %v2734 = vpop.xlane.xlu0 %2733
    %v2735 = vsel %vm227, %v2729, -inf
    %2736 = vmax.xlane.f32.xlu0 %v2735
    %v2737 = vpop.xlane.xlu0 %2736
    %v2738 = vsub.f32 %v2651, %v2734
    %v2739 = vsub.f32 %v2729, %v2737
    %v2740 = vmul.f32 %v2738, 1.442695
    %v2741 = vpow.pop %v2740
    %v2742 = vmul.f32 %v2739, 1.442695
    %v2743 = vpow.pop %v2742
    %v2744 = vsel %vm227, %v2741, 0.0
    %2745 = vadd.xlane.f32.xlu0 %v2744
    %v2746 = vpop.xlane.xlu0 %2745
    %v2747 = vsel %vm227, %v2743, 0.0
    %2748 = vadd.xlane.f32.xlu0 %v2747
    %v2749 = vpop.xlane.xlu0 %2748
    %2750 = vrot.lane.b32.xlu0 %v1900, 80
    %v2751 = vpop.permute.xlu0 %2750
    %v2754 = vsel %vm227, %v2741, 0
    %2756 = vmatprep.subr.mxu0 0.0
    %2757 = vmatpush1.msra.mxu0 %v2751
    %2758 = vmatprep.subr.mxu0 0.0
    %2759 = vmatpush1.msra.mxu0 0.0
    %2760 = vmatprep.subr.mxu0 0.0
    %2761 = vmatpush1.msra.mxu0 0.0
    %2762 = vmatprep.subr.mxu0 0.0
    %2763 = vmatpush1.msra.mxu0 0.0
    %2764 = vmatprep.subr.mxu0 0.0
    %2765 = vmatpush1.msra.mxu0 0.0
    %2766 = vmatprep.subr.mxu0 0.0
    %2767 = vmatpush1.msra.mxu0 0.0
    %2768 = vmatprep.subr.mxu0 0.0
    %2769 = vmatpush1.msra.mxu0 0.0
    %2770 = vmatprep.subr.mxu0 0.0
    %2771 = vmatpush1.msra.mxu0 0.0
    %2772 = vmatprep.subr.mxu0 0.0
    %2773 = vmatpush1.msra.mxu0 0.0
    %2774 = vmatprep.subr.mxu0 0.0
    %2775 = vmatpush1.msra.mxu0 0.0
    %2776 = vmatprep.subr.mxu0 0.0
    %2777 = vmatpush1.msra.mxu0 0.0
    %2778 = vmatprep.subr.mxu0 0.0
    %2779 = vmatpush1.msra.mxu0 0.0
    %2780 = vmatprep.subr.mxu0 0.0
    %2781 = vmatpush1.msra.mxu0 0.0
    %2782 = vmatprep.subr.mxu0 0.0
    %2783 = vmatpush1.msra.mxu0 0.0
    %2784 = vmatprep.subr.mxu0 0.0
    %2785 = vmatpush1.msra.mxu0 0.0
    %2786 = vmatprep.subr.mxu0 0.0
    %2787 = vmatpush1.msra.mxu0 0.0
    %2788 = vmatprep.subr.mxu0 0.0
    %2789 = vmatpush1.msra.mxu0 0.0
    %2790 = vmatprep.subr.mxu0 0.0
    %2791 = vmatpush1.msra.mxu0 0.0
    %2792 = vmatprep.subr.mxu0 0.0
    %2793 = vmatpush1.msra.mxu0 0.0
    %2794 = vmatprep.subr.mxu0 0.0
    %2795 = vmatpush1.msra.mxu0 0.0
    %2796 = vmatprep.subr.mxu0 0.0
    %2797 = vmatpush1.msra.mxu0 0.0
    %2798 = vmatprep.subr.mxu0 0.0
    %2799 = vmatpush1.msra.mxu0 0.0
    %2800 = vmatprep.subr.mxu0 0.0
    %2801 = vmatpush1.msra.mxu0 0.0
    %2802 = vmatprep.subr.mxu0 0.0
    %2803 = vmatpush1.msra.mxu0 0.0
    %2804 = vmatprep.subr.mxu0 0.0
    %2805 = vmatpush1.msra.mxu0 0.0
    %2806 = vmatprep.subr.mxu0 0.0
    %2807 = vmatpush1.msra.mxu0 0.0
    %2808 = vmatprep.subr.mxu0 0.0
    %2809 = vmatpush1.msra.mxu0 0.0
    %2810 = vmatprep.subr.mxu0 0.0
    %2811 = vmatpush1.msra.mxu0 0.0
    %2812 = vmatprep.subr.mxu0 0.0
    %2813 = vmatpush1.msra.mxu0 0.0
    %2814 = vmatprep.subr.mxu0 0.0
    %2815 = vmatpush1.msra.mxu0 0.0
    %2816 = vmatprep.subr.mxu0 0.0
    %2817 = vmatpush1.msra.mxu0 0.0
    %2818 = vmatprep.subr.mxu0 0.0
    %2819 = vmatpush1.msra.mxu0 0.0
    %2820 = vmatprep.mubr.f32.mxu0 0.0
    %2821 = vmatmul.mubr.f32.gmra.mrb[0].mxu0 %v2754
    %v2822 = vpop.f32.mrb[0].mxu0
    %v2823 = vadd.f32 0.0, %v2822
    %v2824 = vpop.f32.mrb[0].mxu0
    %2825 = vdwg.mxu0
    %2826 = vrot.lane.b32.xlu0 %v1905, 80
    %v2827 = vpop.permute.xlu0 %2826
    %v2830 = vsel %vm227, %v2743, 0
    %2832 = vmatprep.subr.mxu0 0.0
    %2833 = vmatpush1.msra.mxu0 %v2827
    %2834 = vmatprep.subr.mxu0 0.0
    %2835 = vmatpush1.msra.mxu0 0.0
    %2836 = vmatprep.subr.mxu0 0.0
    %2837 = vmatpush1.msra.mxu0 0.0
    %2838 = vmatprep.subr.mxu0 0.0
    %2839 = vmatpush1.msra.mxu0 0.0
    %2840 = vmatprep.subr.mxu0 0.0
    %2841 = vmatpush1.msra.mxu0 0.0
    %2842 = vmatprep.subr.mxu0 0.0
    %2843 = vmatpush1.msra.mxu0 0.0
    %2844 = vmatprep.subr.mxu0 0.0
    %2845 = vmatpush1.msra.mxu0 0.0
    %2846 = vmatprep.subr.mxu0 0.0
    %2847 = vmatpush1.msra.mxu0 0.0
    %2848 = vmatprep.subr.mxu0 0.0
    %2849 = vmatpush1.msra.mxu0 0.0
    %2850 = vmatprep.subr.mxu0 0.0
    %2851 = vmatpush1.msra.mxu0 0.0
    %2852 = vmatprep.subr.mxu0 0.0
    %2853 = vmatpush1.msra.mxu0 0.0
    %2854 = vmatprep.subr.mxu0 0.0
    %2855 = vmatpush1.msra.mxu0 0.0
    %2856 = vmatprep.subr.mxu0 0.0
    %2857 = vmatpush1.msra.mxu0 0.0
    %2858 = vmatprep.subr.mxu0 0.0
    %2859 = vmatpush1.msra.mxu0 0.0
    %2860 = vmatprep.subr.mxu0 0.0
    %2861 = vmatpush1.msra.mxu0 0.0
    %2862 = vmatprep.subr.mxu0 0.0
    %2863 = vmatpush1.msra.mxu0 0.0
    %2864 = vmatprep.subr.mxu0 0.0
    %2865 = vmatpush1.msra.mxu0 0.0
    %2866 = vmatprep.subr.mxu0 0.0
    %2867 = vmatpush1.msra.mxu0 0.0
    %2868 = vmatprep.subr.mxu0 0.0
    %2869 = vmatpush1.msra.mxu0 0.0
    %2870 = vmatprep.subr.mxu0 0.0
    %2871 = vmatpush1.msra.mxu0 0.0
    %2872 = vmatprep.subr.mxu0 0.0
    %2873 = vmatpush1.msra.mxu0 0.0
    %2874 = vmatprep.subr.mxu0 0.0
    %2875 = vmatpush1.msra.mxu0 0.0
    %2876 = vmatprep.subr.mxu0 0.0
    %2877 = vmatpush1.msra.mxu0 0.0
    %2878 = vmatprep.subr.mxu0 0.0
    %2879 = vmatpush1.msra.mxu0 0.0
    %2880 = vmatprep.subr.mxu0 0.0
    %2881 = vmatpush1.msra.mxu0 0.0
    %2882 = vmatprep.subr.mxu0 0.0
    %2883 = vmatpush1.msra.mxu0 0.0
    %2884 = vmatprep.subr.mxu0 0.0
    %2885 = vmatpush1.msra.mxu0 0.0
    %2886 = vmatprep.subr.mxu0 0.0
    %2887 = vmatpush1.msra.mxu0 0.0
    %2888 = vmatprep.subr.mxu0 0.0
    %2889 = vmatpush1.msra.mxu0 0.0
    %2890 = vmatprep.subr.mxu0 0.0
    %2891 = vmatpush1.msra.mxu0 0.0
    %2892 = vmatprep.subr.mxu0 0.0
    %2893 = vmatpush1.msra.mxu0 0.0
    %2894 = vmatprep.subr.mxu0 0.0
    %2895 = vmatpush1.msra.mxu0 0.0
    %2896 = vmatprep.mubr.f32.mxu0 0.0
    %2897 = vmatmul.mubr.f32.gmra.mrb[0].mxu0 %v2830
    %v2898 = vpop.f32.mrb[0].mxu0
    %v2899 = vadd.f32 0.0, %v2898
    %v2900 = vpop.f32.mrb[0].mxu0
    %2901 = vdwg.mxu0
    %v2902 = vrcp.pop %v2746
    %v2903 = vmul.f32 %v2823, %v2902
    %v2904 = vrcp.pop %v2749
    %v2905 = vmul.f32 %v2899, %v2904
    %2908 = vrot.lane.b32.xlu0 %v2903, 16
    %v2909 = vpop.permute.xlu0 %2908
    %2910 = vrot.lane.b32.xlu0 %v2905, 16
    %v2911 = vpop.permute.xlu0 %2910
    %2914 = vst.msk [vmem:[#allocation2] sm:$0xff] %vm1236, %v2909
    %2915 = vst.msk [vmem:[#allocation2 + $0x8] sm:$0xff] %vm1236, %v2911
    %2916 = vrot.lane.b32.xlu0 %v1814, 104
    %v2917 = vpop.permute.xlu0 %2916
    %2918 = vrot.lane.b32.xlu0 %v1900, 104
    %v2919 = vpop.permute.xlu0 %2918
    %v2920 = vsel %vm227, %v2917, 0
    %v2922 = vsel %vm227, %v2919, 0
    %2924 = vmatprep.subr.mxu0 0.0
    %2925 = vmatpush1.xpose.msra.mxu0 %v2922
    %2926 = vmatprep.subr.mxu0 0.0
    %2927 = vmatpush1.xpose.msra.mxu0 0.0
    %2928 = vmatprep.subr.mxu0 0.0
    %2929 = vmatpush1.xpose.msra.mxu0 0.0
    %2930 = vmatprep.subr.mxu0 0.0
    %2931 = vmatpush1.xpose.msra.mxu0 0.0
    %2932 = vmatprep.subr.mxu0 0.0
    %2933 = vmatpush1.xpose.msra.mxu0 0.0
    %2934 = vmatprep.subr.mxu0 0.0
    %2935 = vmatpush1.xpose.msra.mxu0 0.0
    %2936 = vmatprep.subr.mxu0 0.0
    %2937 = vmatpush1.xpose.msra.mxu0 0.0
    %2938 = vmatprep.subr.mxu0 0.0
    %2939 = vmatpush1.xpose.msra.mxu0 0.0
    %2940 = vmatprep.subr.mxu0 0.0
    %2941 = vmatpush1.xpose.msra.mxu0 0.0
    %2942 = vmatprep.subr.mxu0 0.0
    %2943 = vmatpush1.xpose.msra.mxu0 0.0
    %2944 = vmatprep.subr.mxu0 0.0
    %2945 = vmatpush1.xpose.msra.mxu0 0.0
    %2946 = vmatprep.subr.mxu0 0.0
    %2947 = vmatpush1.xpose.msra.mxu0 0.0
    %2948 = vmatprep.subr.mxu0 0.0
    %2949 = vmatpush1.xpose.msra.mxu0 0.0
    %2950 = vmatprep.subr.mxu0 0.0
    %2951 = vmatpush1.xpose.msra.mxu0 0.0
    %2952 = vmatprep.subr.mxu0 0.0
    %2953 = vmatpush1.xpose.msra.mxu0 0.0
    %2954 = vmatprep.subr.mxu0 0.0
    %2955 = vmatpush1.xpose.msra.mxu0 0.0
    %2956 = vmatprep.subr.mxu0 0.0
    %2957 = vmatpush1.xpose.msra.mxu0 0.0
    %2958 = vmatprep.subr.mxu0 0.0
    %2959 = vmatpush1.xpose.msra.mxu0 0.0
    %2960 = vmatprep.subr.mxu0 0.0
    %2961 = vmatpush1.xpose.msra.mxu0 0.0
    %2962 = vmatprep.subr.mxu0 0.0
    %2963 = vmatpush1.xpose.msra.mxu0 0.0
    %2964 = vmatprep.subr.mxu0 0.0
    %2965 = vmatpush1.xpose.msra.mxu0 0.0
    %2966 = vmatprep.subr.mxu0 0.0
    %2967 = vmatpush1.xpose.msra.mxu0 0.0
    %2968 = vmatprep.subr.mxu0 0.0
    %2969 = vmatpush1.xpose.msra.mxu0 0.0
    %2970 = vmatprep.subr.mxu0 0.0
    %2971 = vmatpush1.xpose.msra.mxu0 0.0
    %2972 = vmatprep.subr.mxu0 0.0
    %2973 = vmatpush1.xpose.msra.mxu0 0.0
    %2974 = vmatprep.subr.mxu0 0.0
    %2975 = vmatpush1.xpose.msra.mxu0 0.0
    %2976 = vmatprep.subr.mxu0 0.0
    %2977 = vmatpush1.xpose.msra.mxu0 0.0
    %2978 = vmatprep.subr.mxu0 0.0
    %2979 = vmatpush1.xpose.msra.mxu0 0.0
    %2980 = vmatprep.subr.mxu0 0.0
    %2981 = vmatpush1.xpose.msra.mxu0 0.0
    %2982 = vmatprep.subr.mxu0 0.0
    %2983 = vmatpush1.xpose.msra.mxu0 0.0
    %2984 = vmatprep.subr.mxu0 0.0
    %2985 = vmatpush1.xpose.msra.mxu0 0.0
    %2986 = vmatprep.subr.mxu0 0.0
    %2987 = vmatpush1.xpose.msra.mxu0 0.0
    %2988 = vmatprep.mubr.f32.mxu0 0.0
    %2989 = vmatmul.mubr.f32.gmra.mrb[0].mxu0 %v2920
    %v2990 = vpop.f32.mrb[0].mxu0
    %v2991 = vadd.f32 0.0, %v2990
    %v2992 = vpop.f32.mrb[0].mxu0
    %2993 = vdwg.mxu0
    %2994 = vrot.lane.b32.xlu0 %v1815, 104
    %v2995 = vpop.permute.xlu0 %2994
    %2996 = vrot.lane.b32.xlu0 %v1905, 104
    %v2997 = vpop.permute.xlu0 %2996
    %v2998 = vsel %vm227, %v2995, 0
    %v3000 = vsel %vm227, %v2997, 0
    %3002 = vmatprep.subr.mxu0 0.0
    %3003 = vmatpush1.xpose.msra.mxu0 %v3000
    %3004 = vmatprep.subr.mxu0 0.0
    %3005 = vmatpush1.xpose.msra.mxu0 0.0
    %3006 = vmatprep.subr.mxu0 0.0
    %3007 = vmatpush1.xpose.msra.mxu0 0.0
    %3008 = vmatprep.subr.mxu0 0.0
    %3009 = vmatpush1.xpose.msra.mxu0 0.0
    %3010 = vmatprep.subr.mxu0 0.0
    %3011 = vmatpush1.xpose.msra.mxu0 0.0
    %3012 = vmatprep.subr.mxu0 0.0
    %3013 = vmatpush1.xpose.msra.mxu0 0.0
    %3014 = vmatprep.subr.mxu0 0.0
    %3015 = vmatpush1.xpose.msra.mxu0 0.0
    %3016 = vmatprep.subr.mxu0 0.0
    %3017 = vmatpush1.xpose.msra.mxu0 0.0
    %3018 = vmatprep.subr.mxu0 0.0
    %3019 = vmatpush1.xpose.msra.mxu0 0.0
    %3020 = vmatprep.subr.mxu0 0.0
    %3021 = vmatpush1.xpose.msra.mxu0 0.0
    %3022 = vmatprep.subr.mxu0 0.0
    %3023 = vmatpush1.xpose.msra.mxu0 0.0
    %3024 = vmatprep.subr.mxu0 0.0
    %3025 = vmatpush1.xpose.msra.mxu0 0.0
    %3026 = vmatprep.subr.mxu0 0.0
    %3027 = vmatpush1.xpose.msra.mxu0 0.0
    %3028 = vmatprep.subr.mxu0 0.0
    %3029 = vmatpush1.xpose.msra.mxu0 0.0
    %3030 = vmatprep.subr.mxu0 0.0
    %3031 = vmatpush1.xpose.msra.mxu0 0.0
    %3032 = vmatprep.subr.mxu0 0.0
    %3033 = vmatpush1.xpose.msra.mxu0 0.0
    %3034 = vmatprep.subr.mxu0 0.0
    %3035 = vmatpush1.xpose.msra.mxu0 0.0
    %3036 = vmatprep.subr.mxu0 0.0
    %3037 = vmatpush1.xpose.msra.mxu0 0.0
    %3038 = vmatprep.subr.mxu0 0.0
    %3039 = vmatpush1.xpose.msra.mxu0 0.0
    %3040 = vmatprep.subr.mxu0 0.0
    %3041 = vmatpush1.xpose.msra.mxu0 0.0
    %3042 = vmatprep.subr.mxu0 0.0
    %3043 = vmatpush1.xpose.msra.mxu0 0.0
    %3044 = vmatprep.subr.mxu0 0.0
    %3045 = vmatpush1.xpose.msra.mxu0 0.0
    %3046 = vmatprep.subr.mxu0 0.0
    %3047 = vmatpush1.xpose.msra.mxu0 0.0
    %3048 = vmatprep.subr.mxu0 0.0
    %3049 = vmatpush1.xpose.msra.mxu0 0.0
    %3050 = vmatprep.subr.mxu0 0.0
    %3051 = vmatpush1.xpose.msra.mxu0 0.0
    %3052 = vmatprep.subr.mxu0 0.0
    %3053 = vmatpush1.xpose.msra.mxu0 0.0
    %3054 = vmatprep.subr.mxu0 0.0
    %3055 = vmatpush1.xpose.msra.mxu0 0.0
    %3056 = vmatprep.subr.mxu0 0.0
    %3057 = vmatpush1.xpose.msra.mxu0 0.0
    %3058 = vmatprep.subr.mxu0 0.0
    %3059 = vmatpush1.xpose.msra.mxu0 0.0
    %3060 = vmatprep.subr.mxu0 0.0
    %3061 = vmatpush1.xpose.msra.mxu0 0.0
    %3062 = vmatprep.subr.mxu0 0.0
    %3063 = vmatpush1.xpose.msra.mxu0 0.0
    %3064 = vmatprep.subr.mxu0 0.0
    %3065 = vmatpush1.xpose.msra.mxu0 0.0
    %3066 = vmatprep.mubr.f32.mxu0 0.0
    %3067 = vmatmul.mubr.f32.gmra.mrb[0].mxu0 %v2998
    %v3068 = vpop.f32.mrb[0].mxu0
    %v3069 = vadd.f32 0.0, %v3068
    %v3070 = vpop.f32.mrb[0].mxu0
    %3071 = vdwg.mxu0
    %v3072 = vsel %vm227, %v2991, -inf
    %3073 = vmax.xlane.f32.xlu0 %v3072
    %v3074 = vpop.xlane.xlu0 %3073
    %v3075 = vsel %vm227, %v3069, -inf
    %3076 = vmax.xlane.f32.xlu0 %v3075
    %v3077 = vpop.xlane.xlu0 %3076
    %v3078 = vsub.f32 %v2991, %v3074
    %v3079 = vsub.f32 %v3069, %v3077
    %v3080 = vmul.f32 %v3078, 1.442695
    %v3081 = vpow.pop %v3080
    %v3082 = vmul.f32 %v3079, 1.442695
    %v3083 = vpow.pop %v3082
    %v3084 = vsel %vm227, %v3081, 0.0
    %3085 = vadd.xlane.f32.xlu0 %v3084
    %v3086 = vpop.xlane.xlu0 %3085
    %v3087 = vsel %vm227, %v3083, 0.0
    %3088 = vadd.xlane.f32.xlu0 %v3087
    %v3089 = vpop.xlane.xlu0 %3088
    %3090 = vrot.lane.b32.xlu0 %v1900, 72
    %v3091 = vpop.permute.xlu0 %3090
    %v3094 = vsel %vm227, %v3081, 0
    %3096 = vmatprep.subr.mxu0 0.0
    %3097 = vmatpush1.msra.mxu0 %v3091
    %3098 = vmatprep.subr.mxu0 0.0
    %3099 = vmatpush1.msra.mxu0 0.0
    %3100 = vmatprep.subr.mxu0 0.0
    %3101 = vmatpush1.msra.mxu0 0.0
    %3102 = vmatprep.subr.mxu0 0.0
    %3103 = vmatpush1.msra.mxu0 0.0
    %3104 = vmatprep.subr.mxu0 0.0
    %3105 = vmatpush1.msra.mxu0 0.0
    %3106 = vmatprep.subr.mxu0 0.0
    %3107 = vmatpush1.msra.mxu0 0.0
    %3108 = vmatprep.subr.mxu0 0.0
    %3109 = vmatpush1.msra.mxu0 0.0
    %3110 = vmatprep.subr.mxu0 0.0
    %3111 = vmatpush1.msra.mxu0 0.0
    %3112 = vmatprep.subr.mxu0 0.0
    %3113 = vmatpush1.msra.mxu0 0.0
    %3114 = vmatprep.subr.mxu0 0.0
    %3115 = vmatpush1.msra.mxu0 0.0
    %3116 = vmatprep.subr.mxu0 0.0
    %3117 = vmatpush1.msra.mxu0 0.0
    %3118 = vmatprep.subr.mxu0 0.0
    %3119 = vmatpush1.msra.mxu0 0.0
    %3120 = vmatprep.subr.mxu0 0.0
    %3121 = vmatpush1.msra.mxu0 0.0
    %3122 = vmatprep.subr.mxu0 0.0
    %3123 = vmatpush1.msra.mxu0 0.0
    %3124 = vmatprep.subr.mxu0 0.0
    %3125 = vmatpush1.msra.mxu0 0.0
    %3126 = vmatprep.subr.mxu0 0.0
    %3127 = vmatpush1.msra.mxu0 0.0
    %3128 = vmatprep.subr.mxu0 0.0
    %3129 = vmatpush1.msra.mxu0 0.0
    %3130 = vmatprep.subr.mxu0 0.0
    %3131 = vmatpush1.msra.mxu0 0.0
    %3132 = vmatprep.subr.mxu0 0.0
    %3133 = vmatpush1.msra.mxu0 0.0
    %3134 = vmatprep.subr.mxu0 0.0
    %3135 = vmatpush1.msra.mxu0 0.0
    %3136 = vmatprep.subr.mxu0 0.0
    %3137 = vmatpush1.msra.mxu0 0.0
    %3138 = vmatprep.subr.mxu0 0.0
    %3139 = vmatpush1.msra.mxu0 0.0
    %3140 = vmatprep.subr.mxu0 0.0
    %3141 = vmatpush1.msra.mxu0 0.0
    %3142 = vmatprep.subr.mxu0 0.0
    %3143 = vmatpush1.msra.mxu0 0.0
    %3144 = vmatprep.subr.mxu0 0.0
    %3145 = vmatpush1.msra.mxu0 0.0
    %3146 = vmatprep.subr.mxu0 0.0
    %3147 = vmatpush1.msra.mxu0 0.0
    %3148 = vmatprep.subr.mxu0 0.0
    %3149 = vmatpush1.msra.mxu0 0.0
    %3150 = vmatprep.subr.mxu0 0.0
    %3151 = vmatpush1.msra.mxu0 0.0
    %3152 = vmatprep.subr.mxu0 0.0
    %3153 = vmatpush1.msra.mxu0 0.0
    %3154 = vmatprep.subr.mxu0 0.0
    %3155 = vmatpush1.msra.mxu0 0.0
    %3156 = vmatprep.subr.mxu0 0.0
    %3157 = vmatpush1.msra.mxu0 0.0
    %3158 = vmatprep.subr.mxu0 0.0
    %3159 = vmatpush1.msra.mxu0 0.0
    %3160 = vmatprep.mubr.f32.mxu0 0.0
    %3161 = vmatmul.mubr.f32.gmra.mrb[0].mxu0 %v3094
    %v3162 = vpop.f32.mrb[0].mxu0
    %v3163 = vadd.f32 0.0, %v3162
    %v3164 = vpop.f32.mrb[0].mxu0
    %3165 = vdwg.mxu0
    %3166 = vrot.lane.b32.xlu0 %v1905, 72
    %v3167 = vpop.permute.xlu0 %3166
    %v3170 = vsel %vm227, %v3083, 0
    %3172 = vmatprep.subr.mxu0 0.0
    %3173 = vmatpush1.msra.mxu0 %v3167
    %3174 = vmatprep.subr.mxu0 0.0
    %3175 = vmatpush1.msra.mxu0 0.0
    %3176 = vmatprep.subr.mxu0 0.0
    %3177 = vmatpush1.msra.mxu0 0.0
    %3178 = vmatprep.subr.mxu0 0.0
    %3179 = vmatpush1.msra.mxu0 0.0
    %3180 = vmatprep.subr.mxu0 0.0
    %3181 = vmatpush1.msra.mxu0 0.0
    %3182 = vmatprep.subr.mxu0 0.0
    %3183 = vmatpush1.msra.mxu0 0.0
    %3184 = vmatprep.subr.mxu0 0.0
    %3185 = vmatpush1.msra.mxu0 0.0
    %3186 = vmatprep.subr.mxu0 0.0
    %3187 = vmatpush1.msra.mxu0 0.0
    %3188 = vmatprep.subr.mxu0 0.0
    %3189 = vmatpush1.msra.mxu0 0.0
    %3190 = vmatprep.subr.mxu0 0.0
    %3191 = vmatpush1.msra.mxu0 0.0
    %3192 = vmatprep.subr.mxu0 0.0
    %3193 = vmatpush1.msra.mxu0 0.0
    %3194 = vmatprep.subr.mxu0 0.0
    %3195 = vmatpush1.msra.mxu0 0.0
    %3196 = vmatprep.subr.mxu0 0.0
    %3197 = vmatpush1.msra.mxu0 0.0
    %3198 = vmatprep.subr.mxu0 0.0
    %3199 = vmatpush1.msra.mxu0 0.0
    %3200 = vmatprep.subr.mxu0 0.0
    %3201 = vmatpush1.msra.mxu0 0.0
    %3202 = vmatprep.subr.mxu0 0.0
    %3203 = vmatpush1.msra.mxu0 0.0
    %3204 = vmatprep.subr.mxu0 0.0
    %3205 = vmatpush1.msra.mxu0 0.0
    %3206 = vmatprep.subr.mxu0 0.0
    %3207 = vmatpush1.msra.mxu0 0.0
    %3208 = vmatprep.subr.mxu0 0.0
    %3209 = vmatpush1.msra.mxu0 0.0
    %3210 = vmatprep.subr.mxu0 0.0
    %3211 = vmatpush1.msra.mxu0 0.0
    %3212 = vmatprep.subr.mxu0 0.0
    %3213 = vmatpush1.msra.mxu0 0.0
    %3214 = vmatprep.subr.mxu0 0.0
    %3215 = vmatpush1.msra.mxu0 0.0
    %3216 = vmatprep.subr.mxu0 0.0
    %3217 = vmatpush1.msra.mxu0 0.0
    %3218 = vmatprep.subr.mxu0 0.0
    %3219 = vmatpush1.msra.mxu0 0.0
    %3220 = vmatprep.subr.mxu0 0.0
    %3221 = vmatpush1.msra.mxu0 0.0
    %3222 = vmatprep.subr.mxu0 0.0
    %3223 = vmatpush1.msra.mxu0 0.0
    %3224 = vmatprep.subr.mxu0 0.0
    %3225 = vmatpush1.msra.mxu0 0.0
    %3226 = vmatprep.subr.mxu0 0.0
    %3227 = vmatpush1.msra.mxu0 0.0
    %3228 = vmatprep.subr.mxu0 0.0
    %3229 = vmatpush1.msra.mxu0 0.0
    %3230 = vmatprep.subr.mxu0 0.0
    %3231 = vmatpush1.msra.mxu0 0.0
    %3232 = vmatprep.subr.mxu0 0.0
    %3233 = vmatpush1.msra.mxu0 0.0
    %3234 = vmatprep.subr.mxu0 0.0
    %3235 = vmatpush1.msra.mxu0 0.0
    %3236 = vmatprep.mubr.f32.mxu0 0.0
    %3237 = vmatmul.mubr.f32.gmra.mrb[0].mxu0 %v3170
    %v3238 = vpop.f32.mrb[0].mxu0
    %v3239 = vadd.f32 0.0, %v3238
    %v3240 = vpop.f32.mrb[0].mxu0
    %3241 = vdwg.mxu0
    %v3242 = vrcp.pop %v3086
    %v3243 = vmul.f32 %v3163, %v3242
    %v3244 = vrcp.pop %v3089
    %v3245 = vmul.f32 %v3239, %v3244
    %3248 = vrot.lane.b32.xlu0 %v3243, 24
    %v3249 = vpop.permute.xlu0 %3248
    %3250 = vrot.lane.b32.xlu0 %v3245, 24
    %v3251 = vpop.permute.xlu0 %3250
    %3254 = vst.msk [vmem:[#allocation2] sm:$0xff] %vm1577, %v3249
    %3255 = vst.msk [vmem:[#allocation2 + $0x8] sm:$0xff] %vm1577, %v3251
    %v3256 = vld [vmem:[#allocation2] sm:$0xff]
    %v3257 = vld [vmem:[#allocation2 + $0x8] sm:$0xff]
    %v3258 = vld [vmem:[#allocation9] sm:$0xff]
    %v3259 = vld [vmem:[#allocation9 + $0x8] sm:$0xff]
    %v3260 = vld [vmem:[#allocation9 + $0x10] sm:$0xff]
    %v3261 = vld [vmem:[#allocation9 + $0x18] sm:$0xff]
    %v3262 = vld [vmem:[%s11] sm:$0x1]
    %v3264 = vlaneseq
    %v3265 = vshrl.u32 %v3264, 7
    %v3266 = vsub.s32 0, %v3265
    %v3267 = vrot.slane %v3262, %v3266
    %v3270 = vsel %vm140, %v3256, 0
    %v3273 = vsel %vm140, %v3257, 0
    %3275 = vmatprep.subr.mxu0 0.0
    %3276 = vmatpush1.msra.mxu0 %v3258
    %3277 = vmatprep.subr.mxu0 0.0
    %3278 = vmatpush1.msra.mxu0 %v3259
    %3279 = vmatprep.subr.mxu0 0.0
    %3280 = vmatpush1.msra.mxu0 %v3260
    %3281 = vmatprep.subr.mxu0 0.0
    %3282 = vmatpush1.msra.mxu0 %v3261
    %3283 = vmatprep.subr.mxu0 0.0
    %3284 = vmatpush1.msra.mxu0 0.0
    %3285 = vmatprep.subr.mxu0 0.0
    %3286 = vmatpush1.msra.mxu0 0.0
    %3287 = vmatprep.subr.mxu0 0.0
    %3288 = vmatpush1.msra.mxu0 0.0
    %3289 = vmatprep.subr.mxu0 0.0
    %3290 = vmatpush1.msra.mxu0 0.0
    %3291 = vmatprep.subr.mxu0 0.0
    %3292 = vmatpush1.msra.mxu0 0.0
    %3293 = vmatprep.subr.mxu0 0.0
    %3294 = vmatpush1.msra.mxu0 0.0
    %3295 = vmatprep.subr.mxu0 0.0
    %3296 = vmatpush1.msra.mxu0 0.0
    %3297 = vmatprep.subr.mxu0 0.0
    %3298 = vmatpush1.msra.mxu0 0.0
    %3299 = vmatprep.subr.mxu0 0.0
    %3300 = vmatpush1.msra.mxu0 0.0
    %3301 = vmatprep.subr.mxu0 0.0
    %3302 = vmatpush1.msra.mxu0 0.0
    %3303 = vmatprep.subr.mxu0 0.0
    %3304 = vmatpush1.msra.mxu0 0.0
    %3305 = vmatprep.subr.mxu0 0.0
    %3306 = vmatpush1.msra.mxu0 0.0
    %3307 = vmatprep.subr.mxu0 0.0
    %3308 = vmatpush1.msra.mxu0 0.0
    %3309 = vmatprep.subr.mxu0 0.0
    %3310 = vmatpush1.msra.mxu0 0.0
    %3311 = vmatprep.subr.mxu0 0.0
    %3312 = vmatpush1.msra.mxu0 0.0
    %3313 = vmatprep.subr.mxu0 0.0
    %3314 = vmatpush1.msra.mxu0 0.0
    %3315 = vmatprep.subr.mxu0 0.0
    %3316 = vmatpush1.msra.mxu0 0.0
    %3317 = vmatprep.subr.mxu0 0.0
    %3318 = vmatpush1.msra.mxu0 0.0
    %3319 = vmatprep.subr.mxu0 0.0
    %3320 = vmatpush1.msra.mxu0 0.0
    %3321 = vmatprep.subr.mxu0 0.0
    %3322 = vmatpush1.msra.mxu0 0.0
    %3323 = vmatprep.subr.mxu0 0.0
    %3324 = vmatpush1.msra.mxu0 0.0
    %3325 = vmatprep.subr.mxu0 0.0
    %3326 = vmatpush1.msra.mxu0 0.0
    %3327 = vmatprep.subr.mxu0 0.0
    %3328 = vmatpush1.msra.mxu0 0.0
    %3329 = vmatprep.subr.mxu0 0.0
    %3330 = vmatpush1.msra.mxu0 0.0
    %3331 = vmatprep.subr.mxu0 0.0
    %3332 = vmatpush1.msra.mxu0 0.0
    %3333 = vmatprep.subr.mxu0 0.0
    %3334 = vmatpush1.msra.mxu0 0.0
    %3335 = vmatprep.subr.mxu0 0.0
    %3336 = vmatpush1.msra.mxu0 0.0
    %3337 = vmatprep.subr.mxu0 0.0
    %3338 = vmatpush1.msra.mxu0 0.0
    %3339 = vmatprep.mubr.f32.mxu0 0.0
    %3340 = vmatmul.mubr.f32.gmra.mrb[0].mxu0 %v3270
    %v3341 = vpop.f32.mrb[0].mxu0
    %v3342 = vadd.f32 %v3267, %v3341
    %v3343 = vpop.f32.mrb[0].mxu0
    %3344 = vmatprep.mubr.f32.mxu0 0.0
    %3345 = vmatmul.mubr.f32.gmra.mrb[0].mxu0 %v3273
    %v3346 = vpop.f32.mrb[0].mxu0
    %v3347 = vadd.f32 %v3267, %v3346
    %v3348 = vpop.f32.mrb[0].mxu0
    %3349 = vdwg.mxu0
    %v3350 = vadd.f32 %v1720, %v3342
    %v3351 = vadd.f32 %v1721, %v3347
    %s3352 = scalar_lea.vmem %s16, 2
    %v3353 = vld [vmem:[%s3352] sm:$0x1]
    %s3354 = scalar_lea.vmem %s16, 3
    %v3355 = vld [vmem:[%s3354] sm:$0x1]
    %v3356 = vsel %vm140, %v3350, 0.0
    %3357 = vadd.xlane.f32.xlu0 %v3356
    %v3358 = vpop.xlane.xlu0 %3357
    %v3359 = vsel %vm140, %v3351, 0.0
    %3360 = vadd.xlane.f32.xlu0 %v3359
    %v3361 = vpop.xlane.xlu0 %3360
    %v3362 = vmul.f32 %v3358, %v1685
    %v3363 = vmul.f32 %v3361, %v1685
    %v3364 = vsub.f32 %v3350, %v3362
    %v3365 = vsub.f32 %v3351, %v3363
    %v3366 = vmul.f32 %v3364, %v3364
    %v3367 = vmul.f32 %v3365, %v3365
    %v3368 = vsel %vm140, %v3366, 0.0
    %3369 = vadd.xlane.f32.xlu0 %v3368
    %v3370 = vpop.xlane.xlu0 %3369
    %v3371 = vsel %vm140, %v3367, 0.0
    %3372 = vadd.xlane.f32.xlu0 %v3371
    %v3373 = vpop.xlane.xlu0 %3372
    %v3374 = vmul.f32 %v3370, %v1685
    %v3375 = vmul.f32 %v3373, %v1685
    %v3376 = vadd.f32 %v3374, 1e-05
    %v3377 = vadd.f32 %v3375, 1e-05
    %v3378 = vrsqrt.pop %v3376
    %v3379 = vrsqrt.pop %v3377
    %v3380 = vmul.f32 %v3364, %v3378
    %v3381 = vmul.f32 %v3365, %v3379
    %v3383 = vlaneseq
    %v3384 = vshrl.u32 %v3383, 7
    %v3385 = vsub.s32 0, %v3384
    %v3386 = vrot.slane %v3353, %v3385
    %v3388 = vmul.f32 %v3380, %v3386
    %v3389 = vmul.f32 %v3381, %v3386
    %v3391 = vlaneseq
    %v3392 = vshrl.u32 %v3391, 7
    %v3393 = vsub.s32 0, %v3392
    %v3394 = vrot.slane %v3355, %v3393
    %v3396 = vadd.f32 %v3388, %v3394
    %v3397 = vadd.f32 %v3389, %v3394
    %v3398 = vld [vmem:[#allocation11] sm:$0xff]
    %v3399 = vld [vmem:[#allocation11 + $0x8] sm:$0xff]
    %v3400 = vld [vmem:[#allocation11 + $0x10] sm:$0xff]
    %v3401 = vld [vmem:[#allocation11 + $0x18] sm:$0xff]
    %v3402 = vld [vmem:[%s13] sm:$0x1]
    %v3404 = vlaneseq
    %v3405 = vshrl.u32 %v3404, 7
    %v3406 = vsub.s32 0, %v3405
    %v3407 = vrot.slane %v3402, %v3406
    %v3410 = vsel %vm140, %v3396, 0
    %v3413 = vsel %vm140, %v3397, 0
    %3415 = vmatprep.subr.mxu0 0.0
    %3416 = vmatpush1.msra.mxu0 %v3398
    %3417 = vmatprep.subr.mxu0 0.0
    %3418 = vmatpush1.msra.mxu0 %v3399
    %3419 = vmatprep.subr.mxu0 0.0
    %3420 = vmatpush1.msra.mxu0 %v3400
    %3421 = vmatprep.subr.mxu0 0.0
    %3422 = vmatpush1.msra.mxu0 %v3401
    %3423 = vmatprep.subr.mxu0 0.0
    %3424 = vmatpush1.msra.mxu0 0.0
    %3425 = vmatprep.subr.mxu0 0.0
    %3426 = vmatpush1.msra.mxu0 0.0
    %3427 = vmatprep.subr.mxu0 0.0
    %3428 = vmatpush1.msra.mxu0 0.0
    %3429 = vmatprep.subr.mxu0 0.0
    %3430 = vmatpush1.msra.mxu0 0.0
    %3431 = vmatprep.subr.mxu0 0.0
    %3432 = vmatpush1.msra.mxu0 0.0
    %3433 = vmatprep.subr.mxu0 0.0
    %3434 = vmatpush1.msra.mxu0 0.0
    %3435 = vmatprep.subr.mxu0 0.0
    %3436 = vmatpush1.msra.mxu0 0.0
    %3437 = vmatprep.subr.mxu0 0.0
    %3438 = vmatpush1.msra.mxu0 0.0
    %3439 = vmatprep.subr.mxu0 0.0
    %3440 = vmatpush1.msra.mxu0 0.0
    %3441 = vmatprep.subr.mxu0 0.0
    %3442 = vmatpush1.msra.mxu0 0.0
    %3443 = vmatprep.subr.mxu0 0.0
    %3444 = vmatpush1.msra.mxu0 0.0
    %3445 = vmatprep.subr.mxu0 0.0
    %3446 = vmatpush1.msra.mxu0 0.0
    %3447 = vmatprep.subr.mxu0 0.0
    %3448 = vmatpush1.msra.mxu0 0.0
    %3449 = vmatprep.subr.mxu0 0.0
    %3450 = vmatpush1.msra.mxu0 0.0
    %3451 = vmatprep.subr.mxu0 0.0
    %3452 = vmatpush1.msra.mxu0 0.0
    %3453 = vmatprep.subr.mxu0 0.0
    %3454 = vmatpush1.msra.mxu0 0.0
    %3455 = vmatprep.subr.mxu0 0.0
    %3456 = vmatpush1.msra.mxu0 0.0
    %3457 = vmatprep.subr.mxu0 0.0
    %3458 = vmatpush1.msra.mxu0 0.0
    %3459 = vmatprep.subr.mxu0 0.0
    %3460 = vmatpush1.msra.mxu0 0.0
    %3461 = vmatprep.subr.mxu0 0.0
    %3462 = vmatpush1.msra.mxu0 0.0
    %3463 = vmatprep.subr.mxu0 0.0
    %3464 = vmatpush1.msra.mxu0 0.0
    %3465 = vmatprep.subr.mxu0 0.0
    %3466 = vmatpush1.msra.mxu0 0.0
    %3467 = vmatprep.subr.mxu0 0.0
    %3468 = vmatpush1.msra.mxu0 0.0
    %3469 = vmatprep.subr.mxu0 0.0
    %3470 = vmatpush1.msra.mxu0 0.0
    %3471 = vmatprep.subr.mxu0 0.0
    %3472 = vmatpush1.msra.mxu0 0.0
    %3473 = vmatprep.subr.mxu0 0.0
    %3474 = vmatpush1.msra.mxu0 0.0
    %3475 = vmatprep.subr.mxu0 0.0
    %3476 = vmatpush1.msra.mxu0 0.0
    %3477 = vmatprep.subr.mxu0 0.0
    %3478 = vmatpush1.msra.mxu0 0.0
    %3479 = vmatprep.mubr.f32.mxu0 0.0
    %3480 = vmatmul.mubr.f32.gmra.mrb[0].mxu0 %v3410
    %v3481 = vpop.f32.mrb[0].mxu0
    %v3482 = vadd.f32 %v3407, %v3481
    %v3483 = vpop.f32.mrb[0].mxu0
    %3484 = vmatprep.mubr.f32.mxu0 0.0
    %3485 = vmatmul.mubr.f32.gmra.mrb[0].mxu0 %v3413
    %v3486 = vpop.f32.mrb[0].mxu0
    %v3487 = vadd.f32 %v3407, %v3486
    %v3488 = vpop.f32.mrb[0].mxu0
    %3489 = vdwg.mxu0
    %v3490 = vmax.f32 %v3482, 0.0
    %v3491 = vmax.f32 %v3487, 0.0
    %v3492 = vld [vmem:[%s14] sm:$0xff]
    %v3493 = vld [vmem:[%s14 + $0x8] sm:$0xff]
    %v3494 = vld [vmem:[%s14 + $0x10] sm:$0xff]
    %v3495 = vld [vmem:[%s14 + $0x18] sm:$0xff]
    %v3496 = vld [vmem:[%s14 + $0x20] sm:$0xff]
    %v3497 = vld [vmem:[%s14 + $0x28] sm:$0xff]
    %v3498 = vld [vmem:[%s14 + $0x30] sm:$0xff]
    %v3499 = vld [vmem:[%s14 + $0x38] sm:$0xff]
    %v3500 = vld [vmem:[%s15] sm:$0x1]
    %v3502 = vlaneseq
    %v3503 = vshrl.u32 %v3502, 7
    %v3504 = vsub.s32 0, %v3503
    %v3505 = vrot.slane %v3500, %v3504
    %vm3507 = vcmask 523264
    %v3509 = vsel %vm3507, %v3490, 0
    %v3512 = vsel %vm3507, %v3491, 0
    %3514 = vmatprep.subr.mxu0 0.0
    %3515 = vmatpush1.msra.mxu0 %v3492
    %3516 = vmatprep.subr.mxu0 0.0
    %3517 = vmatpush1.msra.mxu0 %v3493
    %3518 = vmatprep.subr.mxu0 0.0
    %3519 = vmatpush1.msra.mxu0 %v3494
    %3520 = vmatprep.subr.mxu0 0.0
    %3521 = vmatpush1.msra.mxu0 %v3495
    %3522 = vmatprep.subr.mxu0 0.0
    %3523 = vmatpush1.msra.mxu0 %v3496
    %3524 = vmatprep.subr.mxu0 0.0
    %3525 = vmatpush1.msra.mxu0 %v3497
    %3526 = vmatprep.subr.mxu0 0.0
    %3527 = vmatpush1.msra.mxu0 %v3498
    %3528 = vmatprep.subr.mxu0 0.0
    %3529 = vmatpush1.msra.mxu0 %v3499
    %3530 = vmatprep.subr.mxu0 0.0
    %3531 = vmatpush1.msra.mxu0 0.0
    %3532 = vmatprep.subr.mxu0 0.0
    %3533 = vmatpush1.msra.mxu0 0.0
    %3534 = vmatprep.subr.mxu0 0.0
    %3535 = vmatpush1.msra.mxu0 0.0
    %3536 = vmatprep.subr.mxu0 0.0
    %3537 = vmatpush1.msra.mxu0 0.0
    %3538 = vmatprep.subr.mxu0 0.0
    %3539 = vmatpush1.msra.mxu0 0.0
    %3540 = vmatprep.subr.mxu0 0.0
    %3541 = vmatpush1.msra.mxu0 0.0
    %3542 = vmatprep.subr.mxu0 0.0
    %3543 = vmatpush1.msra.mxu0 0.0
    %3544 = vmatprep.subr.mxu0 0.0
    %3545 = vmatpush1.msra.mxu0 0.0
    %3546 = vmatprep.subr.mxu0 0.0
    %3547 = vmatpush1.msra.mxu0 0.0
    %3548 = vmatprep.subr.mxu0 0.0
    %3549 = vmatpush1.msra.mxu0 0.0
    %3550 = vmatprep.subr.mxu0 0.0
    %3551 = vmatpush1.msra.mxu0 0.0
    %3552 = vmatprep.subr.mxu0 0.0
    %3553 = vmatpush1.msra.mxu0 0.0
    %3554 = vmatprep.subr.mxu0 0.0
    %3555 = vmatpush1.msra.mxu0 0.0
    %3556 = vmatprep.subr.mxu0 0.0
    %3557 = vmatpush1.msra.mxu0 0.0
    %3558 = vmatprep.subr.mxu0 0.0
    %3559 = vmatpush1.msra.mxu0 0.0
    %3560 = vmatprep.subr.mxu0 0.0
    %3561 = vmatpush1.msra.mxu0 0.0
    %3562 = vmatprep.subr.mxu0 0.0
    %3563 = vmatpush1.msra.mxu0 0.0
    %3564 = vmatprep.subr.mxu0 0.0
    %3565 = vmatpush1.msra.mxu0 0.0
    %3566 = vmatprep.subr.mxu0 0.0
    %3567 = vmatpush1.msra.mxu0 0.0
    %3568 = vmatprep.subr.mxu0 0.0
    %3569 = vmatpush1.msra.mxu0 0.0
    %3570 = vmatprep.subr.mxu0 0.0
    %3571 = vmatpush1.msra.mxu0 0.0
    %3572 = vmatprep.subr.mxu0 0.0
    %3573 = vmatpush1.msra.mxu0 0.0
    %3574 = vmatprep.subr.mxu0 0.0
    %3575 = vmatpush1.msra.mxu0 0.0
    %3576 = vmatprep.subr.mxu0 0.0
    %3577 = vmatpush1.msra.mxu0 0.0
    %3578 = vmatprep.mubr.f32.mxu0 0.0
    %3579 = vmatmul.mubr.f32.gmra.mrb[0].mxu0 %v3509
    %v3580 = vpop.f32.mrb[0].mxu0
    %v3581 = vadd.f32 %v3505, %v3580
    %v3582 = vpop.f32.mrb[0].mxu0
    %3583 = vmatprep.mubr.f32.mxu0 0.0
    %3584 = vmatmul.mubr.f32.gmra.mrb[0].mxu0 %v3512
    %v3585 = vpop.f32.mrb[0].mxu0
    %v3586 = vadd.f32 %v3505, %v3585
    %v3587 = vpop.f32.mrb[0].mxu0
    %3588 = vdwg.mxu0
    %v3589 = vadd.f32 %v3396, %v3581
    %v3590 = vadd.f32 %v3397, %v3586
    %s3591 = scalar_lea.vmem %s16, 4
    %v3592 = vld [vmem:[%s3591] sm:$0x1]
    %s3593 = scalar_lea.vmem %s16, 5
    %v3594 = vld [vmem:[%s3593] sm:$0x1]
    %v3595 = vsel %vm140, %v3589, 0.0
    %3596 = vadd.xlane.f32.xlu0 %v3595
    %v3597 = vpop.xlane.xlu0 %3596
    %v3598 = vsel %vm140, %v3590, 0.0
    %3599 = vadd.xlane.f32.xlu0 %v3598
    %v3600 = vpop.xlane.xlu0 %3599
    %v3601 = vmul.f32 %v3597, %v1685
    %v3602 = vmul.f32 %v3600, %v1685
    %v3603 = vsub.f32 %v3589, %v3601
    %v3604 = vsub.f32 %v3590, %v3602
    %v3605 = vmul.f32 %v3603, %v3603
    %v3606 = vmul.f32 %v3604, %v3604
    %v3607 = vsel %vm140, %v3605, 0.0
    %3608 = vadd.xlane.f32.xlu0 %v3607
    %v3609 = vpop.xlane.xlu0 %3608
    %v3610 = vsel %vm140, %v3606, 0.0
    %3611 = vadd.xlane.f32.xlu0 %v3610
    %v3612 = vpop.xlane.xlu0 %3611
    %v3613 = vmul.f32 %v3609, %v1685
    %v3614 = vmul.f32 %v3612, %v1685
    %v3615 = vadd.f32 %v3613, 1e-05
    %v3616 = vadd.f32 %v3614, 1e-05
    %v3617 = vrsqrt.pop %v3615
    %v3618 = vrsqrt.pop %v3616
    %v3619 = vmul.f32 %v3603, %v3617
    %v3620 = vmul.f32 %v3604, %v3618
    %v3622 = vlaneseq
    %v3623 = vshrl.u32 %v3622, 7
    %v3624 = vsub.s32 0, %v3623
    %v3625 = vrot.slane %v3592, %v3624
    %v3627 = vmul.f32 %v3619, %v3625
    %v3628 = vmul.f32 %v3620, %v3625
    %v3630 = vlaneseq
    %v3631 = vshrl.u32 %v3630, 7
    %v3632 = vsub.s32 0, %v3631
    %v3633 = vrot.slane %v3594, %v3632
    %v3635 = vadd.f32 %v3627, %v3633
    %v3636 = vadd.f32 %v3628, %v3633
    %3637 = vst.msk [vmem:[#allocation12] sm:$0xff] %vm140, %v3635
    %3638 = vst.msk [vmem:[#allocation12 + $0x8] sm:$0xff] %vm140, %v3636
    // Predicated region
    $region90: #{tpu_custom_call.1} parent=1 // pred_check
      _
    $region91: #{tpu_custom_call.1} parent=1 // pred_check_branch
      %3640 = sbr.rel (0) target = $region93
    $region92: #{tpu_custom_call.1} parent=1 // pred_region
      %s3642 = ssub.s32 256, 256
      %3643 = vsyncadd [#allocation5], %s3642
      %s3644 = sshll.u32 [#allocation12], 4
      %s3645 = int_to_ptr.vmem [resolvable:$true] %s3644
      %3650 = dma.vmem_to_hbm [thread:$0]  %s3645, 256, %s17, [#allocation5], 128, 128, 8
    $region93: #{tpu_custom_call.1} parent=1 // pred_fallthru
      _
    // Predicated region
    $region94: #{tpu_custom_call.1} parent=1 // pred_check
      _
    $region95: #{tpu_custom_call.1} parent=1 // pred_check_branch
      %3652 = sbr.rel (0) target = $region97
    $region96: #{tpu_custom_call.1} parent=1 // pred_region
      %3653 = dma.done [#allocation5], 256
    $region97: #{tpu_custom_call.1} parent=1 // pred_fallthru
      _
    %3654 = vsyncpa [#allocation4], 1
    %3655 = vsyncpa [#allocation7], 1
    %3656 = vsyncpa [#allocation10], 1
    %3657 = vsyncpa [#allocation5], 1

</llo_original>
